<compile_context>
chip_gen: v7x
topology: tpu7x:2x2x1
jax: 0.10.0
libtpu: 0.0.40
codegen_flags: <defaults>
</compile_context>

<pallas_src>
import math
from functools import partial

import jax
import jax.numpy as jnp
from jax import lax
from jax.experimental import pallas as pl
from jax.experimental.pallas import tpu as pltpu


def xmem_kernel(lhs_ref, shrink_ref, rhs_ref, bsq_ref, memv_ref, out_ref,
                aff_ref, inv_ref, *, top_k, n_valid, n_pad):
    r = pl.program_id(1)   # value-row tile index (innermost, "arbitrary")

    # Similarity + top-k softmax: computed once per P tile, cached in VMEM scratch
    # (aff_ref, inv_ref) and reused by every value-row tile below.
    @pl.when(r == 0)
    def _():
        # Fused similarity matmul: lhs=[mk, mk^2] @ rhs=[[2*qk*qs],[-qs]] = two_ab - a_sq.
        sim = jnp.dot(lhs_ref[...], rhs_ref[...],
                      preferred_element_type=jnp.float32,
                      precision=lax.Precision.HIGHEST)            # (N_pad, TP)
        sim = (sim - bsq_ref[...]) * shrink_ref[...]

        neg_big = jnp.float32(-3.4e38)
        if n_pad != n_valid:
            # Padded memory rows can never enter the top-k.
            row_ids = lax.broadcasted_iota(jnp.int32, (n_pad, 1), 0)
            sim = jnp.where(row_ids < n_valid, sim, neg_big)

        # k-th largest value per column via iterated masked max (fully unrolled for ILP).
        # TODO(synk): replace the k-pass masked max with a 2-3 pass histogram/bisection
        # selection for large TOP_K; also assumes no exact similarity ties (same caveat
        # as before vs torch.topk tie handling).
        def body(_, thresh):
            masked = jnp.where(sim < thresh, sim, neg_big)
            return jnp.max(masked, axis=0, keepdims=True)

        init = jnp.full((1, sim.shape[1]), jnp.float32(3.4e38), jnp.float32)
        kth = lax.fori_loop(0, top_k, body, init, unroll=True)    # (1, TP)

        # Unnormalized masked softmax numerator.  exp(sim) <= 1 since sim <= 0 when
        # shrinkage > 0 and selection >= 0 (matches PyTorch original, no max-subtraction).
        x_exp = jnp.where(sim >= kth, jnp.exp(sim), jnp.float32(0.0))
        aff_ref[...] = x_exp.astype(jnp.bfloat16)
        denom = jnp.sum(x_exp, axis=0, keepdims=True)             # (1, TP)
        inv_ref[...] = pl.reciprocal(denom, approx=True)

    # Readout: bf16 MXU matmul with f32 accumulation; normalize the small (TR, TP)
    # result instead of the large (N, TP) affinity.
    acc = jnp.dot(memv_ref[...], aff_ref[...],
                  preferred_element_type=jnp.float32)             # (TR, TP)
    out_ref[...] = acc * inv_ref[...]


def _pick_tiles(R, P_pad, N_pad, CK, vmem_budget=40 * 1024 * 1024):
    """Largest (TR, TP) whose VMEM footprint (double-buffered pipeline + scratch) fits."""
    tr_cands = [t for t in (1024, 512, 256, 128) if R % t == 0] or [R]
    tp_cands = [t for t in (512, 256, 128) if P_pad % t == 0] or [P_pad]

    def vmem_bytes(TR, TP):
        return (2 * N_pad * (2 * CK) * 4      # lhs   f32, 2 bufs
                + 2 * N_pad * 4               # shrink
                + 2 * (2 * CK) * TP * 4       # rhs   f32, 2 bufs
                + 2 * TP * 4                  # b_sq
                + 2 * TR * N_pad * 2          # memv  bf16, 2 bufs
                + 2 * TR * TP * 4             # out   f32, 2 bufs
                + N_pad * TP * 2              # aff scratch (bf16)
                + TP * 4)                     # inv scratch

    best = None
    for TR in tr_cands:
        for TP in tp_cands:
            if vmem_bytes(TR, TP) <= vmem_budget:
                if best is None or TR * TP > best[0]:
                    best = (TR * TP, TR, TP)
    if best is None:
        return tr_cands[-1], tp_cands[-1]
    return best[1], best[2]


def xmem_get_value(mem_key, mem_shrinkage, mem_value, q_key, q_selection,
                   H, W, top_k):
    """Equivalent of XMem.get_value / forward.

    mem_key:       (1, CK, N)
    mem_shrinkage: (1, N, 1)
    mem_value:     (2, CV, N)
    q_key, q_selection: (1, CK, H, W)
    returns: (2, CV, H, W) float32
    """
    CK = mem_key.shape[1]
    CV = mem_value.shape[1]
    N = mem_key.shape[2]
    P = H * W
    assert top_k <= N, "TOP_K must not exceed the number of memory slots"

    # ---- one-time, grid-invariant layout prep (hoisted out of the per-tile loop) ----
    memk_t = jnp.transpose(mem_key[0].astype(jnp.float32), (1, 0))           # (N, CK)
    lhs = jnp.concatenate([memk_t, memk_t * memk_t], axis=1)                 # (N, 2CK)
    shrink = mem_shrinkage[0].astype(jnp.float32) * (1.0 / math.sqrt(CK))    # (N, 1)
    memv = mem_value.reshape(2 * CV, N).astype(jnp.bfloat16)                 # (2CV, N)

    qk = q_key.reshape(CK, P).astype(jnp.float32)
    qs = q_selection.reshape(CK, P).astype(jnp.float32)
    rhs = jnp.concatenate([2.0 * qk * qs, -qs], axis=0)                      # (2CK, P)
    b_sq = jnp.sum(qs * qk * qk, axis=0, keepdims=True)                      # (1, P)

    # Pad P to a multiple of 128 so sim / affinity / out are lane-dense.
    # Padded columns have qk = qs = 0 and are sliced away at the end.
    P_pad = pl.cdiv(P, 128) * 128
    if P_pad != P:
        rhs = jnp.pad(rhs, ((0, 0), (0, P_pad - P)))
        b_sq = jnp.pad(b_sq, ((0, 0), (0, P_pad - P)))

    # Pad N to a sublane multiple of 8; padded rows are masked inside the kernel.
    N_pad = pl.cdiv(N, 8) * 8
    if N_pad != N:
        pad = N_pad - N
        lhs = jnp.pad(lhs, ((0, pad), (0, 0)))
        shrink = jnp.concatenate(
            [shrink, jnp.full((pad, 1), 1.0, jnp.float32)], axis=0)
        memv = jnp.pad(memv, ((0, 0), (0, pad)))

    # ---- tiling ----
    R = 2 * CV                                    # value-row axis (1024 for XMem)
    TR, TP = _pick_tiles(R, P_pad, N_pad, CK)
    grid = (P_pad // TP, R // TR)                 # (P tiles, value-row tiles)

    out = pl.pallas_call(
        partial(xmem_kernel, top_k=top_k, n_valid=N, n_pad=N_pad),
        out_shape=jax.ShapeDtypeStruct((R, P_pad), jnp.float32),
        grid=grid,
        in_specs=[
            pl.BlockSpec((N_pad, 2 * CK), lambda p, r: (0, 0)),   # lhs (VMEM-resident)
            pl.BlockSpec((N_pad, 1),      lambda p, r: (0, 0)),   # shrink (resident)
            pl.BlockSpec((2 * CK, TP),    lambda p, r: (0, p)),   # rhs   (per P tile)
            pl.BlockSpec((1, TP),         lambda p, r: (0, p)),   # b_sq  (per P tile)
            pl.BlockSpec((TR, N_pad),     lambda p, r: (r, 0)),   # memv  (per row tile)
        ],
        out_specs=pl.BlockSpec((TR, TP), lambda p, r: (r, p)),
        scratch_shapes=[
            pltpu.VMEM((N_pad, TP), jnp.bfloat16),   # unnormalized affinity (reused over r)
            pltpu.VMEM((1, TP), jnp.float32),        # 1 / softmax denominator
        ],
        compiler_params=pltpu.CompilerParams(
            dimension_semantics=("parallel", "arbitrary"),
            vmem_limit_bytes=48 * 1024 * 1024,       # above 32 MiB default, below v7x 64 MiB
        ),
    )(lhs, shrink, rhs, b_sq, memv)

    return out[:, :P].reshape(2, CV, H, W)


def reference(mem_key, mem_shrinkage, mem_value, q_key, q_selection, H, W, top_k):
    """Pure-JAX reference mirroring the PyTorch code (topk + scatter), f32 HIGHEST."""
    CK = mem_key.shape[1]
    CV = mem_value.shape[1]
    P = H * W
    qk = q_key.reshape(1, CK, P)
    qs = q_selection.reshape(1, CK, P)
    mk = jnp.transpose(mem_key, (0, 2, 1))                                   # (1, N, CK)
    a_sq = jnp.matmul(mk ** 2, qs, precision=lax.Precision.HIGHEST)
    two_ab = 2.0 * jnp.matmul(mk, qk * qs, precision=lax.Precision.HIGHEST)
    b_sq = jnp.sum(qs * qk ** 2, axis=1, keepdims=True)
    sim = (-a_sq + two_ab - b_sq) * mem_shrinkage / math.sqrt(CK)            # (1, N, P)

    sim_t = jnp.transpose(sim[0], (1, 0))                                    # (P, N)
    vals, idx = lax.top_k(sim_t, top_k)
    x_exp = jnp.exp(vals)
    x_exp = x_exp / jnp.sum(x_exp, axis=1, keepdims=True)
    N = sim_t.shape[1]
    aff = jnp.zeros((P, N), jnp.float32).at[jnp.arange(P)[:, None], idx].set(x_exp)
    aff = jnp.transpose(aff, (1, 0))                                         # (N, P)
    out = jnp.matmul(mem_value, aff[None], precision=lax.Precision.HIGHEST)  # (2, CV, P)
    return out.reshape(2, CV, H, W)


if __name__ == "__main__":
    # Small, module-consistent shapes: CK=64, CV=512 (fixed by XMem), H=W=4,
    # work-memory count = 2, long-memory count = 2 -> N = 4 * H*W = 64 >= TOP_K.
    H = W = 4
    CK, CV = 64, 512
    TOP_K = 30
    P = H * W
    long_count, work_count = 2, 2
    N = (long_count + work_count) * P

    key = jax.random.PRNGKey(0)
    k1, k2, k3, k4, k5 = jax.random.split(key, 5)

    # Deterministic synthetic memory contents (stand-in for XMemCache state).
    mem_key = 0.5 * jax.random.normal(k1, (1, CK, N), jnp.float32)
    mem_shrinkage = jax.random.uniform(k2, (1, N, 1), jnp.float32, 0.5, 1.5)
    mem_value = 0.5 * jax.random.normal(k3, (2, CV, N), jnp.float32)

    # Query key / selection (what the forward receives), NCHW.
    q_key = 0.5 * jax.random.normal(k4, (1, CK, H, W), jnp.float32)
    q_selection = jax.random.uniform(k5, (1, CK, H, W), jnp.float32, 0.0, 1.0)

    out = xmem_get_value(mem_key, mem_shrinkage, mem_value,
                         q_key, q_selection, H, W, TOP_K)
    out = jax.block_until_ready(out)

    ref = reference(mem_key, mem_shrinkage, mem_value,
                    q_key, q_selection, H, W, TOP_K)

    assert out.shape == (2, CV, H, W)
    # Readout matmul runs in bf16 (f32 accumulation) + approx reciprocal, so the
    # tolerance vs the f32 HIGHEST reference is loosened accordingly.
    assert jnp.allclose(out, ref, rtol=2e-2, atol=2e-2), "mismatch vs reference"
    print("KERNEL_OK")
</pallas_src>

<mosaic_0001>
module attributes {stable_mosaic.version = 11 : i64} {
  func.func @xmem_kernel(%arg0: i32, %arg1: i32, %arg2: memref<64x128xf32, #tpu.memory_space<vmem>>, %arg3: memref<64x1xf32, #tpu.memory_space<vmem>>, %arg4: memref<128x128xf32, #tpu.memory_space<vmem>>, %arg5: memref<1x128xf32, #tpu.memory_space<vmem>>, %arg6: memref<1024x64xbf16, #tpu.memory_space<vmem>>, %arg7: memref<1024x128xf32, #tpu.memory_space<vmem>>, %arg8: memref<64x128xbf16, #tpu.memory_space<vmem>>, %arg9: memref<1x128xf32, #tpu.memory_space<vmem>>) attributes {dimension_semantics = [#tpu.dimension_semantics<parallel>, #tpu.dimension_semantics<arbitrary>], iteration_bounds = array<i64: 1, 1>, scalar_prefetch = 0 : i64, scratch_operands = 2 : i64, tpu.core_type = #tpu.core_type<tc>, window_params = [{pipeline_mode = #tpu.pipeline_mode<synchronous>, transform_indices = @transform_0, window_bounds = array<i64: 64, 128>}, {pipeline_mode = #tpu.pipeline_mode<synchronous>, transform_indices = @transform_1, window_bounds = array<i64: 64, 1>}, {transform_indices = @transform_2, window_bounds = array<i64: 128, 128>}, {transform_indices = @transform_3, window_bounds = array<i64: 1, 128>}, {transform_indices = @transform_4, window_bounds = array<i64: 1024, 64>}, {transform_indices = @transform_5, window_bounds = array<i64: 1024, 128>}]} {
    %c0_i32 = arith.constant 0 : i32
    %0 = arith.cmpi eq, %arg1, %c0_i32 : i32
    %1 = arith.extui %0 : i1 to i32
    %c0_i32_0 = arith.constant 0 : i32
    %2 = arith.cmpi ne, %1, %c0_i32_0 : i32
    scf.if %2 {
      %c0_8 = arith.constant 0 : index
      %c0_9 = arith.constant 0 : index
      %10 = vector.load %arg2[%c0_8, %c0_9] : memref<64x128xf32, #tpu.memory_space<vmem>>, vector<64x128xf32>
      %c0_10 = arith.constant 0 : index
      %c0_11 = arith.constant 0 : index
      %11 = vector.load %arg4[%c0_10, %c0_11] : memref<128x128xf32, #tpu.memory_space<vmem>>, vector<128x128xf32>
      %cst_12 = arith.constant dense<0.000000e+00> : vector<64x128xf32>
      %12 = tpu.matmul %10, %11, %cst_12 {dimension_numbers = #tpu.dot_dimension_numbers<[1], [0], [0], [1], [0, 0, 1, 1], [], []>, precision = #tpu.contract_precision<fp32>} : vector<64x128xf32>, vector<128x128xf32>, vector<64x128xf32> -> vector<64x128xf32>
      %c0_13 = arith.constant 0 : index
      %c0_14 = arith.constant 0 : index
      %13 = vector.load %arg5[%c0_13, %c0_14] : memref<1x128xf32, #tpu.memory_space<vmem>>, vector<1x128xf32>
      %14 = vector.broadcast %13 : vector<1x128xf32> to vector<64x128xf32>
      %15 = arith.subf %12, %14 : vector<64x128xf32>
      %c0_15 = arith.constant 0 : index
      %c0_16 = arith.constant 0 : index
      %16 = vector.load %arg3[%c0_15, %c0_16] : memref<64x1xf32, #tpu.memory_space<vmem>>, vector<64x1xf32>
      %17 = vector.broadcast %16 : vector<64x1xf32> to vector<64x128xf32>
      %18 = arith.mulf %15, %17 : vector<64x128xf32>
      %cst_17 = arith.constant 3.400000e+38 : f32
      %19 = vector.broadcast %cst_17 : f32 to vector<1x128xf32>
      %cst_18 = arith.constant -3.400000e+38 : f32
      %c0_i32_19 = arith.constant 0 : i32
      %20 = vector.broadcast %19 : vector<1x128xf32> to vector<64x128xf32>
      %21 = arith.cmpf olt, %18, %20 : vector<64x128xf32>
      %22 = vector.broadcast %cst_18 : f32 to vector<64x128xf32>
      %23 = arith.select %21, %18, %22 : vector<64x128xi1>, vector<64x128xf32>
      %cst_20 = arith.constant dense<0xFF800000> : vector<128xf32>
      %24 = vector.multi_reduction <maximumf>, %23, %cst_20 [0] : vector<64x128xf32> to vector<128xf32>
      %25 = vector.shape_cast %24 : vector<128xf32> to vector<1x128xf32>
      %c1_i32 = arith.constant 1 : i32
      %26 = vector.broadcast %25 : vector<1x128xf32> to vector<64x128xf32>
      %27 = arith.cmpf olt, %18, %26 : vector<64x128xf32>
      %28 = vector.broadcast %cst_18 : f32 to vector<64x128xf32>
      %29 = arith.select %27, %18, %28 : vector<64x128xi1>, vector<64x128xf32>
      %cst_21 = arith.constant dense<0xFF800000> : vector<128xf32>
      %30 = vector.multi_reduction <maximumf>, %29, %cst_21 [0] : vector<64x128xf32> to vector<128xf32>
      %31 = vector.shape_cast %30 : vector<128xf32> to vector<1x128xf32>
      %c2_i32 = arith.constant 2 : i32
      %32 = vector.broadcast %31 : vector<1x128xf32> to vector<64x128xf32>
      %33 = arith.cmpf olt, %18, %32 : vector<64x128xf32>
      %34 = vector.broadcast %cst_18 : f32 to vector<64x128xf32>
      %35 = arith.select %33, %18, %34 : vector<64x128xi1>, vector<64x128xf32>
      %cst_22 = arith.constant dense<0xFF800000> : vector<128xf32>
      %36 = vector.multi_reduction <maximumf>, %35, %cst_22 [0] : vector<64x128xf32> to vector<128xf32>
      %37 = vector.shape_cast %36 : vector<128xf32> to vector<1x128xf32>
      %c3_i32 = arith.constant 3 : i32
      %38 = vector.broadcast %37 : vector<1x128xf32> to vector<64x128xf32>
      %39 = arith.cmpf olt, %18, %38 : vector<64x128xf32>
      %40 = vector.broadcast %cst_18 : f32 to vector<64x128xf32>
      %41 = arith.select %39, %18, %40 : vector<64x128xi1>, vector<64x128xf32>
      %cst_23 = arith.constant dense<0xFF800000> : vector<128xf32>
      %42 = vector.multi_reduction <maximumf>, %41, %cst_23 [0] : vector<64x128xf32> to vector<128xf32>
      %43 = vector.shape_cast %42 : vector<128xf32> to vector<1x128xf32>
      %c4_i32 = arith.constant 4 : i32
      %44 = vector.broadcast %43 : vector<1x128xf32> to vector<64x128xf32>
      %45 = arith.cmpf olt, %18, %44 : vector<64x128xf32>
      %46 = vector.broadcast %cst_18 : f32 to vector<64x128xf32>
      %47 = arith.select %45, %18, %46 : vector<64x128xi1>, vector<64x128xf32>
      %cst_24 = arith.constant dense<0xFF800000> : vector<128xf32>
      %48 = vector.multi_reduction <maximumf>, %47, %cst_24 [0] : vector<64x128xf32> to vector<128xf32>
      %49 = vector.shape_cast %48 : vector<128xf32> to vector<1x128xf32>
      %c5_i32 = arith.constant 5 : i32
      %50 = vector.broadcast %49 : vector<1x128xf32> to vector<64x128xf32>
      %51 = arith.cmpf olt, %18, %50 : vector<64x128xf32>
      %52 = vector.broadcast %cst_18 : f32 to vector<64x128xf32>
      %53 = arith.select %51, %18, %52 : vector<64x128xi1>, vector<64x128xf32>
      %cst_25 = arith.constant dense<0xFF800000> : vector<128xf32>
      %54 = vector.multi_reduction <maximumf>, %53, %cst_25 [0] : vector<64x128xf32> to vector<128xf32>
      %55 = vector.shape_cast %54 : vector<128xf32> to vector<1x128xf32>
      %c6_i32 = arith.constant 6 : i32
      %56 = vector.broadcast %55 : vector<1x128xf32> to vector<64x128xf32>
      %57 = arith.cmpf olt, %18, %56 : vector<64x128xf32>
      %58 = vector.broadcast %cst_18 : f32 to vector<64x128xf32>
      %59 = arith.select %57, %18, %58 : vector<64x128xi1>, vector<64x128xf32>
      %cst_26 = arith.constant dense<0xFF800000> : vector<128xf32>
      %60 = vector.multi_reduction <maximumf>, %59, %cst_26 [0] : vector<64x128xf32> to vector<128xf32>
      %61 = vector.shape_cast %60 : vector<128xf32> to vector<1x128xf32>
      %c7_i32 = arith.constant 7 : i32
      %62 = vector.broadcast %61 : vector<1x128xf32> to vector<64x128xf32>
      %63 = arith.cmpf olt, %18, %62 : vector<64x128xf32>
      %64 = vector.broadcast %cst_18 : f32 to vector<64x128xf32>
      %65 = arith.select %63, %18, %64 : vector<64x128xi1>, vector<64x128xf32>
      %cst_27 = arith.constant dense<0xFF800000> : vector<128xf32>
      %66 = vector.multi_reduction <maximumf>, %65, %cst_27 [0] : vector<64x128xf32> to vector<128xf32>
      %67 = vector.shape_cast %66 : vector<128xf32> to vector<1x128xf32>
      %c8_i32 = arith.constant 8 : i32
      %68 = vector.broadcast %67 : vector<1x128xf32> to vector<64x128xf32>
      %69 = arith.cmpf olt, %18, %68 : vector<64x128xf32>
      %70 = vector.broadcast %cst_18 : f32 to vector<64x128xf32>
      %71 = arith.select %69, %18, %70 : vector<64x128xi1>, vector<64x128xf32>
      %cst_28 = arith.constant dense<0xFF800000> : vector<128xf32>
      %72 = vector.multi_reduction <maximumf>, %71, %cst_28 [0] : vector<64x128xf32> to vector<128xf32>
      %73 = vector.shape_cast %72 : vector<128xf32> to vector<1x128xf32>
      %c9_i32 = arith.constant 9 : i32
      %74 = vector.broadcast %73 : vector<1x128xf32> to vector<64x128xf32>
      %75 = arith.cmpf olt, %18, %74 : vector<64x128xf32>
      %76 = vector.broadcast %cst_18 : f32 to vector<64x128xf32>
      %77 = arith.select %75, %18, %76 : vector<64x128xi1>, vector<64x128xf32>
      %cst_29 = arith.constant dense<0xFF800000> : vector<128xf32>
      %78 = vector.multi_reduction <maximumf>, %77, %cst_29 [0] : vector<64x128xf32> to vector<128xf32>
      %79 = vector.shape_cast %78 : vector<128xf32> to vector<1x128xf32>
      %c10_i32 = arith.constant 10 : i32
      %80 = vector.broadcast %79 : vector<1x128xf32> to vector<64x128xf32>
      %81 = arith.cmpf olt, %18, %80 : vector<64x128xf32>
      %82 = vector.broadcast %cst_18 : f32 to vector<64x128xf32>
      %83 = arith.select %81, %18, %82 : vector<64x128xi1>, vector<64x128xf32>
      %cst_30 = arith.constant dense<0xFF800000> : vector<128xf32>
      %84 = vector.multi_reduction <maximumf>, %83, %cst_30 [0] : vector<64x128xf32> to vector<128xf32>
      %85 = vector.shape_cast %84 : vector<128xf32> to vector<1x128xf32>
      %c11_i32 = arith.constant 11 : i32
      %86 = vector.broadcast %85 : vector<1x128xf32> to vector<64x128xf32>
      %87 = arith.cmpf olt, %18, %86 : vector<64x128xf32>
      %88 = vector.broadcast %cst_18 : f32 to vector<64x128xf32>
      %89 = arith.select %87, %18, %88 : vector<64x128xi1>, vector<64x128xf32>
      %cst_31 = arith.constant dense<0xFF800000> : vector<128xf32>
      %90 = vector.multi_reduction <maximumf>, %89, %cst_31 [0] : vector<64x128xf32> to vector<128xf32>
      %91 = vector.shape_cast %90 : vector<128xf32> to vector<1x128xf32>
      %c12_i32 = arith.constant 12 : i32
      %92 = vector.broadcast %91 : vector<1x128xf32> to vector<64x128xf32>
      %93 = arith.cmpf olt, %18, %92 : vector<64x128xf32>
      %94 = vector.broadcast %cst_18 : f32 to vector<64x128xf32>
      %95 = arith.select %93, %18, %94 : vector<64x128xi1>, vector<64x128xf32>
      %cst_32 = arith.constant dense<0xFF800000> : vector<128xf32>
      %96 = vector.multi_reduction <maximumf>, %95, %cst_32 [0] : vector<64x128xf32> to vector<128xf32>
      %97 = vector.shape_cast %96 : vector<128xf32> to vector<1x128xf32>
      %c13_i32 = arith.constant 13 : i32
      %98 = vector.broadcast %97 : vector<1x128xf32> to vector<64x128xf32>
      %99 = arith.cmpf olt, %18, %98 : vector<64x128xf32>
      %100 = vector.broadcast %cst_18 : f32 to vector<64x128xf32>
      %101 = arith.select %99, %18, %100 : vector<64x128xi1>, vector<64x128xf32>
      %cst_33 = arith.constant dense<0xFF800000> : vector<128xf32>
      %102 = vector.multi_reduction <maximumf>, %101, %cst_33 [0] : vector<64x128xf32> to vector<128xf32>
      %103 = vector.shape_cast %102 : vector<128xf32> to vector<1x128xf32>
      %c14_i32 = arith.constant 14 : i32
      %104 = vector.broadcast %103 : vector<1x128xf32> to vector<64x128xf32>
      %105 = arith.cmpf olt, %18, %104 : vector<64x128xf32>
      %106 = vector.broadcast %cst_18 : f32 to vector<64x128xf32>
      %107 = arith.select %105, %18, %106 : vector<64x128xi1>, vector<64x128xf32>
      %cst_34 = arith.constant dense<0xFF800000> : vector<128xf32>
      %108 = vector.multi_reduction <maximumf>, %107, %cst_34 [0] : vector<64x128xf32> to vector<128xf32>
      %109 = vector.shape_cast %108 : vector<128xf32> to vector<1x128xf32>
      %c15_i32 = arith.constant 15 : i32
      %110 = vector.broadcast %109 : vector<1x128xf32> to vector<64x128xf32>
      %111 = arith.cmpf olt, %18, %110 : vector<64x128xf32>
      %112 = vector.broadcast %cst_18 : f32 to vector<64x128xf32>
      %113 = arith.select %111, %18, %112 : vector<64x128xi1>, vector<64x128xf32>
      %cst_35 = arith.constant dense<0xFF800000> : vector<128xf32>
      %114 = vector.multi_reduction <maximumf>, %113, %cst_35 [0] : vector<64x128xf32> to vector<128xf32>
      %115 = vector.shape_cast %114 : vector<128xf32> to vector<1x128xf32>
      %c16_i32 = arith.constant 16 : i32
      %116 = vector.broadcast %115 : vector<1x128xf32> to vector<64x128xf32>
      %117 = arith.cmpf olt, %18, %116 : vector<64x128xf32>
      %118 = vector.broadcast %cst_18 : f32 to vector<64x128xf32>
      %119 = arith.select %117, %18, %118 : vector<64x128xi1>, vector<64x128xf32>
      %cst_36 = arith.constant dense<0xFF800000> : vector<128xf32>
      %120 = vector.multi_reduction <maximumf>, %119, %cst_36 [0] : vector<64x128xf32> to vector<128xf32>
      %121 = vector.shape_cast %120 : vector<128xf32> to vector<1x128xf32>
      %c17_i32 = arith.constant 17 : i32
      %122 = vector.broadcast %121 : vector<1x128xf32> to vector<64x128xf32>
      %123 = arith.cmpf olt, %18, %122 : vector<64x128xf32>
      %124 = vector.broadcast %cst_18 : f32 to vector<64x128xf32>
      %125 = arith.select %123, %18, %124 : vector<64x128xi1>, vector<64x128xf32>
      %cst_37 = arith.constant dense<0xFF800000> : vector<128xf32>
      %126 = vector.multi_reduction <maximumf>, %125, %cst_37 [0] : vector<64x128xf32> to vector<128xf32>
      %127 = vector.shape_cast %126 : vector<128xf32> to vector<1x128xf32>
      %c18_i32 = arith.constant 18 : i32
      %128 = vector.broadcast %127 : vector<1x128xf32> to vector<64x128xf32>
      %129 = arith.cmpf olt, %18, %128 : vector<64x128xf32>
      %130 = vector.broadcast %cst_18 : f32 to vector<64x128xf32>
      %131 = arith.select %129, %18, %130 : vector<64x128xi1>, vector<64x128xf32>
      %cst_38 = arith.constant dense<0xFF800000> : vector<128xf32>
      %132 = vector.multi_reduction <maximumf>, %131, %cst_38 [0] : vector<64x128xf32> to vector<128xf32>
      %133 = vector.shape_cast %132 : vector<128xf32> to vector<1x128xf32>
      %c19_i32 = arith.constant 19 : i32
      %134 = vector.broadcast %133 : vector<1x128xf32> to vector<64x128xf32>
      %135 = arith.cmpf olt, %18, %134 : vector<64x128xf32>
      %136 = vector.broadcast %cst_18 : f32 to vector<64x128xf32>
      %137 = arith.select %135, %18, %136 : vector<64x128xi1>, vector<64x128xf32>
      %cst_39 = arith.constant dense<0xFF800000> : vector<128xf32>
      %138 = vector.multi_reduction <maximumf>, %137, %cst_39 [0] : vector<64x128xf32> to vector<128xf32>
      %139 = vector.shape_cast %138 : vector<128xf32> to vector<1x128xf32>
      %c20_i32 = arith.constant 20 : i32
      %140 = vector.broadcast %139 : vector<1x128xf32> to vector<64x128xf32>
      %141 = arith.cmpf olt, %18, %140 : vector<64x128xf32>
      %142 = vector.broadcast %cst_18 : f32 to vector<64x128xf32>
      %143 = arith.select %141, %18, %142 : vector<64x128xi1>, vector<64x128xf32>
      %cst_40 = arith.constant dense<0xFF800000> : vector<128xf32>
      %144 = vector.multi_reduction <maximumf>, %143, %cst_40 [0] : vector<64x128xf32> to vector<128xf32>
      %145 = vector.shape_cast %144 : vector<128xf32> to vector<1x128xf32>
      %c21_i32 = arith.constant 21 : i32
      %146 = vector.broadcast %145 : vector<1x128xf32> to vector<64x128xf32>
      %147 = arith.cmpf olt, %18, %146 : vector<64x128xf32>
      %148 = vector.broadcast %cst_18 : f32 to vector<64x128xf32>
      %149 = arith.select %147, %18, %148 : vector<64x128xi1>, vector<64x128xf32>
      %cst_41 = arith.constant dense<0xFF800000> : vector<128xf32>
      %150 = vector.multi_reduction <maximumf>, %149, %cst_41 [0] : vector<64x128xf32> to vector<128xf32>
      %151 = vector.shape_cast %150 : vector<128xf32> to vector<1x128xf32>
      %c22_i32 = arith.constant 22 : i32
      %152 = vector.broadcast %151 : vector<1x128xf32> to vector<64x128xf32>
      %153 = arith.cmpf olt, %18, %152 : vector<64x128xf32>
      %154 = vector.broadcast %cst_18 : f32 to vector<64x128xf32>
      %155 = arith.select %153, %18, %154 : vector<64x128xi1>, vector<64x128xf32>
      %cst_42 = arith.constant dense<0xFF800000> : vector<128xf32>
      %156 = vector.multi_reduction <maximumf>, %155, %cst_42 [0] : vector<64x128xf32> to vector<128xf32>
      %157 = vector.shape_cast %156 : vector<128xf32> to vector<1x128xf32>
      %c23_i32 = arith.constant 23 : i32
      %158 = vector.broadcast %157 : vector<1x128xf32> to vector<64x128xf32>
      %159 = arith.cmpf olt, %18, %158 : vector<64x128xf32>
      %160 = vector.broadcast %cst_18 : f32 to vector<64x128xf32>
      %161 = arith.select %159, %18, %160 : vector<64x128xi1>, vector<64x128xf32>
      %cst_43 = arith.constant dense<0xFF800000> : vector<128xf32>
      %162 = vector.multi_reduction <maximumf>, %161, %cst_43 [0] : vector<64x128xf32> to vector<128xf32>
      %163 = vector.shape_cast %162 : vector<128xf32> to vector<1x128xf32>
      %c24_i32 = arith.constant 24 : i32
      %164 = vector.broadcast %163 : vector<1x128xf32> to vector<64x128xf32>
      %165 = arith.cmpf olt, %18, %164 : vector<64x128xf32>
      %166 = vector.broadcast %cst_18 : f32 to vector<64x128xf32>
      %167 = arith.select %165, %18, %166 : vector<64x128xi1>, vector<64x128xf32>
      %cst_44 = arith.constant dense<0xFF800000> : vector<128xf32>
      %168 = vector.multi_reduction <maximumf>, %167, %cst_44 [0] : vector<64x128xf32> to vector<128xf32>
      %169 = vector.shape_cast %168 : vector<128xf32> to vector<1x128xf32>
      %c25_i32 = arith.constant 25 : i32
      %170 = vector.broadcast %169 : vector<1x128xf32> to vector<64x128xf32>
      %171 = arith.cmpf olt, %18, %170 : vector<64x128xf32>
      %172 = vector.broadcast %cst_18 : f32 to vector<64x128xf32>
      %173 = arith.select %171, %18, %172 : vector<64x128xi1>, vector<64x128xf32>
      %cst_45 = arith.constant dense<0xFF800000> : vector<128xf32>
      %174 = vector.multi_reduction <maximumf>, %173, %cst_45 [0] : vector<64x128xf32> to vector<128xf32>
      %175 = vector.shape_cast %174 : vector<128xf32> to vector<1x128xf32>
      %c26_i32 = arith.constant 26 : i32
      %176 = vector.broadcast %175 : vector<1x128xf32> to vector<64x128xf32>
      %177 = arith.cmpf olt, %18, %176 : vector<64x128xf32>
      %178 = vector.broadcast %cst_18 : f32 to vector<64x128xf32>
      %179 = arith.select %177, %18, %178 : vector<64x128xi1>, vector<64x128xf32>
      %cst_46 = arith.constant dense<0xFF800000> : vector<128xf32>
      %180 = vector.multi_reduction <maximumf>, %179, %cst_46 [0] : vector<64x128xf32> to vector<128xf32>
      %181 = vector.shape_cast %180 : vector<128xf32> to vector<1x128xf32>
      %c27_i32 = arith.constant 27 : i32
      %182 = vector.broadcast %181 : vector<1x128xf32> to vector<64x128xf32>
      %183 = arith.cmpf olt, %18, %182 : vector<64x128xf32>
      %184 = vector.broadcast %cst_18 : f32 to vector<64x128xf32>
      %185 = arith.select %183, %18, %184 : vector<64x128xi1>, vector<64x128xf32>
      %cst_47 = arith.constant dense<0xFF800000> : vector<128xf32>
      %186 = vector.multi_reduction <maximumf>, %185, %cst_47 [0] : vector<64x128xf32> to vector<128xf32>
      %187 = vector.shape_cast %186 : vector<128xf32> to vector<1x128xf32>
      %c28_i32 = arith.constant 28 : i32
      %188 = vector.broadcast %187 : vector<1x128xf32> to vector<64x128xf32>
      %189 = arith.cmpf olt, %18, %188 : vector<64x128xf32>
      %190 = vector.broadcast %cst_18 : f32 to vector<64x128xf32>
      %191 = arith.select %189, %18, %190 : vector<64x128xi1>, vector<64x128xf32>
      %cst_48 = arith.constant dense<0xFF800000> : vector<128xf32>
      %192 = vector.multi_reduction <maximumf>, %191, %cst_48 [0] : vector<64x128xf32> to vector<128xf32>
      %193 = vector.shape_cast %192 : vector<128xf32> to vector<1x128xf32>
      %c29_i32 = arith.constant 29 : i32
      %194 = vector.broadcast %193 : vector<1x128xf32> to vector<64x128xf32>
      %195 = arith.cmpf olt, %18, %194 : vector<64x128xf32>
      %196 = vector.broadcast %cst_18 : f32 to vector<64x128xf32>
      %197 = arith.select %195, %18, %196 : vector<64x128xi1>, vector<64x128xf32>
      %cst_49 = arith.constant dense<0xFF800000> : vector<128xf32>
      %198 = vector.multi_reduction <maximumf>, %197, %cst_49 [0] : vector<64x128xf32> to vector<128xf32>
      %199 = vector.shape_cast %198 : vector<128xf32> to vector<1x128xf32>
      %200 = vector.broadcast %199 : vector<1x128xf32> to vector<64x128xf32>
      %201 = arith.cmpf oge, %18, %200 : vector<64x128xf32>
      %202 = math.exp %18 : vector<64x128xf32>
      %cst_50 = arith.constant 0.000000e+00 : f32
      %203 = vector.broadcast %cst_50 : f32 to vector<64x128xf32>
      %204 = arith.select %201, %202, %203 : vector<64x128xi1>, vector<64x128xf32>
      %205 = arith.truncf %204 : vector<64x128xf32> to vector<64x128xbf16>
      %c0_51 = arith.constant 0 : index
      %c0_52 = arith.constant 0 : index
      %206 = vector.load %arg8[%c0_51, %c0_52] : memref<64x128xbf16, #tpu.memory_space<vmem>>, vector<64x128xbf16>
      tpu.vector_store %arg8[%c0_51, %c0_52], %205 {strides = array<i32>} : memref<64x128xbf16, #tpu.memory_space<vmem>>, vector<64x128xbf16>,
      %cst_53 = arith.constant dense<0.000000e+00> : vector<128xf32>
      %207 = vector.multi_reduction <add>, %204, %cst_53 [0] : vector<64x128xf32> to vector<128xf32>
      %208 = vector.shape_cast %207 : vector<128xf32> to vector<1x128xf32>
      %209 = tpu.reciprocal %208 {approx = true} : vector<1x128xf32> -> vector<1x128xf32>
      %c0_54 = arith.constant 0 : index
      %c0_55 = arith.constant 0 : index
      %210 = vector.load %arg9[%c0_54, %c0_55] : memref<1x128xf32, #tpu.memory_space<vmem>>, vector<1x128xf32>
      tpu.vector_store %arg9[%c0_54, %c0_55], %209 {strides = array<i32>} : memref<1x128xf32, #tpu.memory_space<vmem>>, vector<1x128xf32>,
    } else {
    }
    %c0 = arith.constant 0 : index
    %c0_1 = arith.constant 0 : index
    %3 = vector.load %arg6[%c0, %c0_1] : memref<1024x64xbf16, #tpu.memory_space<vmem>>, vector<1024x64xbf16>
    %c0_2 = arith.constant 0 : index
    %c0_3 = arith.constant 0 : index
    %4 = vector.load %arg8[%c0_2, %c0_3] : memref<64x128xbf16, #tpu.memory_space<vmem>>, vector<64x128xbf16>
    %cst = arith.constant dense<0.000000e+00> : vector<1024x128xf32>
    %5 = tpu.matmul %3, %4, %cst {dimension_numbers = #tpu.dot_dimension_numbers<[1], [0], [0], [1], [0, 0, 1, 1], [], []>} : vector<1024x64xbf16>, vector<64x128xbf16>, vector<1024x128xf32> -> vector<1024x128xf32>
    %c0_4 = arith.constant 0 : index
    %c0_5 = arith.constant 0 : index
    %6 = vector.load %arg9[%c0_4, %c0_5] : memref<1x128xf32, #tpu.memory_space<vmem>>, vector<1x128xf32>
    %7 = vector.broadcast %6 : vector<1x128xf32> to vector<1024x128xf32>
    %8 = arith.mulf %5, %7 : vector<1024x128xf32>
    %c0_6 = arith.constant 0 : index
    %c0_7 = arith.constant 0 : index
    %9 = vector.load %arg7[%c0_6, %c0_7] : memref<1024x128xf32, #tpu.memory_space<vmem>>, vector<1024x128xf32>
    tpu.vector_store %arg7[%c0_6, %c0_7], %8 {strides = array<i32>} : memref<1024x128xf32, #tpu.memory_space<vmem>>, vector<1024x128xf32>,
    return
  }
  func.func @transform_0(%arg0: i32, %arg1: i32) -> (i32, i32) {
    %c0_i32 = arith.constant 0 : i32
    %c0_i32_0 = arith.constant 0 : i32
    %c0_i32_1 = arith.constant 0 : i32
    return %c0_i32, %c0_i32_0 : i32, i32
  }
  func.func @transform_1(%arg0: i32, %arg1: i32) -> (i32, i32) {
    %c0_i32 = arith.constant 0 : i32
    %c0_i32_0 = arith.constant 0 : i32
    %c0_i32_1 = arith.constant 0 : i32
    return %c0_i32, %c0_i32_0 : i32, i32
  }
  func.func @transform_2(%arg0: i32, %arg1: i32) -> (i32, i32) {
    %c0_i32 = arith.constant 0 : i32
    %c0_i32_0 = arith.constant 0 : i32
    return %c0_i32, %arg0 : i32, i32
  }
  func.func @transform_3(%arg0: i32, %arg1: i32) -> (i32, i32) {
    %c0_i32 = arith.constant 0 : i32
    %c0_i32_0 = arith.constant 0 : i32
    return %c0_i32, %arg0 : i32, i32
  }
  func.func @transform_4(%arg0: i32, %arg1: i32) -> (i32, i32) {
    %c0_i32 = arith.constant 0 : i32
    %c0_i32_0 = arith.constant 0 : i32
    return %arg1, %c0_i32 : i32, i32
  }
  func.func @transform_5(%arg0: i32, %arg1: i32) -> (i32, i32) {
    %c0_i32 = arith.constant 0 : i32
    return %arg1, %arg0 : i32, i32
  }
}

</mosaic_0001>

<llo_original>
// kernel: tpu_custom_call.1
$region0: #{tpu_custom_call.1}
  #allocation0 [shape = 'u32[]', space=smem, size = 0x4, offset = 0x4, fixed_abs, tag = 'smem constant byte address 0x4 - core index']
  #allocation1 [shape = 'u32[144,128]{1,0:T(1,128)}', space=vmem, size = 0x12000, scoped, tag = 'internal scratch']
  #allocation2 [shape = 'bf16[64,128]{1,0:T(16,128)(2,1)}', space=vmem, size = 0x4000, scoped, tag = 'scratch operand']
  #allocation3 [shape = 'f32[1,128]{1,0:T(1,128)}', space=vmem, size = 0x200, scoped, tag = 'scratch operand']
  %s0 = inlined_call_operand.vmem [shape: f32[64,128], index: 0, kind: input, shape index: {}]
  %s1 = inlined_call_operand.vmem [shape: f32[64,1], index: 1, kind: input, shape index: {}]
  %s2 = inlined_call_operand.vmem [shape: f32[128,128], index: 2, kind: input, shape index: {}]
  %s3 = inlined_call_operand.vmem [shape: f32[1,128], index: 3, kind: input, shape index: {}]
  %s4 = inlined_call_operand.vmem [shape: bf16[1024,64], index: 4, kind: input, shape index: {}]
  %s5 = inlined_call_operand.hbm [shape: f32[1024,128], index: 5, kind: output, shape index: {}]
  %s6 = sld [smem:[#allocation0]]
  $region34: #{tpu_custom_call.1} parent=0
    _
  %s8 = ssub.s32 1, %s6
  %s9 = scalar_select 0, %s8, %s6
  $region1: #{tpu_custom_call.1} parent=0
    #allocation4 [shape = 'u8[524288]{0}', space=vmem, size = 0x80000, scoped, tag = 'output window, operand 0, single buffered']
    #allocation5 [shape = 's32[1]{0}', space=sflag, size = 0x4, scoped, tag = 'scoped memory for tpu_custom_call.1']
    %10 = vsyncpa [#allocation5], 0
    // Predicated region
    $region2: #{tpu_custom_call.1} parent=1 // pred_check
      _
    $region3: #{tpu_custom_call.1} parent=1 // pred_check_branch
      %12 = sbr.rel (0) target = $region5
    $region4: #{tpu_custom_call.1} parent=1 // pred_region
      _
    $region5: #{tpu_custom_call.1} parent=1 // pred_fallthru
      _
    // Predicated region
    $region6: #{tpu_custom_call.1} parent=1 // pred_check
      _
    $region7: #{tpu_custom_call.1} parent=1 // pred_check_branch
      %14 = sbr.rel (0) target = $region9
    $region8: #{tpu_custom_call.1} parent=1 // pred_region
      _
    $region9: #{tpu_custom_call.1} parent=1 // pred_fallthru
      _
    // Predicated region
    $region10: #{tpu_custom_call.1} parent=1 // pred_check
      _
    $region11: #{tpu_custom_call.1} parent=1 // pred_check_branch
      %16 = sbr.rel (0) target = $region13
    $region12: #{tpu_custom_call.1} parent=1 // pred_region
      _
    $region13: #{tpu_custom_call.1} parent=1 // pred_fallthru
      _
    // Predicated region
    $region14: #{tpu_custom_call.1} parent=1 // pred_check
      _
    $region15: #{tpu_custom_call.1} parent=1 // pred_check_branch
      %18 = sbr.rel (0) target = $region17
    $region16: #{tpu_custom_call.1} parent=1 // pred_region
      _
    $region17: #{tpu_custom_call.1} parent=1 // pred_fallthru
      _
    // Predicated region
    $region18: #{tpu_custom_call.1} parent=1 // pred_check
      _
    $region19: #{tpu_custom_call.1} parent=1 // pred_check_branch
      %20 = sbr.rel (0) target = $region21
    $region20: #{tpu_custom_call.1} parent=1 // pred_region
      _
    $region21: #{tpu_custom_call.1} parent=1 // pred_fallthru
      _
    %p22 = scmp.eq.s32.totalorder 0, 0
    // Predicated region
    $region22: #{tpu_custom_call.1} parent=1 // pred_check
      %p23 = pneg %p22
    $region23: #{tpu_custom_call.1} parent=1 // pred_check_branch
      %25 = sbr.rel (%p23) target = $region25
    $region24: #{tpu_custom_call.1} parent=1 // pred_region
      %v26 = vld [vmem:[%s0] sm:$0xff]
      %v27 = vld [vmem:[%s0 + $0x8] sm:$0xff]
      %v28 = vld [vmem:[%s0 + $0x10] sm:$0xff]
      %v29 = vld [vmem:[%s0 + $0x18] sm:$0xff]
      %v30 = vld [vmem:[%s0 + $0x20] sm:$0xff]
      %v31 = vld [vmem:[%s0 + $0x28] sm:$0xff]
      %v32 = vld [vmem:[%s0 + $0x30] sm:$0xff]
      %v33 = vld [vmem:[%s0 + $0x38] sm:$0xff]
      %v34 = vld [vmem:[%s2] sm:$0xff]
      %v35 = vld [vmem:[%s2 + $0x8] sm:$0xff]
      %v36 = vld [vmem:[%s2 + $0x10] sm:$0xff]
      %v37 = vld [vmem:[%s2 + $0x18] sm:$0xff]
      %v38 = vld [vmem:[%s2 + $0x20] sm:$0xff]
      %v39 = vld [vmem:[%s2 + $0x28] sm:$0xff]
      %v40 = vld [vmem:[%s2 + $0x30] sm:$0xff]
      %v41 = vld [vmem:[%s2 + $0x38] sm:$0xff]
      %v42 = vld [vmem:[%s2 + $0x40] sm:$0xff]
      %v43 = vld [vmem:[%s2 + $0x48] sm:$0xff]
      %v44 = vld [vmem:[%s2 + $0x50] sm:$0xff]
      %v45 = vld [vmem:[%s2 + $0x58] sm:$0xff]
      %v46 = vld [vmem:[%s2 + $0x60] sm:$0xff]
      %v47 = vld [vmem:[%s2 + $0x68] sm:$0xff]
      %v48 = vld [vmem:[%s2 + $0x70] sm:$0xff]
      %v49 = vld [vmem:[%s2 + $0x78] sm:$0xff]
      %50 = vmatprep.subr.mxu0 0.0
      %v51 = vand.u32 %v34, 4294901760
      %52 = vmatpush1.msra.mxu0 %v51
      %53 = vmatprep.subr.mxu0 0.0
      %v54 = vand.u32 %v35, 4294901760
      %55 = vmatpush1.msra.mxu0 %v54
      %56 = vmatprep.subr.mxu0 0.0
      %v57 = vand.u32 %v36, 4294901760
      %58 = vmatpush1.msra.mxu0 %v57
      %59 = vmatprep.subr.mxu0 0.0
      %v60 = vand.u32 %v37, 4294901760
      %61 = vmatpush1.msra.mxu0 %v60
      %62 = vmatprep.subr.mxu0 0.0
      %v63 = vand.u32 %v38, 4294901760
      %64 = vmatpush1.msra.mxu0 %v63
      %65 = vmatprep.subr.mxu0 0.0
      %v66 = vand.u32 %v39, 4294901760
      %67 = vmatpush1.msra.mxu0 %v66
      %68 = vmatprep.subr.mxu0 0.0
      %v69 = vand.u32 %v40, 4294901760
      %70 = vmatpush1.msra.mxu0 %v69
      %71 = vmatprep.subr.mxu0 0.0
      %v72 = vand.u32 %v41, 4294901760
      %73 = vmatpush1.msra.mxu0 %v72
      %74 = vmatprep.subr.mxu0 0.0
      %v75 = vand.u32 %v42, 4294901760
      %76 = vmatpush1.msra.mxu0 %v75
      %77 = vmatprep.subr.mxu0 0.0
      %v78 = vand.u32 %v43, 4294901760
      %79 = vmatpush1.msra.mxu0 %v78
      %80 = vmatprep.subr.mxu0 0.0
      %v81 = vand.u32 %v44, 4294901760
      %82 = vmatpush1.msra.mxu0 %v81
      %83 = vmatprep.subr.mxu0 0.0
      %v84 = vand.u32 %v45, 4294901760
      %85 = vmatpush1.msra.mxu0 %v84
      %86 = vmatprep.subr.mxu0 0.0
      %v87 = vand.u32 %v46, 4294901760
      %88 = vmatpush1.msra.mxu0 %v87
      %89 = vmatprep.subr.mxu0 0.0
      %v90 = vand.u32 %v47, 4294901760
      %91 = vmatpush1.msra.mxu0 %v90
      %92 = vmatprep.subr.mxu0 0.0
      %v93 = vand.u32 %v48, 4294901760
      %94 = vmatpush1.msra.mxu0 %v93
      %95 = vmatprep.subr.mxu0 0.0
      %v96 = vand.u32 %v49, 4294901760
      %97 = vmatpush1.msra.mxu0 %v96
      %98 = vmatprep.subr.mxu0 0.0
      %99 = vmatpush1.msra.mxu0 0.0
      %100 = vmatprep.subr.mxu0 0.0
      %101 = vmatpush1.msra.mxu0 0.0
      %102 = vmatprep.subr.mxu0 0.0
      %103 = vmatpush1.msra.mxu0 0.0
      %104 = vmatprep.subr.mxu0 0.0
      %105 = vmatpush1.msra.mxu0 0.0
      %106 = vmatprep.subr.mxu0 0.0
      %107 = vmatpush1.msra.mxu0 0.0
      %108 = vmatprep.subr.mxu0 0.0
      %109 = vmatpush1.msra.mxu0 0.0
      %110 = vmatprep.subr.mxu0 0.0
      %111 = vmatpush1.msra.mxu0 0.0
      %112 = vmatprep.subr.mxu0 0.0
      %113 = vmatpush1.msra.mxu0 0.0
      %114 = vmatprep.subr.mxu0 0.0
      %115 = vmatpush1.msra.mxu0 0.0
      %116 = vmatprep.subr.mxu0 0.0
      %117 = vmatpush1.msra.mxu0 0.0
      %118 = vmatprep.subr.mxu0 0.0
      %119 = vmatpush1.msra.mxu0 0.0
      %120 = vmatprep.subr.mxu0 0.0
      %121 = vmatpush1.msra.mxu0 0.0
      %122 = vmatprep.subr.mxu0 0.0
      %123 = vmatpush1.msra.mxu0 0.0
      %124 = vmatprep.subr.mxu0 0.0
      %125 = vmatpush1.msra.mxu0 0.0
      %126 = vmatprep.subr.mxu0 0.0
      %127 = vmatpush1.msra.mxu0 0.0
      %128 = vmatprep.subr.mxu0 0.0
      %129 = vmatpush1.msra.mxu0 0.0
      %130 = vmatprep.mubr.f32.mxu0 0.0
      %v131 = vand.u32 %v26, 4294901760
      %v132 = vsub.f32 %v26, %v131
      %v133 = vand.u32 %v132, 4294901760
      %v134 = vsub.f32 %v132, %v133
      %v135 = vand.u32 %v134, 4294901760
      %136 = vmatmul.mubr.f32.gmra.mrb[0].mxu0 %v135
      %v137 = vpop.f32.mrb[0].mxu0
      %v138 = vadd.f32 0.0, %v137
      %v139 = vpop.f32.mrb[0].mxu0
      %140 = vmatprep.mubr.f32.mxu0 0.0
      %v141 = vand.u32 %v27, 4294901760
      %v142 = vsub.f32 %v27, %v141
      %v143 = vand.u32 %v142, 4294901760
      %v144 = vsub.f32 %v142, %v143
      %v145 = vand.u32 %v144, 4294901760
      %146 = vmatmul.mubr.f32.gmra.mrb[0].mxu0 %v145
      %v147 = vpop.f32.mrb[0].mxu0
      %v148 = vadd.f32 0.0, %v147
      %v149 = vpop.f32.mrb[0].mxu0
      %150 = vmatprep.mubr.f32.mxu0 0.0
      %v151 = vand.u32 %v28, 4294901760
      %v152 = vsub.f32 %v28, %v151
      %v153 = vand.u32 %v152, 4294901760
      %v154 = vsub.f32 %v152, %v153
      %v155 = vand.u32 %v154, 4294901760
      %156 = vmatmul.mubr.f32.gmra.mrb[0].mxu0 %v155
      %v157 = vpop.f32.mrb[0].mxu0
      %v158 = vadd.f32 0.0, %v157
      %v159 = vpop.f32.mrb[0].mxu0
      %160 = vmatprep.mubr.f32.mxu0 0.0
      %v161 = vand.u32 %v29, 4294901760
      %v162 = vsub.f32 %v29, %v161
      %v163 = vand.u32 %v162, 4294901760
      %v164 = vsub.f32 %v162, %v163
      %v165 = vand.u32 %v164, 4294901760
      %166 = vmatmul.mubr.f32.gmra.mrb[0].mxu0 %v165
      %v167 = vpop.f32.mrb[0].mxu0
      %v168 = vadd.f32 0.0, %v167
      %v169 = vpop.f32.mrb[0].mxu0
      %170 = vmatprep.mubr.f32.mxu0 0.0
      %v171 = vand.u32 %v30, 4294901760
      %v172 = vsub.f32 %v30, %v171
      %v173 = vand.u32 %v172, 4294901760
      %v174 = vsub.f32 %v172, %v173
      %v175 = vand.u32 %v174, 4294901760
      %176 = vmatmul.mubr.f32.gmra.mrb[0].mxu0 %v175
      %v177 = vpop.f32.mrb[0].mxu0
      %v178 = vadd.f32 0.0, %v177
      %v179 = vpop.f32.mrb[0].mxu0
      %180 = vmatprep.mubr.f32.mxu0 0.0
      %v181 = vand.u32 %v31, 4294901760
      %v182 = vsub.f32 %v31, %v181
      %v183 = vand.u32 %v182, 4294901760
      %v184 = vsub.f32 %v182, %v183
      %v185 = vand.u32 %v184, 4294901760
      %186 = vmatmul.mubr.f32.gmra.mrb[0].mxu0 %v185
      %v187 = vpop.f32.mrb[0].mxu0
      %v188 = vadd.f32 0.0, %v187
      %v189 = vpop.f32.mrb[0].mxu0
      %190 = vmatprep.mubr.f32.mxu0 0.0
      %v191 = vand.u32 %v32, 4294901760
      %v192 = vsub.f32 %v32, %v191
      %v193 = vand.u32 %v192, 4294901760
      %v194 = vsub.f32 %v192, %v193
      %v195 = vand.u32 %v194, 4294901760
      %196 = vmatmul.mubr.f32.gmra.mrb[0].mxu0 %v195
      %v197 = vpop.f32.mrb[0].mxu0
      %v198 = vadd.f32 0.0, %v197
      %v199 = vpop.f32.mrb[0].mxu0
      %200 = vmatprep.mubr.f32.mxu0 0.0
      %v201 = vand.u32 %v33, 4294901760
      %v202 = vsub.f32 %v33, %v201
      %v203 = vand.u32 %v202, 4294901760
      %v204 = vsub.f32 %v202, %v203
      %v205 = vand.u32 %v204, 4294901760
      %206 = vmatmul.mubr.f32.gmra.mrb[0].mxu0 %v205
      %v207 = vpop.f32.mrb[0].mxu0
      %v208 = vadd.f32 0.0, %v207
      %v209 = vpop.f32.mrb[0].mxu0
      %210 = vdwg.mxu0
      %211 = vmatprep.subr.mxu0 0.0
      %v212 = vand.u32 %v34, 4294901760
      %v213 = vsub.f32 %v34, %v212
      %v214 = vand.u32 %v213, 4294901760
      %v215 = vsub.f32 %v213, %v214
      %v216 = vand.u32 %v215, 4294901760
      %217 = vmatpush1.msra.mxu0 %v216
      %218 = vmatprep.subr.mxu0 0.0
      %v219 = vand.u32 %v35, 4294901760
      %v220 = vsub.f32 %v35, %v219
      %v221 = vand.u32 %v220, 4294901760
      %v222 = vsub.f32 %v220, %v221
      %v223 = vand.u32 %v222, 4294901760
      %224 = vmatpush1.msra.mxu0 %v223
      %225 = vmatprep.subr.mxu0 0.0
      %v226 = vand.u32 %v36, 4294901760
      %v227 = vsub.f32 %v36, %v226
      %v228 = vand.u32 %v227, 4294901760
      %v229 = vsub.f32 %v227, %v228
      %v230 = vand.u32 %v229, 4294901760
      %231 = vmatpush1.msra.mxu0 %v230
      %232 = vmatprep.subr.mxu0 0.0
      %v233 = vand.u32 %v37, 4294901760
      %v234 = vsub.f32 %v37, %v233
      %v235 = vand.u32 %v234, 4294901760
      %v236 = vsub.f32 %v234, %v235
      %v237 = vand.u32 %v236, 4294901760
      %238 = vmatpush1.msra.mxu0 %v237
      %239 = vmatprep.subr.mxu0 0.0
      %v240 = vand.u32 %v38, 4294901760
      %v241 = vsub.f32 %v38, %v240
      %v242 = vand.u32 %v241, 4294901760
      %v243 = vsub.f32 %v241, %v242
      %v244 = vand.u32 %v243, 4294901760
      %245 = vmatpush1.msra.mxu0 %v244
      %246 = vmatprep.subr.mxu0 0.0
      %v247 = vand.u32 %v39, 4294901760
      %v248 = vsub.f32 %v39, %v247
      %v249 = vand.u32 %v248, 4294901760
      %v250 = vsub.f32 %v248, %v249
      %v251 = vand.u32 %v250, 4294901760
      %252 = vmatpush1.msra.mxu0 %v251
      %253 = vmatprep.subr.mxu0 0.0
      %v254 = vand.u32 %v40, 4294901760
      %v255 = vsub.f32 %v40, %v254
      %v256 = vand.u32 %v255, 4294901760
      %v257 = vsub.f32 %v255, %v256
      %v258 = vand.u32 %v257, 4294901760
      %259 = vmatpush1.msra.mxu0 %v258
      %260 = vmatprep.subr.mxu0 0.0
      %v261 = vand.u32 %v41, 4294901760
      %v262 = vsub.f32 %v41, %v261
      %v263 = vand.u32 %v262, 4294901760
      %v264 = vsub.f32 %v262, %v263
      %v265 = vand.u32 %v264, 4294901760
      %266 = vmatpush1.msra.mxu0 %v265
      %267 = vmatprep.subr.mxu0 0.0
      %v268 = vand.u32 %v42, 4294901760
      %v269 = vsub.f32 %v42, %v268
      %v270 = vand.u32 %v269, 4294901760
      %v271 = vsub.f32 %v269, %v270
      %v272 = vand.u32 %v271, 4294901760
      %273 = vmatpush1.msra.mxu0 %v272
      %274 = vmatprep.subr.mxu0 0.0
      %v275 = vand.u32 %v43, 4294901760
      %v276 = vsub.f32 %v43, %v275
      %v277 = vand.u32 %v276, 4294901760
      %v278 = vsub.f32 %v276, %v277
      %v279 = vand.u32 %v278, 4294901760
      %280 = vmatpush1.msra.mxu0 %v279
      %281 = vmatprep.subr.mxu0 0.0
      %v282 = vand.u32 %v44, 4294901760
      %v283 = vsub.f32 %v44, %v282
      %v284 = vand.u32 %v283, 4294901760
      %v285 = vsub.f32 %v283, %v284
      %v286 = vand.u32 %v285, 4294901760
      %287 = vmatpush1.msra.mxu0 %v286
      %288 = vmatprep.subr.mxu0 0.0
      %v289 = vand.u32 %v45, 4294901760
      %v290 = vsub.f32 %v45, %v289
      %v291 = vand.u32 %v290, 4294901760
      %v292 = vsub.f32 %v290, %v291
      %v293 = vand.u32 %v292, 4294901760
      %294 = vmatpush1.msra.mxu0 %v293
      %295 = vmatprep.subr.mxu0 0.0
      %v296 = vand.u32 %v46, 4294901760
      %v297 = vsub.f32 %v46, %v296
      %v298 = vand.u32 %v297, 4294901760
      %v299 = vsub.f32 %v297, %v298
      %v300 = vand.u32 %v299, 4294901760
      %301 = vmatpush1.msra.mxu0 %v300
      %302 = vmatprep.subr.mxu0 0.0
      %v303 = vand.u32 %v47, 4294901760
      %v304 = vsub.f32 %v47, %v303
      %v305 = vand.u32 %v304, 4294901760
      %v306 = vsub.f32 %v304, %v305
      %v307 = vand.u32 %v306, 4294901760
      %308 = vmatpush1.msra.mxu0 %v307
      %309 = vmatprep.subr.mxu0 0.0
      %v310 = vand.u32 %v48, 4294901760
      %v311 = vsub.f32 %v48, %v310
      %v312 = vand.u32 %v311, 4294901760
      %v313 = vsub.f32 %v311, %v312
      %v314 = vand.u32 %v313, 4294901760
      %315 = vmatpush1.msra.mxu0 %v314
      %316 = vmatprep.subr.mxu0 0.0
      %v317 = vand.u32 %v49, 4294901760
      %v318 = vsub.f32 %v49, %v317
      %v319 = vand.u32 %v318, 4294901760
      %v320 = vsub.f32 %v318, %v319
      %v321 = vand.u32 %v320, 4294901760
      %322 = vmatpush1.msra.mxu0 %v321
      %323 = vmatprep.subr.mxu0 0.0
      %324 = vmatpush1.msra.mxu0 0.0
      %325 = vmatprep.subr.mxu0 0.0
      %326 = vmatpush1.msra.mxu0 0.0
      %327 = vmatprep.subr.mxu0 0.0
      %328 = vmatpush1.msra.mxu0 0.0
      %329 = vmatprep.subr.mxu0 0.0
      %330 = vmatpush1.msra.mxu0 0.0
      %331 = vmatprep.subr.mxu0 0.0
      %332 = vmatpush1.msra.mxu0 0.0
      %333 = vmatprep.subr.mxu0 0.0
      %334 = vmatpush1.msra.mxu0 0.0
      %335 = vmatprep.subr.mxu0 0.0
      %336 = vmatpush1.msra.mxu0 0.0
      %337 = vmatprep.subr.mxu0 0.0
      %338 = vmatpush1.msra.mxu0 0.0
      %339 = vmatprep.subr.mxu0 0.0
      %340 = vmatpush1.msra.mxu0 0.0
      %341 = vmatprep.subr.mxu0 0.0
      %342 = vmatpush1.msra.mxu0 0.0
      %343 = vmatprep.subr.mxu0 0.0
      %344 = vmatpush1.msra.mxu0 0.0
      %345 = vmatprep.subr.mxu0 0.0
      %346 = vmatpush1.msra.mxu0 0.0
      %347 = vmatprep.subr.mxu0 0.0
      %348 = vmatpush1.msra.mxu0 0.0
      %349 = vmatprep.subr.mxu0 0.0
      %350 = vmatpush1.msra.mxu0 0.0
      %351 = vmatprep.subr.mxu0 0.0
      %352 = vmatpush1.msra.mxu0 0.0
      %353 = vmatprep.subr.mxu0 0.0
      %354 = vmatpush1.msra.mxu0 0.0
      %355 = vmatprep.mubr.f32.mxu0 0.0
      %v356 = vand.u32 %v26, 4294901760
      %357 = vmatmul.mubr.f32.gmra.mrb[0].mxu0 %v356
      %v358 = vpop.f32.mrb[0].mxu0
      %v359 = vadd.f32 %v138, %v358
      %v360 = vpop.f32.mrb[0].mxu0
      %361 = vmatprep.mubr.f32.mxu0 0.0
      %v362 = vand.u32 %v27, 4294901760
      %363 = vmatmul.mubr.f32.gmra.mrb[0].mxu0 %v362
      %v364 = vpop.f32.mrb[0].mxu0
      %v365 = vadd.f32 %v148, %v364
      %v366 = vpop.f32.mrb[0].mxu0
      %367 = vmatprep.mubr.f32.mxu0 0.0
      %v368 = vand.u32 %v28, 4294901760
      %369 = vmatmul.mubr.f32.gmra.mrb[0].mxu0 %v368
      %v370 = vpop.f32.mrb[0].mxu0
      %v371 = vadd.f32 %v158, %v370
      %v372 = vpop.f32.mrb[0].mxu0
      %373 = vmatprep.mubr.f32.mxu0 0.0
      %v374 = vand.u32 %v29, 4294901760
      %375 = vmatmul.mubr.f32.gmra.mrb[0].mxu0 %v374
      %v376 = vpop.f32.mrb[0].mxu0
      %v377 = vadd.f32 %v168, %v376
      %v378 = vpop.f32.mrb[0].mxu0
      %379 = vmatprep.mubr.f32.mxu0 0.0
      %v380 = vand.u32 %v30, 4294901760
      %381 = vmatmul.mubr.f32.gmra.mrb[0].mxu0 %v380
      %v382 = vpop.f32.mrb[0].mxu0
      %v383 = vadd.f32 %v178, %v382
      %v384 = vpop.f32.mrb[0].mxu0
      %385 = vmatprep.mubr.f32.mxu0 0.0
      %v386 = vand.u32 %v31, 4294901760
      %387 = vmatmul.mubr.f32.gmra.mrb[0].mxu0 %v386
      %v388 = vpop.f32.mrb[0].mxu0
      %v389 = vadd.f32 %v188, %v388
      %v390 = vpop.f32.mrb[0].mxu0
      %391 = vmatprep.mubr.f32.mxu0 0.0
      %v392 = vand.u32 %v32, 4294901760
      %393 = vmatmul.mubr.f32.gmra.mrb[0].mxu0 %v392
      %v394 = vpop.f32.mrb[0].mxu0
      %v395 = vadd.f32 %v198, %v394
      %v396 = vpop.f32.mrb[0].mxu0
      %397 = vmatprep.mubr.f32.mxu0 0.0
      %v398 = vand.u32 %v33, 4294901760
      %399 = vmatmul.mubr.f32.gmra.mrb[0].mxu0 %v398
      %v400 = vpop.f32.mrb[0].mxu0
      %v401 = vadd.f32 %v208, %v400
      %v402 = vpop.f32.mrb[0].mxu0
      %403 = vdwg.mxu0
      %404 = vmatprep.subr.mxu0 0.0
      %v405 = vand.u32 %v34, 4294901760
      %v406 = vsub.f32 %v34, %v405
      %407 = vmatpush1.msra.mxu0 %v406
      %408 = vmatprep.subr.mxu0 0.0
      %v409 = vand.u32 %v35, 4294901760
      %v410 = vsub.f32 %v35, %v409
      %411 = vmatpush1.msra.mxu0 %v410
      %412 = vmatprep.subr.mxu0 0.0
      %v413 = vand.u32 %v36, 4294901760
      %v414 = vsub.f32 %v36, %v413
      %415 = vmatpush1.msra.mxu0 %v414
      %416 = vmatprep.subr.mxu0 0.0
      %v417 = vand.u32 %v37, 4294901760
      %v418 = vsub.f32 %v37, %v417
      %419 = vmatpush1.msra.mxu0 %v418
      %420 = vmatprep.subr.mxu0 0.0
      %v421 = vand.u32 %v38, 4294901760
      %v422 = vsub.f32 %v38, %v421
      %423 = vmatpush1.msra.mxu0 %v422
      %424 = vmatprep.subr.mxu0 0.0
      %v425 = vand.u32 %v39, 4294901760
      %v426 = vsub.f32 %v39, %v425
      %427 = vmatpush1.msra.mxu0 %v426
      %428 = vmatprep.subr.mxu0 0.0
      %v429 = vand.u32 %v40, 4294901760
      %v430 = vsub.f32 %v40, %v429
      %431 = vmatpush1.msra.mxu0 %v430
      %432 = vmatprep.subr.mxu0 0.0
      %v433 = vand.u32 %v41, 4294901760
      %v434 = vsub.f32 %v41, %v433
      %435 = vmatpush1.msra.mxu0 %v434
      %436 = vmatprep.subr.mxu0 0.0
      %v437 = vand.u32 %v42, 4294901760
      %v438 = vsub.f32 %v42, %v437
      %439 = vmatpush1.msra.mxu0 %v438
      %440 = vmatprep.subr.mxu0 0.0
      %v441 = vand.u32 %v43, 4294901760
      %v442 = vsub.f32 %v43, %v441
      %443 = vmatpush1.msra.mxu0 %v442
      %444 = vmatprep.subr.mxu0 0.0
      %v445 = vand.u32 %v44, 4294901760
      %v446 = vsub.f32 %v44, %v445
      %447 = vmatpush1.msra.mxu0 %v446
      %448 = vmatprep.subr.mxu0 0.0
      %v449 = vand.u32 %v45, 4294901760
      %v450 = vsub.f32 %v45, %v449
      %451 = vmatpush1.msra.mxu0 %v450
      %452 = vmatprep.subr.mxu0 0.0
      %v453 = vand.u32 %v46, 4294901760
      %v454 = vsub.f32 %v46, %v453
      %455 = vmatpush1.msra.mxu0 %v454
      %456 = vmatprep.subr.mxu0 0.0
      %v457 = vand.u32 %v47, 4294901760
      %v458 = vsub.f32 %v47, %v457
      %459 = vmatpush1.msra.mxu0 %v458
      %460 = vmatprep.subr.mxu0 0.0
      %v461 = vand.u32 %v48, 4294901760
      %v462 = vsub.f32 %v48, %v461
      %463 = vmatpush1.msra.mxu0 %v462
      %464 = vmatprep.subr.mxu0 0.0
      %v465 = vand.u32 %v49, 4294901760
      %v466 = vsub.f32 %v49, %v465
      %467 = vmatpush1.msra.mxu0 %v466
      %468 = vmatprep.subr.mxu0 0.0
      %469 = vmatpush1.msra.mxu0 0.0
      %470 = vmatprep.subr.mxu0 0.0
      %471 = vmatpush1.msra.mxu0 0.0
      %472 = vmatprep.subr.mxu0 0.0
      %473 = vmatpush1.msra.mxu0 0.0
      %474 = vmatprep.subr.mxu0 0.0
      %475 = vmatpush1.msra.mxu0 0.0
      %476 = vmatprep.subr.mxu0 0.0
      %477 = vmatpush1.msra.mxu0 0.0
      %478 = vmatprep.subr.mxu0 0.0
      %479 = vmatpush1.msra.mxu0 0.0
      %480 = vmatprep.subr.mxu0 0.0
      %481 = vmatpush1.msra.mxu0 0.0
      %482 = vmatprep.subr.mxu0 0.0
      %483 = vmatpush1.msra.mxu0 0.0
      %484 = vmatprep.subr.mxu0 0.0
      %485 = vmatpush1.msra.mxu0 0.0
      %486 = vmatprep.subr.mxu0 0.0
      %487 = vmatpush1.msra.mxu0 0.0
      %488 = vmatprep.subr.mxu0 0.0
      %489 = vmatpush1.msra.mxu0 0.0
      %490 = vmatprep.subr.mxu0 0.0
      %491 = vmatpush1.msra.mxu0 0.0
      %492 = vmatprep.subr.mxu0 0.0
      %493 = vmatpush1.msra.mxu0 0.0
      %494 = vmatprep.subr.mxu0 0.0
      %495 = vmatpush1.msra.mxu0 0.0
      %496 = vmatprep.subr.mxu0 0.0
      %497 = vmatpush1.msra.mxu0 0.0
      %498 = vmatprep.subr.mxu0 0.0
      %499 = vmatpush1.msra.mxu0 0.0
      %500 = vmatprep.mubr.f32.mxu0 0.0
      %v501 = vand.u32 %v26, 4294901760
      %v502 = vsub.f32 %v26, %v501
      %503 = vmatmul.mubr.f32.gmra.mrb[0].mxu0 %v502
      %v504 = vpop.f32.mrb[0].mxu0
      %v505 = vadd.f32 %v359, %v504
      %v506 = vpop.f32.mrb[0].mxu0
      %507 = vmatprep.mubr.f32.mxu0 0.0
      %v508 = vand.u32 %v27, 4294901760
      %v509 = vsub.f32 %v27, %v508
      %510 = vmatmul.mubr.f32.gmra.mrb[0].mxu0 %v509
      %v511 = vpop.f32.mrb[0].mxu0
      %v512 = vadd.f32 %v365, %v511
      %v513 = vpop.f32.mrb[0].mxu0
      %514 = vmatprep.mubr.f32.mxu0 0.0
      %v515 = vand.u32 %v28, 4294901760
      %v516 = vsub.f32 %v28, %v515
      %517 = vmatmul.mubr.f32.gmra.mrb[0].mxu0 %v516
      %v518 = vpop.f32.mrb[0].mxu0
      %v519 = vadd.f32 %v371, %v518
      %v520 = vpop.f32.mrb[0].mxu0
      %521 = vmatprep.mubr.f32.mxu0 0.0
      %v522 = vand.u32 %v29, 4294901760
      %v523 = vsub.f32 %v29, %v522
      %524 = vmatmul.mubr.f32.gmra.mrb[0].mxu0 %v523
      %v525 = vpop.f32.mrb[0].mxu0
      %v526 = vadd.f32 %v377, %v525
      %v527 = vpop.f32.mrb[0].mxu0
      %528 = vmatprep.mubr.f32.mxu0 0.0
      %v529 = vand.u32 %v30, 4294901760
      %v530 = vsub.f32 %v30, %v529
      %531 = vmatmul.mubr.f32.gmra.mrb[0].mxu0 %v530
      %v532 = vpop.f32.mrb[0].mxu0
      %v533 = vadd.f32 %v383, %v532
      %v534 = vpop.f32.mrb[0].mxu0
      %535 = vmatprep.mubr.f32.mxu0 0.0
      %v536 = vand.u32 %v31, 4294901760
      %v537 = vsub.f32 %v31, %v536
      %538 = vmatmul.mubr.f32.gmra.mrb[0].mxu0 %v537
      %v539 = vpop.f32.mrb[0].mxu0
      %v540 = vadd.f32 %v389, %v539
      %v541 = vpop.f32.mrb[0].mxu0
      %542 = vmatprep.mubr.f32.mxu0 0.0
      %v543 = vand.u32 %v32, 4294901760
      %v544 = vsub.f32 %v32, %v543
      %545 = vmatmul.mubr.f32.gmra.mrb[0].mxu0 %v544
      %v546 = vpop.f32.mrb[0].mxu0
      %v547 = vadd.f32 %v395, %v546
      %v548 = vpop.f32.mrb[0].mxu0
      %549 = vmatprep.mubr.f32.mxu0 0.0
      %v550 = vand.u32 %v33, 4294901760
      %v551 = vsub.f32 %v33, %v550
      %552 = vmatmul.mubr.f32.gmra.mrb[0].mxu0 %v551
      %v553 = vpop.f32.mrb[0].mxu0
      %v554 = vadd.f32 %v401, %v553
      %v555 = vpop.f32.mrb[0].mxu0
      %556 = vdwg.mxu0
      %557 = vmatprep.subr.mxu0 0.0
      %v558 = vand.u32 %v34, 4294901760
      %559 = vmatpush1.msra.mxu0 %v558
      %560 = vmatprep.subr.mxu0 0.0
      %v561 = vand.u32 %v35, 4294901760
      %562 = vmatpush1.msra.mxu0 %v561
      %563 = vmatprep.subr.mxu0 0.0
      %v564 = vand.u32 %v36, 4294901760
      %565 = vmatpush1.msra.mxu0 %v564
      %566 = vmatprep.subr.mxu0 0.0
      %v567 = vand.u32 %v37, 4294901760
      %568 = vmatpush1.msra.mxu0 %v567
      %569 = vmatprep.subr.mxu0 0.0
      %v570 = vand.u32 %v38, 4294901760
      %571 = vmatpush1.msra.mxu0 %v570
      %572 = vmatprep.subr.mxu0 0.0
      %v573 = vand.u32 %v39, 4294901760
      %574 = vmatpush1.msra.mxu0 %v573
      %575 = vmatprep.subr.mxu0 0.0
      %v576 = vand.u32 %v40, 4294901760
      %577 = vmatpush1.msra.mxu0 %v576
      %578 = vmatprep.subr.mxu0 0.0
      %v579 = vand.u32 %v41, 4294901760
      %580 = vmatpush1.msra.mxu0 %v579
      %581 = vmatprep.subr.mxu0 0.0
      %v582 = vand.u32 %v42, 4294901760
      %583 = vmatpush1.msra.mxu0 %v582
      %584 = vmatprep.subr.mxu0 0.0
      %v585 = vand.u32 %v43, 4294901760
      %586 = vmatpush1.msra.mxu0 %v585
      %587 = vmatprep.subr.mxu0 0.0
      %v588 = vand.u32 %v44, 4294901760
      %589 = vmatpush1.msra.mxu0 %v588
      %590 = vmatprep.subr.mxu0 0.0
      %v591 = vand.u32 %v45, 4294901760
      %592 = vmatpush1.msra.mxu0 %v591
      %593 = vmatprep.subr.mxu0 0.0
      %v594 = vand.u32 %v46, 4294901760
      %595 = vmatpush1.msra.mxu0 %v594
      %596 = vmatprep.subr.mxu0 0.0
      %v597 = vand.u32 %v47, 4294901760
      %598 = vmatpush1.msra.mxu0 %v597
      %599 = vmatprep.subr.mxu0 0.0
      %v600 = vand.u32 %v48, 4294901760
      %601 = vmatpush1.msra.mxu0 %v600
      %602 = vmatprep.subr.mxu0 0.0
      %v603 = vand.u32 %v49, 4294901760
      %604 = vmatpush1.msra.mxu0 %v603
      %605 = vmatprep.subr.mxu0 0.0
      %606 = vmatpush1.msra.mxu0 0.0
      %607 = vmatprep.subr.mxu0 0.0
      %608 = vmatpush1.msra.mxu0 0.0
      %609 = vmatprep.subr.mxu0 0.0
      %610 = vmatpush1.msra.mxu0 0.0
      %611 = vmatprep.subr.mxu0 0.0
      %612 = vmatpush1.msra.mxu0 0.0
      %613 = vmatprep.subr.mxu0 0.0
      %614 = vmatpush1.msra.mxu0 0.0
      %615 = vmatprep.subr.mxu0 0.0
      %616 = vmatpush1.msra.mxu0 0.0
      %617 = vmatprep.subr.mxu0 0.0
      %618 = vmatpush1.msra.mxu0 0.0
      %619 = vmatprep.subr.mxu0 0.0
      %620 = vmatpush1.msra.mxu0 0.0
      %621 = vmatprep.subr.mxu0 0.0
      %622 = vmatpush1.msra.mxu0 0.0
      %623 = vmatprep.subr.mxu0 0.0
      %624 = vmatpush1.msra.mxu0 0.0
      %625 = vmatprep.subr.mxu0 0.0
      %626 = vmatpush1.msra.mxu0 0.0
      %627 = vmatprep.subr.mxu0 0.0
      %628 = vmatpush1.msra.mxu0 0.0
      %629 = vmatprep.subr.mxu0 0.0
      %630 = vmatpush1.msra.mxu0 0.0
      %631 = vmatprep.subr.mxu0 0.0
      %632 = vmatpush1.msra.mxu0 0.0
      %633 = vmatprep.subr.mxu0 0.0
      %634 = vmatpush1.msra.mxu0 0.0
      %635 = vmatprep.subr.mxu0 0.0
      %636 = vmatpush1.msra.mxu0 0.0
      %637 = vmatprep.mubr.f32.mxu0 0.0
      %v638 = vand.u32 %v26, 4294901760
      %v639 = vsub.f32 %v26, %v638
      %v640 = vand.u32 %v639, 4294901760
      %641 = vmatmul.mubr.f32.gmra.mrb[0].mxu0 %v640
      %v642 = vpop.f32.mrb[0].mxu0
      %v643 = vadd.f32 %v505, %v642
      %v644 = vpop.f32.mrb[0].mxu0
      %645 = vmatprep.mubr.f32.mxu0 0.0
      %v646 = vand.u32 %v27, 4294901760
      %v647 = vsub.f32 %v27, %v646
      %v648 = vand.u32 %v647, 4294901760
      %649 = vmatmul.mubr.f32.gmra.mrb[0].mxu0 %v648
      %v650 = vpop.f32.mrb[0].mxu0
      %v651 = vadd.f32 %v512, %v650
      %v652 = vpop.f32.mrb[0].mxu0
      %653 = vmatprep.mubr.f32.mxu0 0.0
      %v654 = vand.u32 %v28, 4294901760
      %v655 = vsub.f32 %v28, %v654
      %v656 = vand.u32 %v655, 4294901760
      %657 = vmatmul.mubr.f32.gmra.mrb[0].mxu0 %v656
      %v658 = vpop.f32.mrb[0].mxu0
      %v659 = vadd.f32 %v519, %v658
      %v660 = vpop.f32.mrb[0].mxu0
      %661 = vmatprep.mubr.f32.mxu0 0.0
      %v662 = vand.u32 %v29, 4294901760
      %v663 = vsub.f32 %v29, %v662
      %v664 = vand.u32 %v663, 4294901760
      %665 = vmatmul.mubr.f32.gmra.mrb[0].mxu0 %v664
      %v666 = vpop.f32.mrb[0].mxu0
      %v667 = vadd.f32 %v526, %v666
      %v668 = vpop.f32.mrb[0].mxu0
      %669 = vmatprep.mubr.f32.mxu0 0.0
      %v670 = vand.u32 %v30, 4294901760
      %v671 = vsub.f32 %v30, %v670
      %v672 = vand.u32 %v671, 4294901760
      %673 = vmatmul.mubr.f32.gmra.mrb[0].mxu0 %v672
      %v674 = vpop.f32.mrb[0].mxu0
      %v675 = vadd.f32 %v533, %v674
      %v676 = vpop.f32.mrb[0].mxu0
      %677 = vmatprep.mubr.f32.mxu0 0.0
      %v678 = vand.u32 %v31, 4294901760
      %v679 = vsub.f32 %v31, %v678
      %v680 = vand.u32 %v679, 4294901760
      %681 = vmatmul.mubr.f32.gmra.mrb[0].mxu0 %v680
      %v682 = vpop.f32.mrb[0].mxu0
      %v683 = vadd.f32 %v540, %v682
      %v684 = vpop.f32.mrb[0].mxu0
      %685 = vmatprep.mubr.f32.mxu0 0.0
      %v686 = vand.u32 %v32, 4294901760
      %v687 = vsub.f32 %v32, %v686
      %v688 = vand.u32 %v687, 4294901760
      %689 = vmatmul.mubr.f32.gmra.mrb[0].mxu0 %v688
      %v690 = vpop.f32.mrb[0].mxu0
      %v691 = vadd.f32 %v547, %v690
      %v692 = vpop.f32.mrb[0].mxu0
      %693 = vmatprep.mubr.f32.mxu0 0.0
      %v694 = vand.u32 %v33, 4294901760
      %v695 = vsub.f32 %v33, %v694
      %v696 = vand.u32 %v695, 4294901760
      %697 = vmatmul.mubr.f32.gmra.mrb[0].mxu0 %v696
      %v698 = vpop.f32.mrb[0].mxu0
      %v699 = vadd.f32 %v554, %v698
      %v700 = vpop.f32.mrb[0].mxu0
      %701 = vdwg.mxu0
      %702 = vmatprep.subr.mxu0 0.0
      %v703 = vand.u32 %v34, 4294901760
      %v704 = vsub.f32 %v34, %v703
      %v705 = vand.u32 %v704, 4294901760
      %706 = vmatpush1.msra.mxu0 %v705
      %707 = vmatprep.subr.mxu0 0.0
      %v708 = vand.u32 %v35, 4294901760
      %v709 = vsub.f32 %v35, %v708
      %v710 = vand.u32 %v709, 4294901760
      %711 = vmatpush1.msra.mxu0 %v710
      %712 = vmatprep.subr.mxu0 0.0
      %v713 = vand.u32 %v36, 4294901760
      %v714 = vsub.f32 %v36, %v713
      %v715 = vand.u32 %v714, 4294901760
      %716 = vmatpush1.msra.mxu0 %v715
      %717 = vmatprep.subr.mxu0 0.0
      %v718 = vand.u32 %v37, 4294901760
      %v719 = vsub.f32 %v37, %v718
      %v720 = vand.u32 %v719, 4294901760
      %721 = vmatpush1.msra.mxu0 %v720
      %722 = vmatprep.subr.mxu0 0.0
      %v723 = vand.u32 %v38, 4294901760
      %v724 = vsub.f32 %v38, %v723
      %v725 = vand.u32 %v724, 4294901760
      %726 = vmatpush1.msra.mxu0 %v725
      %727 = vmatprep.subr.mxu0 0.0
      %v728 = vand.u32 %v39, 4294901760
      %v729 = vsub.f32 %v39, %v728
      %v730 = vand.u32 %v729, 4294901760
      %731 = vmatpush1.msra.mxu0 %v730
      %732 = vmatprep.subr.mxu0 0.0
      %v733 = vand.u32 %v40, 4294901760
      %v734 = vsub.f32 %v40, %v733
      %v735 = vand.u32 %v734, 4294901760
      %736 = vmatpush1.msra.mxu0 %v735
      %737 = vmatprep.subr.mxu0 0.0
      %v738 = vand.u32 %v41, 4294901760
      %v739 = vsub.f32 %v41, %v738
      %v740 = vand.u32 %v739, 4294901760
      %741 = vmatpush1.msra.mxu0 %v740
      %742 = vmatprep.subr.mxu0 0.0
      %v743 = vand.u32 %v42, 4294901760
      %v744 = vsub.f32 %v42, %v743
      %v745 = vand.u32 %v744, 4294901760
      %746 = vmatpush1.msra.mxu0 %v745
      %747 = vmatprep.subr.mxu0 0.0
      %v748 = vand.u32 %v43, 4294901760
      %v749 = vsub.f32 %v43, %v748
      %v750 = vand.u32 %v749, 4294901760
      %751 = vmatpush1.msra.mxu0 %v750
      %752 = vmatprep.subr.mxu0 0.0
      %v753 = vand.u32 %v44, 4294901760
      %v754 = vsub.f32 %v44, %v753
      %v755 = vand.u32 %v754, 4294901760
      %756 = vmatpush1.msra.mxu0 %v755
      %757 = vmatprep.subr.mxu0 0.0
      %v758 = vand.u32 %v45, 4294901760
      %v759 = vsub.f32 %v45, %v758
      %v760 = vand.u32 %v759, 4294901760
      %761 = vmatpush1.msra.mxu0 %v760
      %762 = vmatprep.subr.mxu0 0.0
      %v763 = vand.u32 %v46, 4294901760
      %v764 = vsub.f32 %v46, %v763
      %v765 = vand.u32 %v764, 4294901760
      %766 = vmatpush1.msra.mxu0 %v765
      %767 = vmatprep.subr.mxu0 0.0
      %v768 = vand.u32 %v47, 4294901760
      %v769 = vsub.f32 %v47, %v768
      %v770 = vand.u32 %v769, 4294901760
      %771 = vmatpush1.msra.mxu0 %v770
      %772 = vmatprep.subr.mxu0 0.0
      %v773 = vand.u32 %v48, 4294901760
      %v774 = vsub.f32 %v48, %v773
      %v775 = vand.u32 %v774, 4294901760
      %776 = vmatpush1.msra.mxu0 %v775
      %777 = vmatprep.subr.mxu0 0.0
      %v778 = vand.u32 %v49, 4294901760
      %v779 = vsub.f32 %v49, %v778
      %v780 = vand.u32 %v779, 4294901760
      %781 = vmatpush1.msra.mxu0 %v780
      %782 = vmatprep.subr.mxu0 0.0
      %783 = vmatpush1.msra.mxu0 0.0
      %784 = vmatprep.subr.mxu0 0.0
      %785 = vmatpush1.msra.mxu0 0.0
      %786 = vmatprep.subr.mxu0 0.0
      %787 = vmatpush1.msra.mxu0 0.0
      %788 = vmatprep.subr.mxu0 0.0
      %789 = vmatpush1.msra.mxu0 0.0
      %790 = vmatprep.subr.mxu0 0.0
      %791 = vmatpush1.msra.mxu0 0.0
      %792 = vmatprep.subr.mxu0 0.0
      %793 = vmatpush1.msra.mxu0 0.0
      %794 = vmatprep.subr.mxu0 0.0
      %795 = vmatpush1.msra.mxu0 0.0
      %796 = vmatprep.subr.mxu0 0.0
      %797 = vmatpush1.msra.mxu0 0.0
      %798 = vmatprep.subr.mxu0 0.0
      %799 = vmatpush1.msra.mxu0 0.0
      %800 = vmatprep.subr.mxu0 0.0
      %801 = vmatpush1.msra.mxu0 0.0
      %802 = vmatprep.subr.mxu0 0.0
      %803 = vmatpush1.msra.mxu0 0.0
      %804 = vmatprep.subr.mxu0 0.0
      %805 = vmatpush1.msra.mxu0 0.0
      %806 = vmatprep.subr.mxu0 0.0
      %807 = vmatpush1.msra.mxu0 0.0
      %808 = vmatprep.subr.mxu0 0.0
      %809 = vmatpush1.msra.mxu0 0.0
      %810 = vmatprep.subr.mxu0 0.0
      %811 = vmatpush1.msra.mxu0 0.0
      %812 = vmatprep.subr.mxu0 0.0
      %813 = vmatpush1.msra.mxu0 0.0
      %814 = vmatprep.mubr.f32.mxu0 0.0
      %v815 = vand.u32 %v26, 4294901760
      %816 = vmatmul.mubr.f32.gmra.mrb[0].mxu0 %v815
      %v817 = vpop.f32.mrb[0].mxu0
      %v818 = vadd.f32 %v643, %v817
      %v819 = vpop.f32.mrb[0].mxu0
      %820 = vmatprep.mubr.f32.mxu0 0.0
      %v821 = vand.u32 %v27, 4294901760
      %822 = vmatmul.mubr.f32.gmra.mrb[0].mxu0 %v821
      %v823 = vpop.f32.mrb[0].mxu0
      %v824 = vadd.f32 %v651, %v823
      %v825 = vpop.f32.mrb[0].mxu0
      %826 = vmatprep.mubr.f32.mxu0 0.0
      %v827 = vand.u32 %v28, 4294901760
      %828 = vmatmul.mubr.f32.gmra.mrb[0].mxu0 %v827
      %v829 = vpop.f32.mrb[0].mxu0
      %v830 = vadd.f32 %v659, %v829
      %v831 = vpop.f32.mrb[0].mxu0
      %832 = vmatprep.mubr.f32.mxu0 0.0
      %v833 = vand.u32 %v29, 4294901760
      %834 = vmatmul.mubr.f32.gmra.mrb[0].mxu0 %v833
      %v835 = vpop.f32.mrb[0].mxu0
      %v836 = vadd.f32 %v667, %v835
      %v837 = vpop.f32.mrb[0].mxu0
      %838 = vmatprep.mubr.f32.mxu0 0.0
      %v839 = vand.u32 %v30, 4294901760
      %840 = vmatmul.mubr.f32.gmra.mrb[0].mxu0 %v839
      %v841 = vpop.f32.mrb[0].mxu0
      %v842 = vadd.f32 %v675, %v841
      %v843 = vpop.f32.mrb[0].mxu0
      %844 = vmatprep.mubr.f32.mxu0 0.0
      %v845 = vand.u32 %v31, 4294901760
      %846 = vmatmul.mubr.f32.gmra.mrb[0].mxu0 %v845
      %v847 = vpop.f32.mrb[0].mxu0
      %v848 = vadd.f32 %v683, %v847
      %v849 = vpop.f32.mrb[0].mxu0
      %850 = vmatprep.mubr.f32.mxu0 0.0
      %v851 = vand.u32 %v32, 4294901760
      %852 = vmatmul.mubr.f32.gmra.mrb[0].mxu0 %v851
      %v853 = vpop.f32.mrb[0].mxu0
      %v854 = vadd.f32 %v691, %v853
      %v855 = vpop.f32.mrb[0].mxu0
      %856 = vmatprep.mubr.f32.mxu0 0.0
      %v857 = vand.u32 %v33, 4294901760
      %858 = vmatmul.mubr.f32.gmra.mrb[0].mxu0 %v857
      %v859 = vpop.f32.mrb[0].mxu0
      %v860 = vadd.f32 %v699, %v859
      %v861 = vpop.f32.mrb[0].mxu0
      %862 = vdwg.mxu0
      %863 = vmatprep.subr.mxu0 0.0
      %v864 = vand.u32 %v34, 4294901760
      %865 = vmatpush1.msra.mxu0 %v864
      %866 = vmatprep.subr.mxu0 0.0
      %v867 = vand.u32 %v35, 4294901760
      %868 = vmatpush1.msra.mxu0 %v867
      %869 = vmatprep.subr.mxu0 0.0
      %v870 = vand.u32 %v36, 4294901760
      %871 = vmatpush1.msra.mxu0 %v870
      %872 = vmatprep.subr.mxu0 0.0
      %v873 = vand.u32 %v37, 4294901760
      %874 = vmatpush1.msra.mxu0 %v873
      %875 = vmatprep.subr.mxu0 0.0
      %v876 = vand.u32 %v38, 4294901760
      %877 = vmatpush1.msra.mxu0 %v876
      %878 = vmatprep.subr.mxu0 0.0
      %v879 = vand.u32 %v39, 4294901760
      %880 = vmatpush1.msra.mxu0 %v879
      %881 = vmatprep.subr.mxu0 0.0
      %v882 = vand.u32 %v40, 4294901760
      %883 = vmatpush1.msra.mxu0 %v882
      %884 = vmatprep.subr.mxu0 0.0
      %v885 = vand.u32 %v41, 4294901760
      %886 = vmatpush1.msra.mxu0 %v885
      %887 = vmatprep.subr.mxu0 0.0
      %v888 = vand.u32 %v42, 4294901760
      %889 = vmatpush1.msra.mxu0 %v888
      %890 = vmatprep.subr.mxu0 0.0
      %v891 = vand.u32 %v43, 4294901760
      %892 = vmatpush1.msra.mxu0 %v891
      %893 = vmatprep.subr.mxu0 0.0
      %v894 = vand.u32 %v44, 4294901760
      %895 = vmatpush1.msra.mxu0 %v894
      %896 = vmatprep.subr.mxu0 0.0
      %v897 = vand.u32 %v45, 4294901760
      %898 = vmatpush1.msra.mxu0 %v897
      %899 = vmatprep.subr.mxu0 0.0
      %v900 = vand.u32 %v46, 4294901760
      %901 = vmatpush1.msra.mxu0 %v900
      %902 = vmatprep.subr.mxu0 0.0
      %v903 = vand.u32 %v47, 4294901760
      %904 = vmatpush1.msra.mxu0 %v903
      %905 = vmatprep.subr.mxu0 0.0
      %v906 = vand.u32 %v48, 4294901760
      %907 = vmatpush1.msra.mxu0 %v906
      %908 = vmatprep.subr.mxu0 0.0
      %v909 = vand.u32 %v49, 4294901760
      %910 = vmatpush1.msra.mxu0 %v909
      %911 = vmatprep.subr.mxu0 0.0
      %912 = vmatpush1.msra.mxu0 0.0
      %913 = vmatprep.subr.mxu0 0.0
      %914 = vmatpush1.msra.mxu0 0.0
      %915 = vmatprep.subr.mxu0 0.0
      %916 = vmatpush1.msra.mxu0 0.0
      %917 = vmatprep.subr.mxu0 0.0
      %918 = vmatpush1.msra.mxu0 0.0
      %919 = vmatprep.subr.mxu0 0.0
      %920 = vmatpush1.msra.mxu0 0.0
      %921 = vmatprep.subr.mxu0 0.0
      %922 = vmatpush1.msra.mxu0 0.0
      %923 = vmatprep.subr.mxu0 0.0
      %924 = vmatpush1.msra.mxu0 0.0
      %925 = vmatprep.subr.mxu0 0.0
      %926 = vmatpush1.msra.mxu0 0.0
      %927 = vmatprep.subr.mxu0 0.0
      %928 = vmatpush1.msra.mxu0 0.0
      %929 = vmatprep.subr.mxu0 0.0
      %930 = vmatpush1.msra.mxu0 0.0
      %931 = vmatprep.subr.mxu0 0.0
      %932 = vmatpush1.msra.mxu0 0.0
      %933 = vmatprep.subr.mxu0 0.0
      %934 = vmatpush1.msra.mxu0 0.0
      %935 = vmatprep.subr.mxu0 0.0
      %936 = vmatpush1.msra.mxu0 0.0
      %937 = vmatprep.subr.mxu0 0.0
      %938 = vmatpush1.msra.mxu0 0.0
      %939 = vmatprep.subr.mxu0 0.0
      %940 = vmatpush1.msra.mxu0 0.0
      %941 = vmatprep.subr.mxu0 0.0
      %942 = vmatpush1.msra.mxu0 0.0
      %943 = vmatprep.mubr.f32.mxu0 0.0
      %v944 = vand.u32 %v26, 4294901760
      %945 = vmatmul.mubr.f32.gmra.mrb[0].mxu0 %v944
      %v946 = vpop.f32.mrb[0].mxu0
      %v947 = vadd.f32 %v818, %v946
      %v948 = vpop.f32.mrb[0].mxu0
      %949 = vmatprep.mubr.f32.mxu0 0.0
      %v950 = vand.u32 %v27, 4294901760
      %951 = vmatmul.mubr.f32.gmra.mrb[0].mxu0 %v950
      %v952 = vpop.f32.mrb[0].mxu0
      %v953 = vadd.f32 %v824, %v952
      %v954 = vpop.f32.mrb[0].mxu0
      %955 = vmatprep.mubr.f32.mxu0 0.0
      %v956 = vand.u32 %v28, 4294901760
      %957 = vmatmul.mubr.f32.gmra.mrb[0].mxu0 %v956
      %v958 = vpop.f32.mrb[0].mxu0
      %v959 = vadd.f32 %v830, %v958
      %v960 = vpop.f32.mrb[0].mxu0
      %961 = vmatprep.mubr.f32.mxu0 0.0
      %v962 = vand.u32 %v29, 4294901760
      %963 = vmatmul.mubr.f32.gmra.mrb[0].mxu0 %v962
      %v964 = vpop.f32.mrb[0].mxu0
      %v965 = vadd.f32 %v836, %v964
      %v966 = vpop.f32.mrb[0].mxu0
      %967 = vmatprep.mubr.f32.mxu0 0.0
      %v968 = vand.u32 %v30, 4294901760
      %969 = vmatmul.mubr.f32.gmra.mrb[0].mxu0 %v968
      %v970 = vpop.f32.mrb[0].mxu0
      %v971 = vadd.f32 %v842, %v970
      %v972 = vpop.f32.mrb[0].mxu0
      %973 = vmatprep.mubr.f32.mxu0 0.0
      %v974 = vand.u32 %v31, 4294901760
      %975 = vmatmul.mubr.f32.gmra.mrb[0].mxu0 %v974
      %v976 = vpop.f32.mrb[0].mxu0
      %v977 = vadd.f32 %v848, %v976
      %v978 = vpop.f32.mrb[0].mxu0
      %979 = vmatprep.mubr.f32.mxu0 0.0
      %v980 = vand.u32 %v32, 4294901760
      %981 = vmatmul.mubr.f32.gmra.mrb[0].mxu0 %v980
      %v982 = vpop.f32.mrb[0].mxu0
      %v983 = vadd.f32 %v854, %v982
      %v984 = vpop.f32.mrb[0].mxu0
      %985 = vmatprep.mubr.f32.mxu0 0.0
      %v986 = vand.u32 %v33, 4294901760
      %987 = vmatmul.mubr.f32.gmra.mrb[0].mxu0 %v986
      %v988 = vpop.f32.mrb[0].mxu0
      %v989 = vadd.f32 %v860, %v988
      %v990 = vpop.f32.mrb[0].mxu0
      %991 = vdwg.mxu0
      %v992 = vld [vmem:[%s3] sm:$0x1]
      %v994 = vlaneseq
      %v995 = vshrl.u32 %v994, 7
      %v996 = vsub.s32 0, %v995
      %v997 = vrot.slane %v992, %v996
      %v999 = vsub.f32 %v947, %v997
      %v1000 = vsub.f32 %v953, %v997
      %v1001 = vsub.f32 %v959, %v997
      %v1002 = vsub.f32 %v965, %v997
      %v1003 = vsub.f32 %v971, %v997
      %v1004 = vsub.f32 %v977, %v997
      %v1005 = vsub.f32 %v983, %v997
      %v1006 = vsub.f32 %v989, %v997
      %v1007 = vld [vmem:[%s1] sm:$0xff]
      %v1008 = vld [vmem:[%s1 + $0x8] sm:$0xff]
      %v1009 = vld [vmem:[%s1 + $0x10] sm:$0xff]
      %v1010 = vld [vmem:[%s1 + $0x18] sm:$0xff]
      %v1011 = vld [vmem:[%s1 + $0x20] sm:$0xff]
      %v1012 = vld [vmem:[%s1 + $0x28] sm:$0xff]
      %v1013 = vld [vmem:[%s1 + $0x30] sm:$0xff]
      %v1014 = vld [vmem:[%s1 + $0x38] sm:$0xff]
      %1016 = vset.pattern.permute.xlu0 0
      %1017 = vperm.xlu0 %1016, %v1007
      %v1018 = vpop.permute.xlu0 %1017
      %1021 = vset.pattern.permute.xlu0 0
      %1022 = vperm.xlu0 %1021, %v1008
      %v1023 = vpop.permute.xlu0 %1022
      %1026 = vset.pattern.permute.xlu0 0
      %1027 = vperm.xlu0 %1026, %v1009
      %v1028 = vpop.permute.xlu0 %1027
      %1031 = vset.pattern.permute.xlu0 0
      %1032 = vperm.xlu0 %1031, %v1010
      %v1033 = vpop.permute.xlu0 %1032
      %1036 = vset.pattern.permute.xlu0 0
      %1037 = vperm.xlu0 %1036, %v1011
      %v1038 = vpop.permute.xlu0 %1037
      %1041 = vset.pattern.permute.xlu0 0
      %1042 = vperm.xlu0 %1041, %v1012
      %v1043 = vpop.permute.xlu0 %1042
      %1046 = vset.pattern.permute.xlu0 0
      %1047 = vperm.xlu0 %1046, %v1013
      %v1048 = vpop.permute.xlu0 %1047
      %1051 = vset.pattern.permute.xlu0 0
      %1052 = vperm.xlu0 %1051, %v1014
      %v1053 = vpop.permute.xlu0 %1052
      %v1055 = vmul.f32 %v999, %v1018
      %v1056 = vmul.f32 %v1000, %v1023
      %v1057 = vmul.f32 %v1001, %v1028
      %v1058 = vmul.f32 %v1002, %v1033
      %v1059 = vmul.f32 %v1003, %v1038
      %v1060 = vmul.f32 %v1004, %v1043
      %v1061 = vmul.f32 %v1005, %v1048
      %v1062 = vmul.f32 %v1006, %v1053
      %vm1063 = vcmp.lt.f32.partialorder %v1055, 3.4e+38
      %vm1064 = vcmp.lt.f32.partialorder %v1056, 3.4e+38
      %vm1065 = vcmp.lt.f32.partialorder %v1057, 3.4e+38
      %vm1066 = vcmp.lt.f32.partialorder %v1058, 3.4e+38
      %vm1067 = vcmp.lt.f32.partialorder %v1059, 3.4e+38
      %vm1068 = vcmp.lt.f32.partialorder %v1060, 3.4e+38
      %vm1069 = vcmp.lt.f32.partialorder %v1061, 3.4e+38
      %vm1070 = vcmp.lt.f32.partialorder %v1062, 3.4e+38
      %v1071 = vsel %vm1063, %v1055, -3.4e+38
      %v1072 = vsel %vm1064, %v1056, -3.4e+38
      %v1073 = vsel %vm1065, %v1057, -3.4e+38
      %v1074 = vsel %vm1066, %v1058, -3.4e+38
      %v1075 = vsel %vm1067, %v1059, -3.4e+38
      %v1076 = vsel %vm1068, %v1060, -3.4e+38
      %v1077 = vsel %vm1069, %v1061, -3.4e+38
      %v1078 = vsel %vm1070, %v1062, -3.4e+38
      %v1079 = vmax.f32 %v1071, %v1075
      %v1080 = vmax.f32 %v1072, %v1076
      %v1081 = vmax.f32 %v1073, %v1077
      %v1082 = vmax.f32 %v1074, %v1078
      %v1083 = vmax.f32 %v1079, %v1080
      %v1084 = vmax.f32 %v1081, %v1082
      %v1085 = vmax.f32 %v1083, %v1084
      %v1086 = vrot.slane %v1085, 4
      %v1087 = vmax.f32 %v1085, %v1086
      %v1088 = vrot.slane %v1087, 2
      %v1089 = vmax.f32 %v1087, %v1088
      %v1090 = vrot.slane %v1089, 1
      %v1091 = vmax.f32 %v1089, %v1090
      %vm1092 = vcmp.lt.f32.partialorder %v1055, %v1091
      %vm1093 = vcmp.lt.f32.partialorder %v1056, %v1091
      %vm1094 = vcmp.lt.f32.partialorder %v1057, %v1091
      %vm1095 = vcmp.lt.f32.partialorder %v1058, %v1091
      %vm1096 = vcmp.lt.f32.partialorder %v1059, %v1091
      %vm1097 = vcmp.lt.f32.partialorder %v1060, %v1091
      %vm1098 = vcmp.lt.f32.partialorder %v1061, %v1091
      %vm1099 = vcmp.lt.f32.partialorder %v1062, %v1091
      %v1100 = vsel %vm1092, %v1055, -3.4e+38
      %v1101 = vsel %vm1093, %v1056, -3.4e+38
      %v1102 = vsel %vm1094, %v1057, -3.4e+38
      %v1103 = vsel %vm1095, %v1058, -3.4e+38
      %v1104 = vsel %vm1096, %v1059, -3.4e+38
      %v1105 = vsel %vm1097, %v1060, -3.4e+38
      %v1106 = vsel %vm1098, %v1061, -3.4e+38
      %v1107 = vsel %vm1099, %v1062, -3.4e+38
      %v1108 = vmax.f32 %v1100, %v1104
      %v1109 = vmax.f32 %v1101, %v1105
      %v1110 = vmax.f32 %v1102, %v1106
      %v1111 = vmax.f32 %v1103, %v1107
      %v1112 = vmax.f32 %v1108, %v1109
      %v1113 = vmax.f32 %v1110, %v1111
      %v1114 = vmax.f32 %v1112, %v1113
      %v1115 = vrot.slane %v1114, 4
      %v1116 = vmax.f32 %v1114, %v1115
      %v1117 = vrot.slane %v1116, 2
      %v1118 = vmax.f32 %v1116, %v1117
      %v1119 = vrot.slane %v1118, 1
      %v1120 = vmax.f32 %v1118, %v1119
      %vm1121 = vcmp.lt.f32.partialorder %v1055, %v1120
      %vm1122 = vcmp.lt.f32.partialorder %v1056, %v1120
      %vm1123 = vcmp.lt.f32.partialorder %v1057, %v1120
      %vm1124 = vcmp.lt.f32.partialorder %v1058, %v1120
      %vm1125 = vcmp.lt.f32.partialorder %v1059, %v1120
      %vm1126 = vcmp.lt.f32.partialorder %v1060, %v1120
      %vm1127 = vcmp.lt.f32.partialorder %v1061, %v1120
      %vm1128 = vcmp.lt.f32.partialorder %v1062, %v1120
      %v1129 = vsel %vm1121, %v1055, -3.4e+38
      %v1130 = vsel %vm1122, %v1056, -3.4e+38
      %v1131 = vsel %vm1123, %v1057, -3.4e+38
      %v1132 = vsel %vm1124, %v1058, -3.4e+38
      %v1133 = vsel %vm1125, %v1059, -3.4e+38
      %v1134 = vsel %vm1126, %v1060, -3.4e+38
      %v1135 = vsel %vm1127, %v1061, -3.4e+38
      %v1136 = vsel %vm1128, %v1062, -3.4e+38
      %v1137 = vmax.f32 %v1129, %v1133
      %v1138 = vmax.f32 %v1130, %v1134
      %v1139 = vmax.f32 %v1131, %v1135
      %v1140 = vmax.f32 %v1132, %v1136
      %v1141 = vmax.f32 %v1137, %v1138
      %v1142 = vmax.f32 %v1139, %v1140
      %v1143 = vmax.f32 %v1141, %v1142
      %v1144 = vrot.slane %v1143, 4
      %v1145 = vmax.f32 %v1143, %v1144
      %v1146 = vrot.slane %v1145, 2
      %v1147 = vmax.f32 %v1145, %v1146
      %v1148 = vrot.slane %v1147, 1
      %v1149 = vmax.f32 %v1147, %v1148
      %vm1150 = vcmp.lt.f32.partialorder %v1055, %v1149
      %vm1151 = vcmp.lt.f32.partialorder %v1056, %v1149
      %vm1152 = vcmp.lt.f32.partialorder %v1057, %v1149
      %vm1153 = vcmp.lt.f32.partialorder %v1058, %v1149
      %vm1154 = vcmp.lt.f32.partialorder %v1059, %v1149
      %vm1155 = vcmp.lt.f32.partialorder %v1060, %v1149
      %vm1156 = vcmp.lt.f32.partialorder %v1061, %v1149
      %vm1157 = vcmp.lt.f32.partialorder %v1062, %v1149
      %v1158 = vsel %vm1150, %v1055, -3.4e+38
      %v1159 = vsel %vm1151, %v1056, -3.4e+38
      %v1160 = vsel %vm1152, %v1057, -3.4e+38
      %v1161 = vsel %vm1153, %v1058, -3.4e+38
      %v1162 = vsel %vm1154, %v1059, -3.4e+38
      %v1163 = vsel %vm1155, %v1060, -3.4e+38
      %v1164 = vsel %vm1156, %v1061, -3.4e+38
      %v1165 = vsel %vm1157, %v1062, -3.4e+38
      %v1166 = vmax.f32 %v1158, %v1162
      %v1167 = vmax.f32 %v1159, %v1163
      %v1168 = vmax.f32 %v1160, %v1164
      %v1169 = vmax.f32 %v1161, %v1165
      %v1170 = vmax.f32 %v1166, %v1167
      %v1171 = vmax.f32 %v1168, %v1169
      %v1172 = vmax.f32 %v1170, %v1171
      %v1173 = vrot.slane %v1172, 4
      %v1174 = vmax.f32 %v1172, %v1173
      %v1175 = vrot.slane %v1174, 2
      %v1176 = vmax.f32 %v1174, %v1175
      %v1177 = vrot.slane %v1176, 1
      %v1178 = vmax.f32 %v1176, %v1177
      %vm1179 = vcmp.lt.f32.partialorder %v1055, %v1178
      %vm1180 = vcmp.lt.f32.partialorder %v1056, %v1178
      %vm1181 = vcmp.lt.f32.partialorder %v1057, %v1178
      %vm1182 = vcmp.lt.f32.partialorder %v1058, %v1178
      %vm1183 = vcmp.lt.f32.partialorder %v1059, %v1178
      %vm1184 = vcmp.lt.f32.partialorder %v1060, %v1178
      %vm1185 = vcmp.lt.f32.partialorder %v1061, %v1178
      %vm1186 = vcmp.lt.f32.partialorder %v1062, %v1178
      %v1187 = vsel %vm1179, %v1055, -3.4e+38
      %v1188 = vsel %vm1180, %v1056, -3.4e+38
      %v1189 = vsel %vm1181, %v1057, -3.4e+38
      %v1190 = vsel %vm1182, %v1058, -3.4e+38
      %v1191 = vsel %vm1183, %v1059, -3.4e+38
      %v1192 = vsel %vm1184, %v1060, -3.4e+38
      %v1193 = vsel %vm1185, %v1061, -3.4e+38
      %v1194 = vsel %vm1186, %v1062, -3.4e+38
      %v1195 = vmax.f32 %v1187, %v1191
      %v1196 = vmax.f32 %v1188, %v1192
      %v1197 = vmax.f32 %v1189, %v1193
      %v1198 = vmax.f32 %v1190, %v1194
      %v1199 = vmax.f32 %v1195, %v1196
      %v1200 = vmax.f32 %v1197, %v1198
      %v1201 = vmax.f32 %v1199, %v1200
      %v1202 = vrot.slane %v1201, 4
      %v1203 = vmax.f32 %v1201, %v1202
      %v1204 = vrot.slane %v1203, 2
      %v1205 = vmax.f32 %v1203, %v1204
      %v1206 = vrot.slane %v1205, 1
      %v1207 = vmax.f32 %v1205, %v1206
      %vm1208 = vcmp.lt.f32.partialorder %v1055, %v1207
      %vm1209 = vcmp.lt.f32.partialorder %v1056, %v1207
      %vm1210 = vcmp.lt.f32.partialorder %v1057, %v1207
      %vm1211 = vcmp.lt.f32.partialorder %v1058, %v1207
      %vm1212 = vcmp.lt.f32.partialorder %v1059, %v1207
      %vm1213 = vcmp.lt.f32.partialorder %v1060, %v1207
      %vm1214 = vcmp.lt.f32.partialorder %v1061, %v1207
      %vm1215 = vcmp.lt.f32.partialorder %v1062, %v1207
      %v1216 = vsel %vm1208, %v1055, -3.4e+38
      %v1217 = vsel %vm1209, %v1056, -3.4e+38
      %v1218 = vsel %vm1210, %v1057, -3.4e+38
      %v1219 = vsel %vm1211, %v1058, -3.4e+38
      %v1220 = vsel %vm1212, %v1059, -3.4e+38
      %v1221 = vsel %vm1213, %v1060, -3.4e+38
      %v1222 = vsel %vm1214, %v1061, -3.4e+38
      %v1223 = vsel %vm1215, %v1062, -3.4e+38
      %v1224 = vmax.f32 %v1216, %v1220
      %v1225 = vmax.f32 %v1217, %v1221
      %v1226 = vmax.f32 %v1218, %v1222
      %v1227 = vmax.f32 %v1219, %v1223
      %v1228 = vmax.f32 %v1224, %v1225
      %v1229 = vmax.f32 %v1226, %v1227
      %v1230 = vmax.f32 %v1228, %v1229
      %v1231 = vrot.slane %v1230, 4
      %v1232 = vmax.f32 %v1230, %v1231
      %v1233 = vrot.slane %v1232, 2
      %v1234 = vmax.f32 %v1232, %v1233
      %v1235 = vrot.slane %v1234, 1
      %v1236 = vmax.f32 %v1234, %v1235
      %vm1237 = vcmp.lt.f32.partialorder %v1055, %v1236
      %vm1238 = vcmp.lt.f32.partialorder %v1056, %v1236
      %vm1239 = vcmp.lt.f32.partialorder %v1057, %v1236
      %vm1240 = vcmp.lt.f32.partialorder %v1058, %v1236
      %vm1241 = vcmp.lt.f32.partialorder %v1059, %v1236
      %vm1242 = vcmp.lt.f32.partialorder %v1060, %v1236
      %vm1243 = vcmp.lt.f32.partialorder %v1061, %v1236
      %vm1244 = vcmp.lt.f32.partialorder %v1062, %v1236
      %v1245 = vsel %vm1237, %v1055, -3.4e+38
      %v1246 = vsel %vm1238, %v1056, -3.4e+38
      %v1247 = vsel %vm1239, %v1057, -3.4e+38
      %v1248 = vsel %vm1240, %v1058, -3.4e+38
      %v1249 = vsel %vm1241, %v1059, -3.4e+38
      %v1250 = vsel %vm1242, %v1060, -3.4e+38
      %v1251 = vsel %vm1243, %v1061, -3.4e+38
      %v1252 = vsel %vm1244, %v1062, -3.4e+38
      %v1253 = vmax.f32 %v1245, %v1249
      %v1254 = vmax.f32 %v1246, %v1250
      %v1255 = vmax.f32 %v1247, %v1251
      %v1256 = vmax.f32 %v1248, %v1252
      %v1257 = vmax.f32 %v1253, %v1254
      %v1258 = vmax.f32 %v1255, %v1256
      %v1259 = vmax.f32 %v1257, %v1258
      %v1260 = vrot.slane %v1259, 4
      %v1261 = vmax.f32 %v1259, %v1260
      %v1262 = vrot.slane %v1261, 2
      %v1263 = vmax.f32 %v1261, %v1262
      %v1264 = vrot.slane %v1263, 1
      %v1265 = vmax.f32 %v1263, %v1264
      %vm1266 = vcmp.lt.f32.partialorder %v1055, %v1265
      %vm1267 = vcmp.lt.f32.partialorder %v1056, %v1265
      %vm1268 = vcmp.lt.f32.partialorder %v1057, %v1265
      %vm1269 = vcmp.lt.f32.partialorder %v1058, %v1265
      %vm1270 = vcmp.lt.f32.partialorder %v1059, %v1265
      %vm1271 = vcmp.lt.f32.partialorder %v1060, %v1265
      %vm1272 = vcmp.lt.f32.partialorder %v1061, %v1265
      %vm1273 = vcmp.lt.f32.partialorder %v1062, %v1265
      %v1274 = vsel %vm1266, %v1055, -3.4e+38
      %v1275 = vsel %vm1267, %v1056, -3.4e+38
      %v1276 = vsel %vm1268, %v1057, -3.4e+38
      %v1277 = vsel %vm1269, %v1058, -3.4e+38
      %v1278 = vsel %vm1270, %v1059, -3.4e+38
      %v1279 = vsel %vm1271, %v1060, -3.4e+38
      %v1280 = vsel %vm1272, %v1061, -3.4e+38
      %v1281 = vsel %vm1273, %v1062, -3.4e+38
      %v1282 = vmax.f32 %v1274, %v1278
      %v1283 = vmax.f32 %v1275, %v1279
      %v1284 = vmax.f32 %v1276, %v1280
      %v1285 = vmax.f32 %v1277, %v1281
      %v1286 = vmax.f32 %v1282, %v1283
      %v1287 = vmax.f32 %v1284, %v1285
      %v1288 = vmax.f32 %v1286, %v1287
      %v1289 = vrot.slane %v1288, 4
      %v1290 = vmax.f32 %v1288, %v1289
      %v1291 = vrot.slane %v1290, 2
      %v1292 = vmax.f32 %v1290, %v1291
      %v1293 = vrot.slane %v1292, 1
      %v1294 = vmax.f32 %v1292, %v1293
      %vm1295 = vcmp.lt.f32.partialorder %v1055, %v1294
      %vm1296 = vcmp.lt.f32.partialorder %v1056, %v1294
      %vm1297 = vcmp.lt.f32.partialorder %v1057, %v1294
      %vm1298 = vcmp.lt.f32.partialorder %v1058, %v1294
      %vm1299 = vcmp.lt.f32.partialorder %v1059, %v1294
      %vm1300 = vcmp.lt.f32.partialorder %v1060, %v1294
      %vm1301 = vcmp.lt.f32.partialorder %v1061, %v1294
      %vm1302 = vcmp.lt.f32.partialorder %v1062, %v1294
      %v1303 = vsel %vm1295, %v1055, -3.4e+38
      %v1304 = vsel %vm1296, %v1056, -3.4e+38
      %v1305 = vsel %vm1297, %v1057, -3.4e+38
      %v1306 = vsel %vm1298, %v1058, -3.4e+38
      %v1307 = vsel %vm1299, %v1059, -3.4e+38
      %v1308 = vsel %vm1300, %v1060, -3.4e+38
      %v1309 = vsel %vm1301, %v1061, -3.4e+38
      %v1310 = vsel %vm1302, %v1062, -3.4e+38
      %v1311 = vmax.f32 %v1303, %v1307
      %v1312 = vmax.f32 %v1304, %v1308
      %v1313 = vmax.f32 %v1305, %v1309
      %v1314 = vmax.f32 %v1306, %v1310
      %v1315 = vmax.f32 %v1311, %v1312
      %v1316 = vmax.f32 %v1313, %v1314
      %v1317 = vmax.f32 %v1315, %v1316
      %v1318 = vrot.slane %v1317, 4
      %v1319 = vmax.f32 %v1317, %v1318
      %v1320 = vrot.slane %v1319, 2
      %v1321 = vmax.f32 %v1319, %v1320
      %v1322 = vrot.slane %v1321, 1
      %v1323 = vmax.f32 %v1321, %v1322
      %vm1324 = vcmp.lt.f32.partialorder %v1055, %v1323
      %vm1325 = vcmp.lt.f32.partialorder %v1056, %v1323
      %vm1326 = vcmp.lt.f32.partialorder %v1057, %v1323
      %vm1327 = vcmp.lt.f32.partialorder %v1058, %v1323
      %vm1328 = vcmp.lt.f32.partialorder %v1059, %v1323
      %vm1329 = vcmp.lt.f32.partialorder %v1060, %v1323
      %vm1330 = vcmp.lt.f32.partialorder %v1061, %v1323
      %vm1331 = vcmp.lt.f32.partialorder %v1062, %v1323
      %v1332 = vsel %vm1324, %v1055, -3.4e+38
      %v1333 = vsel %vm1325, %v1056, -3.4e+38
      %v1334 = vsel %vm1326, %v1057, -3.4e+38
      %v1335 = vsel %vm1327, %v1058, -3.4e+38
      %v1336 = vsel %vm1328, %v1059, -3.4e+38
      %v1337 = vsel %vm1329, %v1060, -3.4e+38
      %v1338 = vsel %vm1330, %v1061, -3.4e+38
      %v1339 = vsel %vm1331, %v1062, -3.4e+38
      %v1340 = vmax.f32 %v1332, %v1336
      %v1341 = vmax.f32 %v1333, %v1337
      %v1342 = vmax.f32 %v1334, %v1338
      %v1343 = vmax.f32 %v1335, %v1339
      %v1344 = vmax.f32 %v1340, %v1341
      %v1345 = vmax.f32 %v1342, %v1343
      %v1346 = vmax.f32 %v1344, %v1345
      %v1347 = vrot.slane %v1346, 4
      %v1348 = vmax.f32 %v1346, %v1347
      %v1349 = vrot.slane %v1348, 2
      %v1350 = vmax.f32 %v1348, %v1349
      %v1351 = vrot.slane %v1350, 1
      %v1352 = vmax.f32 %v1350, %v1351
      %vm1353 = vcmp.lt.f32.partialorder %v1055, %v1352
      %vm1354 = vcmp.lt.f32.partialorder %v1056, %v1352
      %vm1355 = vcmp.lt.f32.partialorder %v1057, %v1352
      %vm1356 = vcmp.lt.f32.partialorder %v1058, %v1352
      %vm1357 = vcmp.lt.f32.partialorder %v1059, %v1352
      %vm1358 = vcmp.lt.f32.partialorder %v1060, %v1352
      %vm1359 = vcmp.lt.f32.partialorder %v1061, %v1352
      %vm1360 = vcmp.lt.f32.partialorder %v1062, %v1352
      %v1361 = vsel %vm1353, %v1055, -3.4e+38
      %v1362 = vsel %vm1354, %v1056, -3.4e+38
      %v1363 = vsel %vm1355, %v1057, -3.4e+38
      %v1364 = vsel %vm1356, %v1058, -3.4e+38
      %v1365 = vsel %vm1357, %v1059, -3.4e+38
      %v1366 = vsel %vm1358, %v1060, -3.4e+38
      %v1367 = vsel %vm1359, %v1061, -3.4e+38
      %v1368 = vsel %vm1360, %v1062, -3.4e+38
      %v1369 = vmax.f32 %v1361, %v1365
      %v1370 = vmax.f32 %v1362, %v1366
      %v1371 = vmax.f32 %v1363, %v1367
      %v1372 = vmax.f32 %v1364, %v1368
      %v1373 = vmax.f32 %v1369, %v1370
      %v1374 = vmax.f32 %v1371, %v1372
      %v1375 = vmax.f32 %v1373, %v1374
      %v1376 = vrot.slane %v1375, 4
      %v1377 = vmax.f32 %v1375, %v1376
      %v1378 = vrot.slane %v1377, 2
      %v1379 = vmax.f32 %v1377, %v1378
      %v1380 = vrot.slane %v1379, 1
      %v1381 = vmax.f32 %v1379, %v1380
      %vm1382 = vcmp.lt.f32.partialorder %v1055, %v1381
      %vm1383 = vcmp.lt.f32.partialorder %v1056, %v1381
      %vm1384 = vcmp.lt.f32.partialorder %v1057, %v1381
      %vm1385 = vcmp.lt.f32.partialorder %v1058, %v1381
      %vm1386 = vcmp.lt.f32.partialorder %v1059, %v1381
      %vm1387 = vcmp.lt.f32.partialorder %v1060, %v1381
      %vm1388 = vcmp.lt.f32.partialorder %v1061, %v1381
      %vm1389 = vcmp.lt.f32.partialorder %v1062, %v1381
      %v1390 = vsel %vm1382, %v1055, -3.4e+38
      %v1391 = vsel %vm1383, %v1056, -3.4e+38
      %v1392 = vsel %vm1384, %v1057, -3.4e+38
      %v1393 = vsel %vm1385, %v1058, -3.4e+38
      %v1394 = vsel %vm1386, %v1059, -3.4e+38
      %v1395 = vsel %vm1387, %v1060, -3.4e+38
      %v1396 = vsel %vm1388, %v1061, -3.4e+38
      %v1397 = vsel %vm1389, %v1062, -3.4e+38
      %v1398 = vmax.f32 %v1390, %v1394
      %v1399 = vmax.f32 %v1391, %v1395
      %v1400 = vmax.f32 %v1392, %v1396
      %v1401 = vmax.f32 %v1393, %v1397
      %v1402 = vmax.f32 %v1398, %v1399
      %v1403 = vmax.f32 %v1400, %v1401
      %v1404 = vmax.f32 %v1402, %v1403
      %v1405 = vrot.slane %v1404, 4
      %v1406 = vmax.f32 %v1404, %v1405
      %v1407 = vrot.slane %v1406, 2
      %v1408 = vmax.f32 %v1406, %v1407
      %v1409 = vrot.slane %v1408, 1
      %v1410 = vmax.f32 %v1408, %v1409
      %vm1411 = vcmp.lt.f32.partialorder %v1055, %v1410
      %vm1412 = vcmp.lt.f32.partialorder %v1056, %v1410
      %vm1413 = vcmp.lt.f32.partialorder %v1057, %v1410
      %vm1414 = vcmp.lt.f32.partialorder %v1058, %v1410
      %vm1415 = vcmp.lt.f32.partialorder %v1059, %v1410
      %vm1416 = vcmp.lt.f32.partialorder %v1060, %v1410
      %vm1417 = vcmp.lt.f32.partialorder %v1061, %v1410
      %vm1418 = vcmp.lt.f32.partialorder %v1062, %v1410
      %v1419 = vsel %vm1411, %v1055, -3.4e+38
      %v1420 = vsel %vm1412, %v1056, -3.4e+38
      %v1421 = vsel %vm1413, %v1057, -3.4e+38
      %v1422 = vsel %vm1414, %v1058, -3.4e+38
      %v1423 = vsel %vm1415, %v1059, -3.4e+38
      %v1424 = vsel %vm1416, %v1060, -3.4e+38
      %v1425 = vsel %vm1417, %v1061, -3.4e+38
      %v1426 = vsel %vm1418, %v1062, -3.4e+38
      %v1427 = vmax.f32 %v1419, %v1423
      %v1428 = vmax.f32 %v1420, %v1424
      %v1429 = vmax.f32 %v1421, %v1425
      %v1430 = vmax.f32 %v1422, %v1426
      %v1431 = vmax.f32 %v1427, %v1428
      %v1432 = vmax.f32 %v1429, %v1430
      %v1433 = vmax.f32 %v1431, %v1432
      %v1434 = vrot.slane %v1433, 4
      %v1435 = vmax.f32 %v1433, %v1434
      %v1436 = vrot.slane %v1435, 2
      %v1437 = vmax.f32 %v1435, %v1436
      %v1438 = vrot.slane %v1437, 1
      %v1439 = vmax.f32 %v1437, %v1438
      %vm1440 = vcmp.lt.f32.partialorder %v1055, %v1439
      %vm1441 = vcmp.lt.f32.partialorder %v1056, %v1439
      %vm1442 = vcmp.lt.f32.partialorder %v1057, %v1439
      %vm1443 = vcmp.lt.f32.partialorder %v1058, %v1439
      %vm1444 = vcmp.lt.f32.partialorder %v1059, %v1439
      %vm1445 = vcmp.lt.f32.partialorder %v1060, %v1439
      %vm1446 = vcmp.lt.f32.partialorder %v1061, %v1439
      %vm1447 = vcmp.lt.f32.partialorder %v1062, %v1439
      %v1448 = vsel %vm1440, %v1055, -3.4e+38
      %v1449 = vsel %vm1441, %v1056, -3.4e+38
      %v1450 = vsel %vm1442, %v1057, -3.4e+38
      %v1451 = vsel %vm1443, %v1058, -3.4e+38
      %v1452 = vsel %vm1444, %v1059, -3.4e+38
      %v1453 = vsel %vm1445, %v1060, -3.4e+38
      %v1454 = vsel %vm1446, %v1061, -3.4e+38
      %v1455 = vsel %vm1447, %v1062, -3.4e+38
      %v1456 = vmax.f32 %v1448, %v1452
      %v1457 = vmax.f32 %v1449, %v1453
      %v1458 = vmax.f32 %v1450, %v1454
      %v1459 = vmax.f32 %v1451, %v1455
      %v1460 = vmax.f32 %v1456, %v1457
      %v1461 = vmax.f32 %v1458, %v1459
      %v1462 = vmax.f32 %v1460, %v1461
      %v1463 = vrot.slane %v1462, 4
      %v1464 = vmax.f32 %v1462, %v1463
      %v1465 = vrot.slane %v1464, 2
      %v1466 = vmax.f32 %v1464, %v1465
      %v1467 = vrot.slane %v1466, 1
      %v1468 = vmax.f32 %v1466, %v1467
      %vm1469 = vcmp.lt.f32.partialorder %v1055, %v1468
      %vm1470 = vcmp.lt.f32.partialorder %v1056, %v1468
      %vm1471 = vcmp.lt.f32.partialorder %v1057, %v1468
      %vm1472 = vcmp.lt.f32.partialorder %v1058, %v1468
      %vm1473 = vcmp.lt.f32.partialorder %v1059, %v1468
      %vm1474 = vcmp.lt.f32.partialorder %v1060, %v1468
      %vm1475 = vcmp.lt.f32.partialorder %v1061, %v1468
      %vm1476 = vcmp.lt.f32.partialorder %v1062, %v1468
      %v1477 = vsel %vm1469, %v1055, -3.4e+38
      %v1478 = vsel %vm1470, %v1056, -3.4e+38
      %v1479 = vsel %vm1471, %v1057, -3.4e+38
      %v1480 = vsel %vm1472, %v1058, -3.4e+38
      %v1481 = vsel %vm1473, %v1059, -3.4e+38
      %v1482 = vsel %vm1474, %v1060, -3.4e+38
      %v1483 = vsel %vm1475, %v1061, -3.4e+38
      %v1484 = vsel %vm1476, %v1062, -3.4e+38
      %v1485 = vmax.f32 %v1477, %v1481
      %v1486 = vmax.f32 %v1478, %v1482
      %v1487 = vmax.f32 %v1479, %v1483
      %v1488 = vmax.f32 %v1480, %v1484
      %v1489 = vmax.f32 %v1485, %v1486
      %v1490 = vmax.f32 %v1487, %v1488
      %v1491 = vmax.f32 %v1489, %v1490
      %v1492 = vrot.slane %v1491, 4
      %v1493 = vmax.f32 %v1491, %v1492
      %v1494 = vrot.slane %v1493, 2
      %v1495 = vmax.f32 %v1493, %v1494
      %v1496 = vrot.slane %v1495, 1
      %v1497 = vmax.f32 %v1495, %v1496
      %vm1498 = vcmp.lt.f32.partialorder %v1055, %v1497
      %vm1499 = vcmp.lt.f32.partialorder %v1056, %v1497
      %vm1500 = vcmp.lt.f32.partialorder %v1057, %v1497
      %vm1501 = vcmp.lt.f32.partialorder %v1058, %v1497
      %vm1502 = vcmp.lt.f32.partialorder %v1059, %v1497
      %vm1503 = vcmp.lt.f32.partialorder %v1060, %v1497
      %vm1504 = vcmp.lt.f32.partialorder %v1061, %v1497
      %vm1505 = vcmp.lt.f32.partialorder %v1062, %v1497
      %v1506 = vsel %vm1498, %v1055, -3.4e+38
      %v1507 = vsel %vm1499, %v1056, -3.4e+38
      %v1508 = vsel %vm1500, %v1057, -3.4e+38
      %v1509 = vsel %vm1501, %v1058, -3.4e+38
      %v1510 = vsel %vm1502, %v1059, -3.4e+38
      %v1511 = vsel %vm1503, %v1060, -3.4e+38
      %v1512 = vsel %vm1504, %v1061, -3.4e+38
      %v1513 = vsel %vm1505, %v1062, -3.4e+38
      %v1514 = vmax.f32 %v1506, %v1510
      %v1515 = vmax.f32 %v1507, %v1511
      %v1516 = vmax.f32 %v1508, %v1512
      %v1517 = vmax.f32 %v1509, %v1513
      %v1518 = vmax.f32 %v1514, %v1515
      %v1519 = vmax.f32 %v1516, %v1517
      %v1520 = vmax.f32 %v1518, %v1519
      %v1521 = vrot.slane %v1520, 4
      %v1522 = vmax.f32 %v1520, %v1521
      %v1523 = vrot.slane %v1522, 2
      %v1524 = vmax.f32 %v1522, %v1523
      %v1525 = vrot.slane %v1524, 1
      %v1526 = vmax.f32 %v1524, %v1525
      %vm1527 = vcmp.lt.f32.partialorder %v1055, %v1526
      %vm1528 = vcmp.lt.f32.partialorder %v1056, %v1526
      %vm1529 = vcmp.lt.f32.partialorder %v1057, %v1526
      %vm1530 = vcmp.lt.f32.partialorder %v1058, %v1526
      %vm1531 = vcmp.lt.f32.partialorder %v1059, %v1526
      %vm1532 = vcmp.lt.f32.partialorder %v1060, %v1526
      %vm1533 = vcmp.lt.f32.partialorder %v1061, %v1526
      %vm1534 = vcmp.lt.f32.partialorder %v1062, %v1526
      %v1535 = vsel %vm1527, %v1055, -3.4e+38
      %v1536 = vsel %vm1528, %v1056, -3.4e+38
      %v1537 = vsel %vm1529, %v1057, -3.4e+38
      %v1538 = vsel %vm1530, %v1058, -3.4e+38
      %v1539 = vsel %vm1531, %v1059, -3.4e+38
      %v1540 = vsel %vm1532, %v1060, -3.4e+38
      %v1541 = vsel %vm1533, %v1061, -3.4e+38
      %v1542 = vsel %vm1534, %v1062, -3.4e+38
      %v1543 = vmax.f32 %v1535, %v1539
      %v1544 = vmax.f32 %v1536, %v1540
      %v1545 = vmax.f32 %v1537, %v1541
      %v1546 = vmax.f32 %v1538, %v1542
      %v1547 = vmax.f32 %v1543, %v1544
      %v1548 = vmax.f32 %v1545, %v1546
      %v1549 = vmax.f32 %v1547, %v1548
      %v1550 = vrot.slane %v1549, 4
      %v1551 = vmax.f32 %v1549, %v1550
      %v1552 = vrot.slane %v1551, 2
      %v1553 = vmax.f32 %v1551, %v1552
      %v1554 = vrot.slane %v1553, 1
      %v1555 = vmax.f32 %v1553, %v1554
      %vm1556 = vcmp.lt.f32.partialorder %v1055, %v1555
      %vm1557 = vcmp.lt.f32.partialorder %v1056, %v1555
      %vm1558 = vcmp.lt.f32.partialorder %v1057, %v1555
      %vm1559 = vcmp.lt.f32.partialorder %v1058, %v1555
      %vm1560 = vcmp.lt.f32.partialorder %v1059, %v1555
      %vm1561 = vcmp.lt.f32.partialorder %v1060, %v1555
      %vm1562 = vcmp.lt.f32.partialorder %v1061, %v1555
      %vm1563 = vcmp.lt.f32.partialorder %v1062, %v1555
      %v1564 = vsel %vm1556, %v1055, -3.4e+38
      %v1565 = vsel %vm1557, %v1056, -3.4e+38
      %v1566 = vsel %vm1558, %v1057, -3.4e+38
      %v1567 = vsel %vm1559, %v1058, -3.4e+38
      %v1568 = vsel %vm1560, %v1059, -3.4e+38
      %v1569 = vsel %vm1561, %v1060, -3.4e+38
      %v1570 = vsel %vm1562, %v1061, -3.4e+38
      %v1571 = vsel %vm1563, %v1062, -3.4e+38
      %v1572 = vmax.f32 %v1564, %v1568
      %v1573 = vmax.f32 %v1565, %v1569
      %v1574 = vmax.f32 %v1566, %v1570
      %v1575 = vmax.f32 %v1567, %v1571
      %v1576 = vmax.f32 %v1572, %v1573
      %v1577 = vmax.f32 %v1574, %v1575
      %v1578 = vmax.f32 %v1576, %v1577
      %v1579 = vrot.slane %v1578, 4
      %v1580 = vmax.f32 %v1578, %v1579
      %v1581 = vrot.slane %v1580, 2
      %v1582 = vmax.f32 %v1580, %v1581
      %v1583 = vrot.slane %v1582, 1
      %v1584 = vmax.f32 %v1582, %v1583
      %vm1585 = vcmp.lt.f32.partialorder %v1055, %v1584
      %vm1586 = vcmp.lt.f32.partialorder %v1056, %v1584
      %vm1587 = vcmp.lt.f32.partialorder %v1057, %v1584
      %vm1588 = vcmp.lt.f32.partialorder %v1058, %v1584
      %vm1589 = vcmp.lt.f32.partialorder %v1059, %v1584
      %vm1590 = vcmp.lt.f32.partialorder %v1060, %v1584
      %vm1591 = vcmp.lt.f32.partialorder %v1061, %v1584
      %vm1592 = vcmp.lt.f32.partialorder %v1062, %v1584
      %v1593 = vsel %vm1585, %v1055, -3.4e+38
      %v1594 = vsel %vm1586, %v1056, -3.4e+38
      %v1595 = vsel %vm1587, %v1057, -3.4e+38
      %v1596 = vsel %vm1588, %v1058, -3.4e+38
      %v1597 = vsel %vm1589, %v1059, -3.4e+38
      %v1598 = vsel %vm1590, %v1060, -3.4e+38
      %v1599 = vsel %vm1591, %v1061, -3.4e+38
      %v1600 = vsel %vm1592, %v1062, -3.4e+38
      %v1601 = vmax.f32 %v1593, %v1597
      %v1602 = vmax.f32 %v1594, %v1598
      %v1603 = vmax.f32 %v1595, %v1599
      %v1604 = vmax.f32 %v1596, %v1600
      %v1605 = vmax.f32 %v1601, %v1602
      %v1606 = vmax.f32 %v1603, %v1604
      %v1607 = vmax.f32 %v1605, %v1606
      %v1608 = vrot.slane %v1607, 4
      %v1609 = vmax.f32 %v1607, %v1608
      %v1610 = vrot.slane %v1609, 2
      %v1611 = vmax.f32 %v1609, %v1610
      %v1612 = vrot.slane %v1611, 1
      %v1613 = vmax.f32 %v1611, %v1612
      %vm1614 = vcmp.lt.f32.partialorder %v1055, %v1613
      %vm1615 = vcmp.lt.f32.partialorder %v1056, %v1613
      %vm1616 = vcmp.lt.f32.partialorder %v1057, %v1613
      %vm1617 = vcmp.lt.f32.partialorder %v1058, %v1613
      %vm1618 = vcmp.lt.f32.partialorder %v1059, %v1613
      %vm1619 = vcmp.lt.f32.partialorder %v1060, %v1613
      %vm1620 = vcmp.lt.f32.partialorder %v1061, %v1613
      %vm1621 = vcmp.lt.f32.partialorder %v1062, %v1613
      %v1622 = vsel %vm1614, %v1055, -3.4e+38
      %v1623 = vsel %vm1615, %v1056, -3.4e+38
      %v1624 = vsel %vm1616, %v1057, -3.4e+38
      %v1625 = vsel %vm1617, %v1058, -3.4e+38
      %v1626 = vsel %vm1618, %v1059, -3.4e+38
      %v1627 = vsel %vm1619, %v1060, -3.4e+38
      %v1628 = vsel %vm1620, %v1061, -3.4e+38
      %v1629 = vsel %vm1621, %v1062, -3.4e+38
      %v1630 = vmax.f32 %v1622, %v1626
      %v1631 = vmax.f32 %v1623, %v1627
      %v1632 = vmax.f32 %v1624, %v1628
      %v1633 = vmax.f32 %v1625, %v1629
      %v1634 = vmax.f32 %v1630, %v1631
      %v1635 = vmax.f32 %v1632, %v1633
      %v1636 = vmax.f32 %v1634, %v1635
      %v1637 = vrot.slane %v1636, 4
      %v1638 = vmax.f32 %v1636, %v1637
      %v1639 = vrot.slane %v1638, 2
      %v1640 = vmax.f32 %v1638, %v1639
      %v1641 = vrot.slane %v1640, 1
      %v1642 = vmax.f32 %v1640, %v1641
      %vm1643 = vcmp.lt.f32.partialorder %v1055, %v1642
      %vm1644 = vcmp.lt.f32.partialorder %v1056, %v1642
      %vm1645 = vcmp.lt.f32.partialorder %v1057, %v1642
      %vm1646 = vcmp.lt.f32.partialorder %v1058, %v1642
      %vm1647 = vcmp.lt.f32.partialorder %v1059, %v1642
      %vm1648 = vcmp.lt.f32.partialorder %v1060, %v1642
      %vm1649 = vcmp.lt.f32.partialorder %v1061, %v1642
      %vm1650 = vcmp.lt.f32.partialorder %v1062, %v1642
      %v1651 = vsel %vm1643, %v1055, -3.4e+38
      %v1652 = vsel %vm1644, %v1056, -3.4e+38
      %v1653 = vsel %vm1645, %v1057, -3.4e+38
      %v1654 = vsel %vm1646, %v1058, -3.4e+38
      %v1655 = vsel %vm1647, %v1059, -3.4e+38
      %v1656 = vsel %vm1648, %v1060, -3.4e+38
      %v1657 = vsel %vm1649, %v1061, -3.4e+38
      %v1658 = vsel %vm1650, %v1062, -3.4e+38
      %v1659 = vmax.f32 %v1651, %v1655
      %v1660 = vmax.f32 %v1652, %v1656
      %v1661 = vmax.f32 %v1653, %v1657
      %v1662 = vmax.f32 %v1654, %v1658
      %v1663 = vmax.f32 %v1659, %v1660
      %v1664 = vmax.f32 %v1661, %v1662
      %v1665 = vmax.f32 %v1663, %v1664
      %v1666 = vrot.slane %v1665, 4
      %v1667 = vmax.f32 %v1665, %v1666
      %v1668 = vrot.slane %v1667, 2
      %v1669 = vmax.f32 %v1667, %v1668
      %v1670 = vrot.slane %v1669, 1
      %v1671 = vmax.f32 %v1669, %v1670
      %vm1672 = vcmp.lt.f32.partialorder %v1055, %v1671
      %vm1673 = vcmp.lt.f32.partialorder %v1056, %v1671
      %vm1674 = vcmp.lt.f32.partialorder %v1057, %v1671
      %vm1675 = vcmp.lt.f32.partialorder %v1058, %v1671
      %vm1676 = vcmp.lt.f32.partialorder %v1059, %v1671
      %vm1677 = vcmp.lt.f32.partialorder %v1060, %v1671
      %vm1678 = vcmp.lt.f32.partialorder %v1061, %v1671
      %vm1679 = vcmp.lt.f32.partialorder %v1062, %v1671
      %v1680 = vsel %vm1672, %v1055, -3.4e+38
      %v1681 = vsel %vm1673, %v1056, -3.4e+38
      %v1682 = vsel %vm1674, %v1057, -3.4e+38
      %v1683 = vsel %vm1675, %v1058, -3.4e+38
      %v1684 = vsel %vm1676, %v1059, -3.4e+38
      %v1685 = vsel %vm1677, %v1060, -3.4e+38
      %v1686 = vsel %vm1678, %v1061, -3.4e+38
      %v1687 = vsel %vm1679, %v1062, -3.4e+38
      %v1688 = vmax.f32 %v1680, %v1684
      %v1689 = vmax.f32 %v1681, %v1685
      %v1690 = vmax.f32 %v1682, %v1686
      %v1691 = vmax.f32 %v1683, %v1687
      %v1692 = vmax.f32 %v1688, %v1689
      %v1693 = vmax.f32 %v1690, %v1691
      %v1694 = vmax.f32 %v1692, %v1693
      %v1695 = vrot.slane %v1694, 4
      %v1696 = vmax.f32 %v1694, %v1695
      %v1697 = vrot.slane %v1696, 2
      %v1698 = vmax.f32 %v1696, %v1697
      %v1699 = vrot.slane %v1698, 1
      %v1700 = vmax.f32 %v1698, %v1699
      %vm1701 = vcmp.lt.f32.partialorder %v1055, %v1700
      %vm1702 = vcmp.lt.f32.partialorder %v1056, %v1700
      %vm1703 = vcmp.lt.f32.partialorder %v1057, %v1700
      %vm1704 = vcmp.lt.f32.partialorder %v1058, %v1700
      %vm1705 = vcmp.lt.f32.partialorder %v1059, %v1700
      %vm1706 = vcmp.lt.f32.partialorder %v1060, %v1700
      %vm1707 = vcmp.lt.f32.partialorder %v1061, %v1700
      %vm1708 = vcmp.lt.f32.partialorder %v1062, %v1700
      %v1709 = vsel %vm1701, %v1055, -3.4e+38
      %v1710 = vsel %vm1702, %v1056, -3.4e+38
      %v1711 = vsel %vm1703, %v1057, -3.4e+38
      %v1712 = vsel %vm1704, %v1058, -3.4e+38
      %v1713 = vsel %vm1705, %v1059, -3.4e+38
      %v1714 = vsel %vm1706, %v1060, -3.4e+38
      %v1715 = vsel %vm1707, %v1061, -3.4e+38
      %v1716 = vsel %vm1708, %v1062, -3.4e+38
      %v1717 = vmax.f32 %v1709, %v1713
      %v1718 = vmax.f32 %v1710, %v1714
      %v1719 = vmax.f32 %v1711, %v1715
      %v1720 = vmax.f32 %v1712, %v1716
      %v1721 = vmax.f32 %v1717, %v1718
      %v1722 = vmax.f32 %v1719, %v1720
      %v1723 = vmax.f32 %v1721, %v1722
      %v1724 = vrot.slane %v1723, 4
      %v1725 = vmax.f32 %v1723, %v1724
      %v1726 = vrot.slane %v1725, 2
      %v1727 = vmax.f32 %v1725, %v1726
      %v1728 = vrot.slane %v1727, 1
      %v1729 = vmax.f32 %v1727, %v1728
      %vm1730 = vcmp.lt.f32.partialorder %v1055, %v1729
      %vm1731 = vcmp.lt.f32.partialorder %v1056, %v1729
      %vm1732 = vcmp.lt.f32.partialorder %v1057, %v1729
      %vm1733 = vcmp.lt.f32.partialorder %v1058, %v1729
      %vm1734 = vcmp.lt.f32.partialorder %v1059, %v1729
      %vm1735 = vcmp.lt.f32.partialorder %v1060, %v1729
      %vm1736 = vcmp.lt.f32.partialorder %v1061, %v1729
      %vm1737 = vcmp.lt.f32.partialorder %v1062, %v1729
      %v1738 = vsel %vm1730, %v1055, -3.4e+38
      %v1739 = vsel %vm1731, %v1056, -3.4e+38
      %v1740 = vsel %vm1732, %v1057, -3.4e+38
      %v1741 = vsel %vm1733, %v1058, -3.4e+38
      %v1742 = vsel %vm1734, %v1059, -3.4e+38
      %v1743 = vsel %vm1735, %v1060, -3.4e+38
      %v1744 = vsel %vm1736, %v1061, -3.4e+38
      %v1745 = vsel %vm1737, %v1062, -3.4e+38
      %v1746 = vmax.f32 %v1738, %v1742
      %v1747 = vmax.f32 %v1739, %v1743
      %v1748 = vmax.f32 %v1740, %v1744
      %v1749 = vmax.f32 %v1741, %v1745
      %v1750 = vmax.f32 %v1746, %v1747
      %v1751 = vmax.f32 %v1748, %v1749
      %v1752 = vmax.f32 %v1750, %v1751
      %v1753 = vrot.slane %v1752, 4
      %v1754 = vmax.f32 %v1752, %v1753
      %v1755 = vrot.slane %v1754, 2
      %v1756 = vmax.f32 %v1754, %v1755
      %v1757 = vrot.slane %v1756, 1
      %v1758 = vmax.f32 %v1756, %v1757
      %vm1759 = vcmp.lt.f32.partialorder %v1055, %v1758
      %vm1760 = vcmp.lt.f32.partialorder %v1056, %v1758
      %vm1761 = vcmp.lt.f32.partialorder %v1057, %v1758
      %vm1762 = vcmp.lt.f32.partialorder %v1058, %v1758
      %vm1763 = vcmp.lt.f32.partialorder %v1059, %v1758
      %vm1764 = vcmp.lt.f32.partialorder %v1060, %v1758
      %vm1765 = vcmp.lt.f32.partialorder %v1061, %v1758
      %vm1766 = vcmp.lt.f32.partialorder %v1062, %v1758
      %v1767 = vsel %vm1759, %v1055, -3.4e+38
      %v1768 = vsel %vm1760, %v1056, -3.4e+38
      %v1769 = vsel %vm1761, %v1057, -3.4e+38
      %v1770 = vsel %vm1762, %v1058, -3.4e+38
      %v1771 = vsel %vm1763, %v1059, -3.4e+38
      %v1772 = vsel %vm1764, %v1060, -3.4e+38
      %v1773 = vsel %vm1765, %v1061, -3.4e+38
      %v1774 = vsel %vm1766, %v1062, -3.4e+38
      %v1775 = vmax.f32 %v1767, %v1771
      %v1776 = vmax.f32 %v1768, %v1772
      %v1777 = vmax.f32 %v1769, %v1773
      %v1778 = vmax.f32 %v1770, %v1774
      %v1779 = vmax.f32 %v1775, %v1776
      %v1780 = vmax.f32 %v1777, %v1778
      %v1781 = vmax.f32 %v1779, %v1780
      %v1782 = vrot.slane %v1781, 4
      %v1783 = vmax.f32 %v1781, %v1782
      %v1784 = vrot.slane %v1783, 2
      %v1785 = vmax.f32 %v1783, %v1784
      %v1786 = vrot.slane %v1785, 1
      %v1787 = vmax.f32 %v1785, %v1786
      %vm1788 = vcmp.lt.f32.partialorder %v1055, %v1787
      %vm1789 = vcmp.lt.f32.partialorder %v1056, %v1787
      %vm1790 = vcmp.lt.f32.partialorder %v1057, %v1787
      %vm1791 = vcmp.lt.f32.partialorder %v1058, %v1787
      %vm1792 = vcmp.lt.f32.partialorder %v1059, %v1787
      %vm1793 = vcmp.lt.f32.partialorder %v1060, %v1787
      %vm1794 = vcmp.lt.f32.partialorder %v1061, %v1787
      %vm1795 = vcmp.lt.f32.partialorder %v1062, %v1787
      %v1796 = vsel %vm1788, %v1055, -3.4e+38
      %v1797 = vsel %vm1789, %v1056, -3.4e+38
      %v1798 = vsel %vm1790, %v1057, -3.4e+38
      %v1799 = vsel %vm1791, %v1058, -3.4e+38
      %v1800 = vsel %vm1792, %v1059, -3.4e+38
      %v1801 = vsel %vm1793, %v1060, -3.4e+38
      %v1802 = vsel %vm1794, %v1061, -3.4e+38
      %v1803 = vsel %vm1795, %v1062, -3.4e+38
      %v1804 = vmax.f32 %v1796, %v1800
      %v1805 = vmax.f32 %v1797, %v1801
      %v1806 = vmax.f32 %v1798, %v1802
      %v1807 = vmax.f32 %v1799, %v1803
      %v1808 = vmax.f32 %v1804, %v1805
      %v1809 = vmax.f32 %v1806, %v1807
      %v1810 = vmax.f32 %v1808, %v1809
      %v1811 = vrot.slane %v1810, 4
      %v1812 = vmax.f32 %v1810, %v1811
      %v1813 = vrot.slane %v1812, 2
      %v1814 = vmax.f32 %v1812, %v1813
      %v1815 = vrot.slane %v1814, 1
      %v1816 = vmax.f32 %v1814, %v1815
      %vm1817 = vcmp.lt.f32.partialorder %v1055, %v1816
      %vm1818 = vcmp.lt.f32.partialorder %v1056, %v1816
      %vm1819 = vcmp.lt.f32.partialorder %v1057, %v1816
      %vm1820 = vcmp.lt.f32.partialorder %v1058, %v1816
      %vm1821 = vcmp.lt.f32.partialorder %v1059, %v1816
      %vm1822 = vcmp.lt.f32.partialorder %v1060, %v1816
      %vm1823 = vcmp.lt.f32.partialorder %v1061, %v1816
      %vm1824 = vcmp.lt.f32.partialorder %v1062, %v1816
      %v1825 = vsel %vm1817, %v1055, -3.4e+38
      %v1826 = vsel %vm1818, %v1056, -3.4e+38
      %v1827 = vsel %vm1819, %v1057, -3.4e+38
      %v1828 = vsel %vm1820, %v1058, -3.4e+38
      %v1829 = vsel %vm1821, %v1059, -3.4e+38
      %v1830 = vsel %vm1822, %v1060, -3.4e+38
      %v1831 = vsel %vm1823, %v1061, -3.4e+38
      %v1832 = vsel %vm1824, %v1062, -3.4e+38
      %v1833 = vmax.f32 %v1825, %v1829
      %v1834 = vmax.f32 %v1826, %v1830
      %v1835 = vmax.f32 %v1827, %v1831
      %v1836 = vmax.f32 %v1828, %v1832
      %v1837 = vmax.f32 %v1833, %v1834
      %v1838 = vmax.f32 %v1835, %v1836
      %v1839 = vmax.f32 %v1837, %v1838
      %v1840 = vrot.slane %v1839, 4
      %v1841 = vmax.f32 %v1839, %v1840
      %v1842 = vrot.slane %v1841, 2
      %v1843 = vmax.f32 %v1841, %v1842
      %v1844 = vrot.slane %v1843, 1
      %v1845 = vmax.f32 %v1843, %v1844
      %vm1846 = vcmp.lt.f32.partialorder %v1055, %v1845
      %vm1847 = vcmp.lt.f32.partialorder %v1056, %v1845
      %vm1848 = vcmp.lt.f32.partialorder %v1057, %v1845
      %vm1849 = vcmp.lt.f32.partialorder %v1058, %v1845
      %vm1850 = vcmp.lt.f32.partialorder %v1059, %v1845
      %vm1851 = vcmp.lt.f32.partialorder %v1060, %v1845
      %vm1852 = vcmp.lt.f32.partialorder %v1061, %v1845
      %vm1853 = vcmp.lt.f32.partialorder %v1062, %v1845
      %v1854 = vsel %vm1846, %v1055, -3.4e+38
      %v1855 = vsel %vm1847, %v1056, -3.4e+38
      %v1856 = vsel %vm1848, %v1057, -3.4e+38
      %v1857 = vsel %vm1849, %v1058, -3.4e+38
      %v1858 = vsel %vm1850, %v1059, -3.4e+38
      %v1859 = vsel %vm1851, %v1060, -3.4e+38
      %v1860 = vsel %vm1852, %v1061, -3.4e+38
      %v1861 = vsel %vm1853, %v1062, -3.4e+38
      %v1862 = vmax.f32 %v1854, %v1858
      %v1863 = vmax.f32 %v1855, %v1859
      %v1864 = vmax.f32 %v1856, %v1860
      %v1865 = vmax.f32 %v1857, %v1861
      %v1866 = vmax.f32 %v1862, %v1863
      %v1867 = vmax.f32 %v1864, %v1865
      %v1868 = vmax.f32 %v1866, %v1867
      %v1869 = vrot.slane %v1868, 4
      %v1870 = vmax.f32 %v1868, %v1869
      %v1871 = vrot.slane %v1870, 2
      %v1872 = vmax.f32 %v1870, %v1871
      %v1873 = vrot.slane %v1872, 1
      %v1874 = vmax.f32 %v1872, %v1873
      %vm1875 = vcmp.lt.f32.partialorder %v1055, %v1874
      %vm1876 = vcmp.lt.f32.partialorder %v1056, %v1874
      %vm1877 = vcmp.lt.f32.partialorder %v1057, %v1874
      %vm1878 = vcmp.lt.f32.partialorder %v1058, %v1874
      %vm1879 = vcmp.lt.f32.partialorder %v1059, %v1874
      %vm1880 = vcmp.lt.f32.partialorder %v1060, %v1874
      %vm1881 = vcmp.lt.f32.partialorder %v1061, %v1874
      %vm1882 = vcmp.lt.f32.partialorder %v1062, %v1874
      %v1883 = vsel %vm1875, %v1055, -3.4e+38
      %v1884 = vsel %vm1876, %v1056, -3.4e+38
      %v1885 = vsel %vm1877, %v1057, -3.4e+38
      %v1886 = vsel %vm1878, %v1058, -3.4e+38
      %v1887 = vsel %vm1879, %v1059, -3.4e+38
      %v1888 = vsel %vm1880, %v1060, -3.4e+38
      %v1889 = vsel %vm1881, %v1061, -3.4e+38
      %v1890 = vsel %vm1882, %v1062, -3.4e+38
      %v1891 = vmax.f32 %v1883, %v1887
      %v1892 = vmax.f32 %v1884, %v1888
      %v1893 = vmax.f32 %v1885, %v1889
      %v1894 = vmax.f32 %v1886, %v1890
      %v1895 = vmax.f32 %v1891, %v1892
      %v1896 = vmax.f32 %v1893, %v1894
      %v1897 = vmax.f32 %v1895, %v1896
      %v1898 = vrot.slane %v1897, 4
      %v1899 = vmax.f32 %v1897, %v1898
      %v1900 = vrot.slane %v1899, 2
      %v1901 = vmax.f32 %v1899, %v1900
      %v1902 = vrot.slane %v1901, 1
      %v1903 = vmax.f32 %v1901, %v1902
      %vm1904 = vcmp.lt.f32.partialorder %v1055, %v1903
      %vm1905 = vcmp.lt.f32.partialorder %v1056, %v1903
      %vm1906 = vcmp.lt.f32.partialorder %v1057, %v1903
      %vm1907 = vcmp.lt.f32.partialorder %v1058, %v1903
      %vm1908 = vcmp.lt.f32.partialorder %v1059, %v1903
      %vm1909 = vcmp.lt.f32.partialorder %v1060, %v1903
      %vm1910 = vcmp.lt.f32.partialorder %v1061, %v1903
      %vm1911 = vcmp.lt.f32.partialorder %v1062, %v1903
      %v1912 = vsel %vm1904, %v1055, -3.4e+38
      %v1913 = vsel %vm1905, %v1056, -3.4e+38
      %v1914 = vsel %vm1906, %v1057, -3.4e+38
      %v1915 = vsel %vm1907, %v1058, -3.4e+38
      %v1916 = vsel %vm1908, %v1059, -3.4e+38
      %v1917 = vsel %vm1909, %v1060, -3.4e+38
      %v1918 = vsel %vm1910, %v1061, -3.4e+38
      %v1919 = vsel %vm1911, %v1062, -3.4e+38
      %v1920 = vmax.f32 %v1912, %v1916
      %v1921 = vmax.f32 %v1913, %v1917
      %v1922 = vmax.f32 %v1914, %v1918
      %v1923 = vmax.f32 %v1915, %v1919
      %v1924 = vmax.f32 %v1920, %v1921
      %v1925 = vmax.f32 %v1922, %v1923
      %v1926 = vmax.f32 %v1924, %v1925
      %v1927 = vrot.slane %v1926, 4
      %v1928 = vmax.f32 %v1926, %v1927
      %v1929 = vrot.slane %v1928, 2
      %v1930 = vmax.f32 %v1928, %v1929
      %v1931 = vrot.slane %v1930, 1
      %v1932 = vmax.f32 %v1930, %v1931
      %vm1933 = vcmp.ge.f32.partialorder %v1055, %v1932
      %vm1934 = vcmp.ge.f32.partialorder %v1056, %v1932
      %vm1935 = vcmp.ge.f32.partialorder %v1057, %v1932
      %vm1936 = vcmp.ge.f32.partialorder %v1058, %v1932
      %vm1937 = vcmp.ge.f32.partialorder %v1059, %v1932
      %vm1938 = vcmp.ge.f32.partialorder %v1060, %v1932
      %vm1939 = vcmp.ge.f32.partialorder %v1061, %v1932
      %vm1940 = vcmp.ge.f32.partialorder %v1062, %v1932
      %v1941 = vmul.f32 %v1055, 1.442695
      %v1942 = vpow.pop %v1941
      %v1943 = vmul.f32 %v1056, 1.442695
      %v1944 = vpow.pop %v1943
      %v1945 = vmul.f32 %v1057, 1.442695
      %v1946 = vpow.pop %v1945
      %v1947 = vmul.f32 %v1058, 1.442695
      %v1948 = vpow.pop %v1947
      %v1949 = vmul.f32 %v1059, 1.442695
      %v1950 = vpow.pop %v1949
      %v1951 = vmul.f32 %v1060, 1.442695
      %v1952 = vpow.pop %v1951
      %v1953 = vmul.f32 %v1061, 1.442695
      %v1954 = vpow.pop %v1953
      %v1955 = vmul.f32 %v1062, 1.442695
      %v1956 = vpow.pop %v1955
      %v1957 = vsel %vm1933, %v1942, 0.0
      %v1958 = vsel %vm1934, %v1944, 0.0
      %v1959 = vsel %vm1935, %v1946, 0.0
      %v1960 = vsel %vm1936, %v1948, 0.0
      %v1961 = vsel %vm1937, %v1950, 0.0
      %v1962 = vsel %vm1938, %v1952, 0.0
      %v1963 = vsel %vm1939, %v1954, 0.0
      %v1964 = vsel %vm1940, %v1956, 0.0
      %v1965 = vpack.c.bf16 %v1958, %v1957
      %v1966 = vpack.c.bf16 %v1960, %v1959
      %v1967 = vpack.c.bf16 %v1962, %v1961
      %v1968 = vpack.c.bf16 %v1964, %v1963
      %1969 = vst [vmem:[#allocation2] sm:$0xff] %v1965
      %1970 = vst [vmem:[#allocation2 + $0x8] sm:$0xff] %v1966
      %1971 = vst [vmem:[#allocation2 + $0x10] sm:$0xff] %v1967
      %1972 = vst [vmem:[#allocation2 + $0x18] sm:$0xff] %v1968
      %v1973 = vadd.f32 %v1957, %v1958
      %v1974 = vadd.f32 %v1973, %v1959
      %v1975 = vadd.f32 %v1974, %v1960
      %v1976 = vadd.f32 %v1975, %v1961
      %v1977 = vadd.f32 %v1976, %v1962
      %v1978 = vadd.f32 %v1977, %v1963
      %v1979 = vadd.f32 %v1978, %v1964
      %v1980 = vrot.slane %v1979, 4
      %v1981 = vadd.f32 %v1979, %v1980
      %v1982 = vrot.slane %v1981, 2
      %v1983 = vadd.f32 %v1981, %v1982
      %v1984 = vrot.slane %v1983, 1
      %v1985 = vadd.f32 %v1983, %v1984
      %v1986 = vrcp.pop %v1985
      %1987 = vst [vmem:[#allocation3] sm:$0x1] %v1986
    $region25: #{tpu_custom_call.1} parent=1 // pred_fallthru
      _
    %v1988 = vld [vmem:[%s4] sm:$0xf]
    %v1989 = vld [vmem:[%s4 + $0x4] sm:$0xf]
    %v1990 = vld [vmem:[%s4 + $0x8] sm:$0xf]
    %v1991 = vld [vmem:[%s4 + $0xc] sm:$0xf]
    %v1992 = vld [vmem:[%s4 + $0x10] sm:$0xf]
    %v1993 = vld [vmem:[%s4 + $0x14] sm:$0xf]
    %v1994 = vld [vmem:[%s4 + $0x18] sm:$0xf]
    %v1995 = vld [vmem:[%s4 + $0x1c] sm:$0xf]
    %v1996 = vld [vmem:[%s4 + $0x20] sm:$0xf]
    %v1997 = vld [vmem:[%s4 + $0x24] sm:$0xf]
    %v1998 = vld [vmem:[%s4 + $0x28] sm:$0xf]
    %v1999 = vld [vmem:[%s4 + $0x2c] sm:$0xf]
    %v2000 = vld [vmem:[%s4 + $0x30] sm:$0xf]
    %v2001 = vld [vmem:[%s4 + $0x34] sm:$0xf]
    %v2002 = vld [vmem:[%s4 + $0x38] sm:$0xf]
    %v2003 = vld [vmem:[%s4 + $0x3c] sm:$0xf]
    %v2004 = vld [vmem:[%s4 + $0x40] sm:$0xf]
    %v2005 = vld [vmem:[%s4 + $0x44] sm:$0xf]
    %v2006 = vld [vmem:[%s4 + $0x48] sm:$0xf]
    %v2007 = vld [vmem:[%s4 + $0x4c] sm:$0xf]
    %v2008 = vld [vmem:[%s4 + $0x50] sm:$0xf]
    %v2009 = vld [vmem:[%s4 + $0x54] sm:$0xf]
    %v2010 = vld [vmem:[%s4 + $0x58] sm:$0xf]
    %v2011 = vld [vmem:[%s4 + $0x5c] sm:$0xf]
    %v2012 = vld [vmem:[%s4 + $0x60] sm:$0xf]
    %v2013 = vld [vmem:[%s4 + $0x64] sm:$0xf]
    %v2014 = vld [vmem:[%s4 + $0x68] sm:$0xf]
    %v2015 = vld [vmem:[%s4 + $0x6c] sm:$0xf]
    %v2016 = vld [vmem:[%s4 + $0x70] sm:$0xf]
    %v2017 = vld [vmem:[%s4 + $0x74] sm:$0xf]
    %v2018 = vld [vmem:[%s4 + $0x78] sm:$0xf]
    %v2019 = vld [vmem:[%s4 + $0x7c] sm:$0xf]
    %v2020 = vld [vmem:[%s4 + $0x80] sm:$0xf]
    %v2021 = vld [vmem:[%s4 + $0x84] sm:$0xf]
    %v2022 = vld [vmem:[%s4 + $0x88] sm:$0xf]
    %v2023 = vld [vmem:[%s4 + $0x8c] sm:$0xf]
    %v2024 = vld [vmem:[%s4 + $0x90] sm:$0xf]
    %v2025 = vld [vmem:[%s4 + $0x94] sm:$0xf]
    %v2026 = vld [vmem:[%s4 + $0x98] sm:$0xf]
    %v2027 = vld [vmem:[%s4 + $0x9c] sm:$0xf]
    %v2028 = vld [vmem:[%s4 + $0xa0] sm:$0xf]
    %v2029 = vld [vmem:[%s4 + $0xa4] sm:$0xf]
    %v2030 = vld [vmem:[%s4 + $0xa8] sm:$0xf]
    %v2031 = vld [vmem:[%s4 + $0xac] sm:$0xf]
    %v2032 = vld [vmem:[%s4 + $0xb0] sm:$0xf]
    %v2033 = vld [vmem:[%s4 + $0xb4] sm:$0xf]
    %v2034 = vld [vmem:[%s4 + $0xb8] sm:$0xf]
    %v2035 = vld [vmem:[%s4 + $0xbc] sm:$0xf]
    %v2036 = vld [vmem:[%s4 + $0xc0] sm:$0xf]
    %v2037 = vld [vmem:[%s4 + $0xc4] sm:$0xf]
    %v2038 = vld [vmem:[%s4 + $0xc8] sm:$0xf]
    %v2039 = vld [vmem:[%s4 + $0xcc] sm:$0xf]
    %v2040 = vld [vmem:[%s4 + $0xd0] sm:$0xf]
    %v2041 = vld [vmem:[%s4 + $0xd4] sm:$0xf]
    %v2042 = vld [vmem:[%s4 + $0xd8] sm:$0xf]
    %v2043 = vld [vmem:[%s4 + $0xdc] sm:$0xf]
    %v2044 = vld [vmem:[%s4 + $0xe0] sm:$0xf]
    %v2045 = vld [vmem:[%s4 + $0xe4] sm:$0xf]
    %v2046 = vld [vmem:[%s4 + $0xe8] sm:$0xf]
    %v2047 = vld [vmem:[%s4 + $0xec] sm:$0xf]
    %v2048 = vld [vmem:[%s4 + $0xf0] sm:$0xf]
    %v2049 = vld [vmem:[%s4 + $0xf4] sm:$0xf]
    %v2050 = vld [vmem:[%s4 + $0xf8] sm:$0xf]
    %v2051 = vld [vmem:[%s4 + $0xfc] sm:$0xf]
    %v2052 = vld [vmem:[%s4 + $0x100] sm:$0xf]
    %v2053 = vld [vmem:[%s4 + $0x104] sm:$0xf]
    %v2054 = vld [vmem:[%s4 + $0x108] sm:$0xf]
    %v2055 = vld [vmem:[%s4 + $0x10c] sm:$0xf]
    %v2056 = vld [vmem:[%s4 + $0x110] sm:$0xf]
    %v2057 = vld [vmem:[%s4 + $0x114] sm:$0xf]
    %v2058 = vld [vmem:[%s4 + $0x118] sm:$0xf]
    %v2059 = vld [vmem:[%s4 + $0x11c] sm:$0xf]
    %v2060 = vld [vmem:[%s4 + $0x120] sm:$0xf]
    %v2061 = vld [vmem:[%s4 + $0x124] sm:$0xf]
    %v2062 = vld [vmem:[%s4 + $0x128] sm:$0xf]
    %v2063 = vld [vmem:[%s4 + $0x12c] sm:$0xf]
    %v2064 = vld [vmem:[%s4 + $0x130] sm:$0xf]
    %v2065 = vld [vmem:[%s4 + $0x134] sm:$0xf]
    %v2066 = vld [vmem:[%s4 + $0x138] sm:$0xf]
    %v2067 = vld [vmem:[%s4 + $0x13c] sm:$0xf]
    %v2068 = vld [vmem:[%s4 + $0x140] sm:$0xf]
    %v2069 = vld [vmem:[%s4 + $0x144] sm:$0xf]
    %v2070 = vld [vmem:[%s4 + $0x148] sm:$0xf]
    %v2071 = vld [vmem:[%s4 + $0x14c] sm:$0xf]
    %v2072 = vld [vmem:[%s4 + $0x150] sm:$0xf]
    %v2073 = vld [vmem:[%s4 + $0x154] sm:$0xf]
    %v2074 = vld [vmem:[%s4 + $0x158] sm:$0xf]
    %v2075 = vld [vmem:[%s4 + $0x15c] sm:$0xf]
    %v2076 = vld [vmem:[%s4 + $0x160] sm:$0xf]
    %v2077 = vld [vmem:[%s4 + $0x164] sm:$0xf]
    %v2078 = vld [vmem:[%s4 + $0x168] sm:$0xf]
    %v2079 = vld [vmem:[%s4 + $0x16c] sm:$0xf]
    %v2080 = vld [vmem:[%s4 + $0x170] sm:$0xf]
    %v2081 = vld [vmem:[%s4 + $0x174] sm:$0xf]
    %v2082 = vld [vmem:[%s4 + $0x178] sm:$0xf]
    %v2083 = vld [vmem:[%s4 + $0x17c] sm:$0xf]
    %v2084 = vld [vmem:[%s4 + $0x180] sm:$0xf]
    %v2085 = vld [vmem:[%s4 + $0x184] sm:$0xf]
    %v2086 = vld [vmem:[%s4 + $0x188] sm:$0xf]
    %v2087 = vld [vmem:[%s4 + $0x18c] sm:$0xf]
    %v2088 = vld [vmem:[%s4 + $0x190] sm:$0xf]
    %v2089 = vld [vmem:[%s4 + $0x194] sm:$0xf]
    %v2090 = vld [vmem:[%s4 + $0x198] sm:$0xf]
    %v2091 = vld [vmem:[%s4 + $0x19c] sm:$0xf]
    %v2092 = vld [vmem:[%s4 + $0x1a0] sm:$0xf]
    %v2093 = vld [vmem:[%s4 + $0x1a4] sm:$0xf]
    %v2094 = vld [vmem:[%s4 + $0x1a8] sm:$0xf]
    %v2095 = vld [vmem:[%s4 + $0x1ac] sm:$0xf]
    %v2096 = vld [vmem:[%s4 + $0x1b0] sm:$0xf]
    %v2097 = vld [vmem:[%s4 + $0x1b4] sm:$0xf]
    %v2098 = vld [vmem:[%s4 + $0x1b8] sm:$0xf]
    %v2099 = vld [vmem:[%s4 + $0x1bc] sm:$0xf]
    %v2100 = vld [vmem:[%s4 + $0x1c0] sm:$0xf]
    %v2101 = vld [vmem:[%s4 + $0x1c4] sm:$0xf]
    %v2102 = vld [vmem:[%s4 + $0x1c8] sm:$0xf]
    %v2103 = vld [vmem:[%s4 + $0x1cc] sm:$0xf]
    %v2104 = vld [vmem:[%s4 + $0x1d0] sm:$0xf]
    %v2105 = vld [vmem:[%s4 + $0x1d4] sm:$0xf]
    %v2106 = vld [vmem:[%s4 + $0x1d8] sm:$0xf]
    %v2107 = vld [vmem:[%s4 + $0x1dc] sm:$0xf]
    %v2108 = vld [vmem:[%s4 + $0x1e0] sm:$0xf]
    %v2109 = vld [vmem:[%s4 + $0x1e4] sm:$0xf]
    %v2110 = vld [vmem:[%s4 + $0x1e8] sm:$0xf]
    %v2111 = vld [vmem:[%s4 + $0x1ec] sm:$0xf]
    %v2112 = vld [vmem:[%s4 + $0x1f0] sm:$0xf]
    %v2113 = vld [vmem:[%s4 + $0x1f4] sm:$0xf]
    %v2114 = vld [vmem:[%s4 + $0x1f8] sm:$0xf]
    %v2115 = vld [vmem:[%s4 + $0x1fc] sm:$0xf]
    %v2116 = vld [vmem:[#allocation2] sm:$0xff]
    %v2117 = vld [vmem:[#allocation2 + $0x8] sm:$0xff]
    %v2118 = vld [vmem:[#allocation2 + $0x10] sm:$0xff]
    %v2119 = vld [vmem:[#allocation2 + $0x18] sm:$0xff]
    %v2248 = vunpack.c.l.b16 %v1988
    %v2249 = vunpack.c.l.b16 %v1989
    %v2250 = vunpack.c.l.b16 %v1990
    %v2251 = vunpack.c.l.b16 %v1991
    %v2252 = vunpack.c.l.b16 %v1992
    %v2253 = vunpack.c.l.b16 %v1993
    %v2254 = vunpack.c.l.b16 %v1994
    %v2255 = vunpack.c.l.b16 %v1995
    %v2256 = vunpack.c.l.b16 %v1996
    %v2257 = vunpack.c.l.b16 %v1997
    %v2258 = vunpack.c.l.b16 %v1998
    %v2259 = vunpack.c.l.b16 %v1999
    %v2260 = vunpack.c.l.b16 %v2000
    %v2261 = vunpack.c.l.b16 %v2001
    %v2262 = vunpack.c.l.b16 %v2002
    %v2263 = vunpack.c.l.b16 %v2003
    %v2264 = vunpack.c.l.b16 %v2004
    %v2265 = vunpack.c.l.b16 %v2005
    %v2266 = vunpack.c.l.b16 %v2006
    %v2267 = vunpack.c.l.b16 %v2007
    %v2268 = vunpack.c.l.b16 %v2008
    %v2269 = vunpack.c.l.b16 %v2009
    %v2270 = vunpack.c.l.b16 %v2010
    %v2271 = vunpack.c.l.b16 %v2011
    %v2272 = vunpack.c.l.b16 %v2012
    %v2273 = vunpack.c.l.b16 %v2013
    %v2274 = vunpack.c.l.b16 %v2014
    %v2275 = vunpack.c.l.b16 %v2015
    %v2276 = vunpack.c.l.b16 %v2016
    %v2277 = vunpack.c.l.b16 %v2017
    %v2278 = vunpack.c.l.b16 %v2018
    %v2279 = vunpack.c.l.b16 %v2019
    %v2280 = vunpack.c.l.b16 %v2020
    %v2281 = vunpack.c.l.b16 %v2021
    %v2282 = vunpack.c.l.b16 %v2022
    %v2283 = vunpack.c.l.b16 %v2023
    %v2284 = vunpack.c.l.b16 %v2024
    %v2285 = vunpack.c.l.b16 %v2025
    %v2286 = vunpack.c.l.b16 %v2026
    %v2287 = vunpack.c.l.b16 %v2027
    %v2288 = vunpack.c.l.b16 %v2028
    %v2289 = vunpack.c.l.b16 %v2029
    %v2290 = vunpack.c.l.b16 %v2030
    %v2291 = vunpack.c.l.b16 %v2031
    %v2292 = vunpack.c.l.b16 %v2032
    %v2293 = vunpack.c.l.b16 %v2033
    %v2294 = vunpack.c.l.b16 %v2034
    %v2295 = vunpack.c.l.b16 %v2035
    %v2296 = vunpack.c.l.b16 %v2036
    %v2297 = vunpack.c.l.b16 %v2037
    %v2298 = vunpack.c.l.b16 %v2038
    %v2299 = vunpack.c.l.b16 %v2039
    %v2300 = vunpack.c.l.b16 %v2040
    %v2301 = vunpack.c.l.b16 %v2041
    %v2302 = vunpack.c.l.b16 %v2042
    %v2303 = vunpack.c.l.b16 %v2043
    %v2304 = vunpack.c.l.b16 %v2044
    %v2305 = vunpack.c.l.b16 %v2045
    %v2306 = vunpack.c.l.b16 %v2046
    %v2307 = vunpack.c.l.b16 %v2047
    %v2308 = vunpack.c.l.b16 %v2048
    %v2309 = vunpack.c.l.b16 %v2049
    %v2310 = vunpack.c.l.b16 %v2050
    %v2311 = vunpack.c.l.b16 %v2051
    %v2312 = vunpack.c.l.b16 %v2052
    %v2313 = vunpack.c.l.b16 %v2053
    %v2314 = vunpack.c.l.b16 %v2054
    %v2315 = vunpack.c.l.b16 %v2055
    %v2316 = vunpack.c.l.b16 %v2056
    %v2317 = vunpack.c.l.b16 %v2057
    %v2318 = vunpack.c.l.b16 %v2058
    %v2319 = vunpack.c.l.b16 %v2059
    %v2320 = vunpack.c.l.b16 %v2060
    %v2321 = vunpack.c.l.b16 %v2061
    %v2322 = vunpack.c.l.b16 %v2062
    %v2323 = vunpack.c.l.b16 %v2063
    %v2324 = vunpack.c.l.b16 %v2064
    %v2325 = vunpack.c.l.b16 %v2065
    %v2326 = vunpack.c.l.b16 %v2066
    %v2327 = vunpack.c.l.b16 %v2067
    %v2328 = vunpack.c.l.b16 %v2068
    %v2329 = vunpack.c.l.b16 %v2069
    %v2330 = vunpack.c.l.b16 %v2070
    %v2331 = vunpack.c.l.b16 %v2071
    %v2332 = vunpack.c.l.b16 %v2072
    %v2333 = vunpack.c.l.b16 %v2073
    %v2334 = vunpack.c.l.b16 %v2074
    %v2335 = vunpack.c.l.b16 %v2075
    %v2336 = vunpack.c.l.b16 %v2076
    %v2337 = vunpack.c.l.b16 %v2077
    %v2338 = vunpack.c.l.b16 %v2078
    %v2339 = vunpack.c.l.b16 %v2079
    %v2340 = vunpack.c.l.b16 %v2080
    %v2341 = vunpack.c.l.b16 %v2081
    %v2342 = vunpack.c.l.b16 %v2082
    %v2343 = vunpack.c.l.b16 %v2083
    %v2344 = vunpack.c.l.b16 %v2084
    %v2345 = vunpack.c.l.b16 %v2085
    %v2346 = vunpack.c.l.b16 %v2086
    %v2347 = vunpack.c.l.b16 %v2087
    %v2348 = vunpack.c.l.b16 %v2088
    %v2349 = vunpack.c.l.b16 %v2089
    %v2350 = vunpack.c.l.b16 %v2090
    %v2351 = vunpack.c.l.b16 %v2091
    %v2352 = vunpack.c.l.b16 %v2092
    %v2353 = vunpack.c.l.b16 %v2093
    %v2354 = vunpack.c.l.b16 %v2094
    %v2355 = vunpack.c.l.b16 %v2095
    %v2356 = vunpack.c.l.b16 %v2096
    %v2357 = vunpack.c.l.b16 %v2097
    %v2358 = vunpack.c.l.b16 %v2098
    %v2359 = vunpack.c.l.b16 %v2099
    %v2360 = vunpack.c.l.b16 %v2100
    %v2361 = vunpack.c.l.b16 %v2101
    %v2362 = vunpack.c.l.b16 %v2102
    %v2363 = vunpack.c.l.b16 %v2103
    %v2364 = vunpack.c.l.b16 %v2104
    %v2365 = vunpack.c.l.b16 %v2105
    %v2366 = vunpack.c.l.b16 %v2106
    %v2367 = vunpack.c.l.b16 %v2107
    %v2368 = vunpack.c.l.b16 %v2108
    %v2369 = vunpack.c.l.b16 %v2109
    %v2370 = vunpack.c.l.b16 %v2110
    %v2371 = vunpack.c.l.b16 %v2111
    %v2372 = vunpack.c.l.b16 %v2112
    %v2373 = vunpack.c.l.b16 %v2113
    %v2374 = vunpack.c.l.b16 %v2114
    %v2375 = vunpack.c.l.b16 %v2115
    %v2376 = vpack.c.b16 %v2249, %v2248
    %v2377 = vpack.c.b16 %v2251, %v2250
    %v2378 = vpack.c.b16 %v2253, %v2252
    %v2379 = vpack.c.b16 %v2255, %v2254
    %v2380 = vpack.c.b16 %v2257, %v2256
    %v2381 = vpack.c.b16 %v2259, %v2258
    %v2382 = vpack.c.b16 %v2261, %v2260
    %v2383 = vpack.c.b16 %v2263, %v2262
    %v2384 = vpack.c.b16 %v2265, %v2264
    %v2385 = vpack.c.b16 %v2267, %v2266
    %v2386 = vpack.c.b16 %v2269, %v2268
    %v2387 = vpack.c.b16 %v2271, %v2270
    %v2388 = vpack.c.b16 %v2273, %v2272
    %v2389 = vpack.c.b16 %v2275, %v2274
    %v2390 = vpack.c.b16 %v2277, %v2276
    %v2391 = vpack.c.b16 %v2279, %v2278
    %v2392 = vpack.c.b16 %v2281, %v2280
    %v2393 = vpack.c.b16 %v2283, %v2282
    %v2394 = vpack.c.b16 %v2285, %v2284
    %v2395 = vpack.c.b16 %v2287, %v2286
    %v2396 = vpack.c.b16 %v2289, %v2288
    %v2397 = vpack.c.b16 %v2291, %v2290
    %v2398 = vpack.c.b16 %v2293, %v2292
    %v2399 = vpack.c.b16 %v2295, %v2294
    %v2400 = vpack.c.b16 %v2297, %v2296
    %v2401 = vpack.c.b16 %v2299, %v2298
    %v2402 = vpack.c.b16 %v2301, %v2300
    %v2403 = vpack.c.b16 %v2303, %v2302
    %v2404 = vpack.c.b16 %v2305, %v2304
    %v2405 = vpack.c.b16 %v2307, %v2306
    %v2406 = vpack.c.b16 %v2309, %v2308
    %v2407 = vpack.c.b16 %v2311, %v2310
    %v2408 = vpack.c.b16 %v2313, %v2312
    %v2409 = vpack.c.b16 %v2315, %v2314
    %v2410 = vpack.c.b16 %v2317, %v2316
    %v2411 = vpack.c.b16 %v2319, %v2318
    %v2412 = vpack.c.b16 %v2321, %v2320
    %v2413 = vpack.c.b16 %v2323, %v2322
    %v2414 = vpack.c.b16 %v2325, %v2324
    %v2415 = vpack.c.b16 %v2327, %v2326
    %v2416 = vpack.c.b16 %v2329, %v2328
    %v2417 = vpack.c.b16 %v2331, %v2330
    %v2418 = vpack.c.b16 %v2333, %v2332
    %v2419 = vpack.c.b16 %v2335, %v2334
    %v2420 = vpack.c.b16 %v2337, %v2336
    %v2421 = vpack.c.b16 %v2339, %v2338
    %v2422 = vpack.c.b16 %v2341, %v2340
    %v2423 = vpack.c.b16 %v2343, %v2342
    %v2424 = vpack.c.b16 %v2345, %v2344
    %v2425 = vpack.c.b16 %v2347, %v2346
    %v2426 = vpack.c.b16 %v2349, %v2348
    %v2427 = vpack.c.b16 %v2351, %v2350
    %v2428 = vpack.c.b16 %v2353, %v2352
    %v2429 = vpack.c.b16 %v2355, %v2354
    %v2430 = vpack.c.b16 %v2357, %v2356
    %v2431 = vpack.c.b16 %v2359, %v2358
    %v2432 = vpack.c.b16 %v2361, %v2360
    %v2433 = vpack.c.b16 %v2363, %v2362
    %v2434 = vpack.c.b16 %v2365, %v2364
    %v2435 = vpack.c.b16 %v2367, %v2366
    %v2436 = vpack.c.b16 %v2369, %v2368
    %v2437 = vpack.c.b16 %v2371, %v2370
    %v2438 = vpack.c.b16 %v2373, %v2372
    %v2439 = vpack.c.b16 %v2375, %v2374
    %vm2440 = vcmask 523264
    %v2442 = vsel %vm2440, %v2376, 0
    %v2445 = vsel %vm2440, %v2377, 0
    %v2448 = vsel %vm2440, %v2378, 0
    %v2451 = vsel %vm2440, %v2379, 0
    %v2454 = vsel %vm2440, %v2380, 0
    %v2457 = vsel %vm2440, %v2381, 0
    %v2460 = vsel %vm2440, %v2382, 0
    %v2463 = vsel %vm2440, %v2383, 0
    %v2466 = vsel %vm2440, %v2384, 0
    %v2469 = vsel %vm2440, %v2385, 0
    %v2472 = vsel %vm2440, %v2386, 0
    %v2475 = vsel %vm2440, %v2387, 0
    %v2478 = vsel %vm2440, %v2388, 0
    %v2481 = vsel %vm2440, %v2389, 0
    %v2484 = vsel %vm2440, %v2390, 0
    %v2487 = vsel %vm2440, %v2391, 0
    %v2490 = vsel %vm2440, %v2392, 0
    %v2493 = vsel %vm2440, %v2393, 0
    %v2496 = vsel %vm2440, %v2394, 0
    %v2499 = vsel %vm2440, %v2395, 0
    %v2502 = vsel %vm2440, %v2396, 0
    %v2505 = vsel %vm2440, %v2397, 0
    %v2508 = vsel %vm2440, %v2398, 0
    %v2511 = vsel %vm2440, %v2399, 0
    %v2514 = vsel %vm2440, %v2400, 0
    %v2517 = vsel %vm2440, %v2401, 0
    %v2520 = vsel %vm2440, %v2402, 0
    %v2523 = vsel %vm2440, %v2403, 0
    %v2526 = vsel %vm2440, %v2404, 0
    %v2529 = vsel %vm2440, %v2405, 0
    %v2532 = vsel %vm2440, %v2406, 0
    %v2535 = vsel %vm2440, %v2407, 0
    %v2538 = vsel %vm2440, %v2408, 0
    %v2541 = vsel %vm2440, %v2409, 0
    %v2544 = vsel %vm2440, %v2410, 0
    %v2547 = vsel %vm2440, %v2411, 0
    %v2550 = vsel %vm2440, %v2412, 0
    %v2553 = vsel %vm2440, %v2413, 0
    %v2556 = vsel %vm2440, %v2414, 0
    %v2559 = vsel %vm2440, %v2415, 0
    %v2562 = vsel %vm2440, %v2416, 0
    %v2565 = vsel %vm2440, %v2417, 0
    %v2568 = vsel %vm2440, %v2418, 0
    %v2571 = vsel %vm2440, %v2419, 0
    %v2574 = vsel %vm2440, %v2420, 0
    %v2577 = vsel %vm2440, %v2421, 0
    %v2580 = vsel %vm2440, %v2422, 0
    %v2583 = vsel %vm2440, %v2423, 0
    %v2586 = vsel %vm2440, %v2424, 0
    %v2589 = vsel %vm2440, %v2425, 0
    %v2592 = vsel %vm2440, %v2426, 0
    %v2595 = vsel %vm2440, %v2427, 0
    %v2598 = vsel %vm2440, %v2428, 0
    %v2601 = vsel %vm2440, %v2429, 0
    %v2604 = vsel %vm2440, %v2430, 0
    %v2607 = vsel %vm2440, %v2431, 0
    %v2610 = vsel %vm2440, %v2432, 0
    %v2613 = vsel %vm2440, %v2433, 0
    %v2616 = vsel %vm2440, %v2434, 0
    %v2619 = vsel %vm2440, %v2435, 0
    %v2622 = vsel %vm2440, %v2436, 0
    %v2625 = vsel %vm2440, %v2437, 0
    %v2628 = vsel %vm2440, %v2438, 0
    %v2631 = vsel %vm2440, %v2439, 0
    %2633 = vmatprep.subr.bf16.mxu0 0
    %2634 = vmatpush1.bf16.msra.mxu0 %v2116
    %2635 = vmatprep.subr.bf16.mxu0 0
    %2636 = vmatpush1.bf16.msra.mxu0 %v2117
    %2637 = vmatprep.subr.bf16.mxu0 0
    %2638 = vmatpush1.bf16.msra.mxu0 %v2118
    %2639 = vmatprep.subr.bf16.mxu0 0
    %2640 = vmatpush1.bf16.msra.mxu0 %v2119
    %2641 = vmatprep.subr.bf16.mxu0 0
    %2642 = vmatpush1.bf16.msra.mxu0 0
    %2643 = vmatprep.subr.bf16.mxu0 0
    %2644 = vmatpush1.bf16.msra.mxu0 0
    %2645 = vmatprep.subr.bf16.mxu0 0
    %2646 = vmatpush1.bf16.msra.mxu0 0
    %2647 = vmatprep.subr.bf16.mxu0 0
    %2648 = vmatpush1.bf16.msra.mxu0 0
    %2649 = vmatprep.subr.bf16.mxu0 0
    %2650 = vmatpush1.bf16.msra.mxu0 0
    %2651 = vmatprep.subr.bf16.mxu0 0
    %2652 = vmatpush1.bf16.msra.mxu0 0
    %2653 = vmatprep.subr.bf16.mxu0 0
    %2654 = vmatpush1.bf16.msra.mxu0 0
    %2655 = vmatprep.subr.bf16.mxu0 0
    %2656 = vmatpush1.bf16.msra.mxu0 0
    %2657 = vmatprep.subr.bf16.mxu0 0
    %2658 = vmatpush1.bf16.msra.mxu0 0
    %2659 = vmatprep.subr.bf16.mxu0 0
    %2660 = vmatpush1.bf16.msra.mxu0 0
    %2661 = vmatprep.subr.bf16.mxu0 0
    %2662 = vmatpush1.bf16.msra.mxu0 0
    %2663 = vmatprep.subr.bf16.mxu0 0
    %2664 = vmatpush1.bf16.msra.mxu0 0
    %2665 = vmatprep.mubr.bf16.mxu0 0
    %2666 = vmatmul.mubr.bf16.gmra.mrb[0].mxu0 %v2442
    %v2667 = vpop.f32.mrb[0].mxu0
    %v2668 = vadd.f32 0.0, %v2667
    %v2669 = vpop.f32.mrb[0].mxu0
    %v2670 = vpop.f32.mrb[0].mxu0
    %v2671 = vadd.f32 0.0, %v2670
    %v2672 = vpop.f32.mrb[0].mxu0
    %2673 = vmatprep.mubr.bf16.mxu0 0
    %2674 = vmatmul.mubr.bf16.gmra.mrb[0].mxu0 %v2445
    %v2675 = vpop.f32.mrb[0].mxu0
    %v2676 = vadd.f32 0.0, %v2675
    %v2677 = vpop.f32.mrb[0].mxu0
    %v2678 = vpop.f32.mrb[0].mxu0
    %v2679 = vadd.f32 0.0, %v2678
    %v2680 = vpop.f32.mrb[0].mxu0
    %2681 = vmatprep.mubr.bf16.mxu0 0
    %2682 = vmatmul.mubr.bf16.gmra.mrb[0].mxu0 %v2448
    %v2683 = vpop.f32.mrb[0].mxu0
    %v2684 = vadd.f32 0.0, %v2683
    %v2685 = vpop.f32.mrb[0].mxu0
    %v2686 = vpop.f32.mrb[0].mxu0
    %v2687 = vadd.f32 0.0, %v2686
    %v2688 = vpop.f32.mrb[0].mxu0
    %2689 = vmatprep.mubr.bf16.mxu0 0
    %2690 = vmatmul.mubr.bf16.gmra.mrb[0].mxu0 %v2451
    %v2691 = vpop.f32.mrb[0].mxu0
    %v2692 = vadd.f32 0.0, %v2691
    %v2693 = vpop.f32.mrb[0].mxu0
    %v2694 = vpop.f32.mrb[0].mxu0
    %v2695 = vadd.f32 0.0, %v2694
    %v2696 = vpop.f32.mrb[0].mxu0
    %2697 = vmatprep.mubr.bf16.mxu0 0
    %2698 = vmatmul.mubr.bf16.gmra.mrb[0].mxu0 %v2454
    %v2699 = vpop.f32.mrb[0].mxu0
    %v2700 = vadd.f32 0.0, %v2699
    %v2701 = vpop.f32.mrb[0].mxu0
    %v2702 = vpop.f32.mrb[0].mxu0
    %v2703 = vadd.f32 0.0, %v2702
    %v2704 = vpop.f32.mrb[0].mxu0
    %2705 = vmatprep.mubr.bf16.mxu0 0
    %2706 = vmatmul.mubr.bf16.gmra.mrb[0].mxu0 %v2457
    %v2707 = vpop.f32.mrb[0].mxu0
    %v2708 = vadd.f32 0.0, %v2707
    %v2709 = vpop.f32.mrb[0].mxu0
    %v2710 = vpop.f32.mrb[0].mxu0
    %v2711 = vadd.f32 0.0, %v2710
    %v2712 = vpop.f32.mrb[0].mxu0
    %2713 = vmatprep.mubr.bf16.mxu0 0
    %2714 = vmatmul.mubr.bf16.gmra.mrb[0].mxu0 %v2460
    %v2715 = vpop.f32.mrb[0].mxu0
    %v2716 = vadd.f32 0.0, %v2715
    %v2717 = vpop.f32.mrb[0].mxu0
    %v2718 = vpop.f32.mrb[0].mxu0
    %v2719 = vadd.f32 0.0, %v2718
    %v2720 = vpop.f32.mrb[0].mxu0
    %2721 = vmatprep.mubr.bf16.mxu0 0
    %2722 = vmatmul.mubr.bf16.gmra.mrb[0].mxu0 %v2463
    %v2723 = vpop.f32.mrb[0].mxu0
    %v2724 = vadd.f32 0.0, %v2723
    %v2725 = vpop.f32.mrb[0].mxu0
    %v2726 = vpop.f32.mrb[0].mxu0
    %v2727 = vadd.f32 0.0, %v2726
    %v2728 = vpop.f32.mrb[0].mxu0
    %2729 = vmatprep.mubr.bf16.mxu0 0
    %2730 = vmatmul.mubr.bf16.gmra.mrb[0].mxu0 %v2466
    %v2731 = vpop.f32.mrb[0].mxu0
    %v2732 = vadd.f32 0.0, %v2731
    %v2733 = vpop.f32.mrb[0].mxu0
    %v2734 = vpop.f32.mrb[0].mxu0
    %v2735 = vadd.f32 0.0, %v2734
    %v2736 = vpop.f32.mrb[0].mxu0
    %2737 = vmatprep.mubr.bf16.mxu0 0
    %2738 = vmatmul.mubr.bf16.gmra.mrb[0].mxu0 %v2469
    %v2739 = vpop.f32.mrb[0].mxu0
    %v2740 = vadd.f32 0.0, %v2739
    %v2741 = vpop.f32.mrb[0].mxu0
    %v2742 = vpop.f32.mrb[0].mxu0
    %v2743 = vadd.f32 0.0, %v2742
    %v2744 = vpop.f32.mrb[0].mxu0
    %2745 = vmatprep.mubr.bf16.mxu0 0
    %2746 = vmatmul.mubr.bf16.gmra.mrb[0].mxu0 %v2472
    %v2747 = vpop.f32.mrb[0].mxu0
    %v2748 = vadd.f32 0.0, %v2747
    %v2749 = vpop.f32.mrb[0].mxu0
    %v2750 = vpop.f32.mrb[0].mxu0
    %v2751 = vadd.f32 0.0, %v2750
    %v2752 = vpop.f32.mrb[0].mxu0
    %2753 = vmatprep.mubr.bf16.mxu0 0
    %2754 = vmatmul.mubr.bf16.gmra.mrb[0].mxu0 %v2475
    %v2755 = vpop.f32.mrb[0].mxu0
    %v2756 = vadd.f32 0.0, %v2755
    %v2757 = vpop.f32.mrb[0].mxu0
    %v2758 = vpop.f32.mrb[0].mxu0
    %v2759 = vadd.f32 0.0, %v2758
    %v2760 = vpop.f32.mrb[0].mxu0
    %2761 = vmatprep.mubr.bf16.mxu0 0
    %2762 = vmatmul.mubr.bf16.gmra.mrb[0].mxu0 %v2478
    %v2763 = vpop.f32.mrb[0].mxu0
    %v2764 = vadd.f32 0.0, %v2763
    %v2765 = vpop.f32.mrb[0].mxu0
    %v2766 = vpop.f32.mrb[0].mxu0
    %v2767 = vadd.f32 0.0, %v2766
    %v2768 = vpop.f32.mrb[0].mxu0
    %2769 = vmatprep.mubr.bf16.mxu0 0
    %2770 = vmatmul.mubr.bf16.gmra.mrb[0].mxu0 %v2481
    %v2771 = vpop.f32.mrb[0].mxu0
    %v2772 = vadd.f32 0.0, %v2771
    %v2773 = vpop.f32.mrb[0].mxu0
    %v2774 = vpop.f32.mrb[0].mxu0
    %v2775 = vadd.f32 0.0, %v2774
    %v2776 = vpop.f32.mrb[0].mxu0
    %2777 = vmatprep.mubr.bf16.mxu0 0
    %2778 = vmatmul.mubr.bf16.gmra.mrb[0].mxu0 %v2484
    %v2779 = vpop.f32.mrb[0].mxu0
    %v2780 = vadd.f32 0.0, %v2779
    %v2781 = vpop.f32.mrb[0].mxu0
    %v2782 = vpop.f32.mrb[0].mxu0
    %v2783 = vadd.f32 0.0, %v2782
    %v2784 = vpop.f32.mrb[0].mxu0
    %2785 = vmatprep.mubr.bf16.mxu0 0
    %2786 = vmatmul.mubr.bf16.gmra.mrb[0].mxu0 %v2487
    %v2787 = vpop.f32.mrb[0].mxu0
    %v2788 = vadd.f32 0.0, %v2787
    %v2789 = vpop.f32.mrb[0].mxu0
    %v2790 = vpop.f32.mrb[0].mxu0
    %v2791 = vadd.f32 0.0, %v2790
    %v2792 = vpop.f32.mrb[0].mxu0
    %2793 = vmatprep.mubr.bf16.mxu0 0
    %2794 = vmatmul.mubr.bf16.gmra.mrb[0].mxu0 %v2490
    %v2795 = vpop.f32.mrb[0].mxu0
    %v2796 = vadd.f32 0.0, %v2795
    %v2797 = vpop.f32.mrb[0].mxu0
    %v2798 = vpop.f32.mrb[0].mxu0
    %v2799 = vadd.f32 0.0, %v2798
    %v2800 = vpop.f32.mrb[0].mxu0
    %2801 = vmatprep.mubr.bf16.mxu0 0
    %2802 = vmatmul.mubr.bf16.gmra.mrb[0].mxu0 %v2493
    %v2803 = vpop.f32.mrb[0].mxu0
    %v2804 = vadd.f32 0.0, %v2803
    %v2805 = vpop.f32.mrb[0].mxu0
    %v2806 = vpop.f32.mrb[0].mxu0
    %v2807 = vadd.f32 0.0, %v2806
    %v2808 = vpop.f32.mrb[0].mxu0
    %2809 = vmatprep.mubr.bf16.mxu0 0
    %2810 = vmatmul.mubr.bf16.gmra.mrb[0].mxu0 %v2496
    %v2811 = vpop.f32.mrb[0].mxu0
    %v2812 = vadd.f32 0.0, %v2811
    %v2813 = vpop.f32.mrb[0].mxu0
    %v2814 = vpop.f32.mrb[0].mxu0
    %v2815 = vadd.f32 0.0, %v2814
    %v2816 = vpop.f32.mrb[0].mxu0
    %2817 = vmatprep.mubr.bf16.mxu0 0
    %2818 = vmatmul.mubr.bf16.gmra.mrb[0].mxu0 %v2499
    %v2819 = vpop.f32.mrb[0].mxu0
    %v2820 = vadd.f32 0.0, %v2819
    %v2821 = vpop.f32.mrb[0].mxu0
    %v2822 = vpop.f32.mrb[0].mxu0
    %v2823 = vadd.f32 0.0, %v2822
    %v2824 = vpop.f32.mrb[0].mxu0
    %2825 = vmatprep.mubr.bf16.mxu0 0
    %2826 = vmatmul.mubr.bf16.gmra.mrb[0].mxu0 %v2502
    %v2827 = vpop.f32.mrb[0].mxu0
    %v2828 = vadd.f32 0.0, %v2827
    %v2829 = vpop.f32.mrb[0].mxu0
    %v2830 = vpop.f32.mrb[0].mxu0
    %v2831 = vadd.f32 0.0, %v2830
    %v2832 = vpop.f32.mrb[0].mxu0
    %2833 = vmatprep.mubr.bf16.mxu0 0
    %2834 = vmatmul.mubr.bf16.gmra.mrb[0].mxu0 %v2505
    %v2835 = vpop.f32.mrb[0].mxu0
    %v2836 = vadd.f32 0.0, %v2835
    %v2837 = vpop.f32.mrb[0].mxu0
    %v2838 = vpop.f32.mrb[0].mxu0
    %v2839 = vadd.f32 0.0, %v2838
    %v2840 = vpop.f32.mrb[0].mxu0
    %2841 = vmatprep.mubr.bf16.mxu0 0
    %2842 = vmatmul.mubr.bf16.gmra.mrb[0].mxu0 %v2508
    %v2843 = vpop.f32.mrb[0].mxu0
    %v2844 = vadd.f32 0.0, %v2843
    %v2845 = vpop.f32.mrb[0].mxu0
    %v2846 = vpop.f32.mrb[0].mxu0
    %v2847 = vadd.f32 0.0, %v2846
    %v2848 = vpop.f32.mrb[0].mxu0
    %2849 = vmatprep.mubr.bf16.mxu0 0
    %2850 = vmatmul.mubr.bf16.gmra.mrb[0].mxu0 %v2511
    %v2851 = vpop.f32.mrb[0].mxu0
    %v2852 = vadd.f32 0.0, %v2851
    %v2853 = vpop.f32.mrb[0].mxu0
    %v2854 = vpop.f32.mrb[0].mxu0
    %v2855 = vadd.f32 0.0, %v2854
    %v2856 = vpop.f32.mrb[0].mxu0
    %2857 = vmatprep.mubr.bf16.mxu0 0
    %2858 = vmatmul.mubr.bf16.gmra.mrb[0].mxu0 %v2514
    %v2859 = vpop.f32.mrb[0].mxu0
    %v2860 = vadd.f32 0.0, %v2859
    %v2861 = vpop.f32.mrb[0].mxu0
    %v2862 = vpop.f32.mrb[0].mxu0
    %v2863 = vadd.f32 0.0, %v2862
    %v2864 = vpop.f32.mrb[0].mxu0
    %2865 = vmatprep.mubr.bf16.mxu0 0
    %2866 = vmatmul.mubr.bf16.gmra.mrb[0].mxu0 %v2517
    %v2867 = vpop.f32.mrb[0].mxu0
    %v2868 = vadd.f32 0.0, %v2867
    %v2869 = vpop.f32.mrb[0].mxu0
    %v2870 = vpop.f32.mrb[0].mxu0
    %v2871 = vadd.f32 0.0, %v2870
    %v2872 = vpop.f32.mrb[0].mxu0
    %2873 = vmatprep.mubr.bf16.mxu0 0
    %2874 = vmatmul.mubr.bf16.gmra.mrb[0].mxu0 %v2520
    %v2875 = vpop.f32.mrb[0].mxu0
    %v2876 = vadd.f32 0.0, %v2875
    %v2877 = vpop.f32.mrb[0].mxu0
    %v2878 = vpop.f32.mrb[0].mxu0
    %v2879 = vadd.f32 0.0, %v2878
    %v2880 = vpop.f32.mrb[0].mxu0
    %2881 = vmatprep.mubr.bf16.mxu0 0
    %2882 = vmatmul.mubr.bf16.gmra.mrb[0].mxu0 %v2523
    %v2883 = vpop.f32.mrb[0].mxu0
    %v2884 = vadd.f32 0.0, %v2883
    %v2885 = vpop.f32.mrb[0].mxu0
    %v2886 = vpop.f32.mrb[0].mxu0
    %v2887 = vadd.f32 0.0, %v2886
    %v2888 = vpop.f32.mrb[0].mxu0
    %2889 = vmatprep.mubr.bf16.mxu0 0
    %2890 = vmatmul.mubr.bf16.gmra.mrb[0].mxu0 %v2526
    %v2891 = vpop.f32.mrb[0].mxu0
    %v2892 = vadd.f32 0.0, %v2891
    %v2893 = vpop.f32.mrb[0].mxu0
    %v2894 = vpop.f32.mrb[0].mxu0
    %v2895 = vadd.f32 0.0, %v2894
    %v2896 = vpop.f32.mrb[0].mxu0
    %2897 = vmatprep.mubr.bf16.mxu0 0
    %2898 = vmatmul.mubr.bf16.gmra.mrb[0].mxu0 %v2529
    %v2899 = vpop.f32.mrb[0].mxu0
    %v2900 = vadd.f32 0.0, %v2899
    %v2901 = vpop.f32.mrb[0].mxu0
    %v2902 = vpop.f32.mrb[0].mxu0
    %v2903 = vadd.f32 0.0, %v2902
    %v2904 = vpop.f32.mrb[0].mxu0
    %2905 = vmatprep.mubr.bf16.mxu0 0
    %2906 = vmatmul.mubr.bf16.gmra.mrb[0].mxu0 %v2532
    %v2907 = vpop.f32.mrb[0].mxu0
    %v2908 = vadd.f32 0.0, %v2907
    %v2909 = vpop.f32.mrb[0].mxu0
    %v2910 = vpop.f32.mrb[0].mxu0
    %v2911 = vadd.f32 0.0, %v2910
    %v2912 = vpop.f32.mrb[0].mxu0
    %2913 = vmatprep.mubr.bf16.mxu0 0
    %2914 = vmatmul.mubr.bf16.gmra.mrb[0].mxu0 %v2535
    %v2915 = vpop.f32.mrb[0].mxu0
    %v2916 = vadd.f32 0.0, %v2915
    %v2917 = vpop.f32.mrb[0].mxu0
    %v2918 = vpop.f32.mrb[0].mxu0
    %v2919 = vadd.f32 0.0, %v2918
    %v2920 = vpop.f32.mrb[0].mxu0
    %2921 = vmatprep.mubr.bf16.mxu0 0
    %2922 = vmatmul.mubr.bf16.gmra.mrb[0].mxu0 %v2538
    %v2923 = vpop.f32.mrb[0].mxu0
    %v2924 = vadd.f32 0.0, %v2923
    %v2925 = vpop.f32.mrb[0].mxu0
    %v2926 = vpop.f32.mrb[0].mxu0
    %v2927 = vadd.f32 0.0, %v2926
    %v2928 = vpop.f32.mrb[0].mxu0
    %2929 = vmatprep.mubr.bf16.mxu0 0
    %2930 = vmatmul.mubr.bf16.gmra.mrb[0].mxu0 %v2541
    %v2931 = vpop.f32.mrb[0].mxu0
    %v2932 = vadd.f32 0.0, %v2931
    %v2933 = vpop.f32.mrb[0].mxu0
    %v2934 = vpop.f32.mrb[0].mxu0
    %v2935 = vadd.f32 0.0, %v2934
    %v2936 = vpop.f32.mrb[0].mxu0
    %2937 = vmatprep.mubr.bf16.mxu0 0
    %2938 = vmatmul.mubr.bf16.gmra.mrb[0].mxu0 %v2544
    %v2939 = vpop.f32.mrb[0].mxu0
    %v2940 = vadd.f32 0.0, %v2939
    %v2941 = vpop.f32.mrb[0].mxu0
    %v2942 = vpop.f32.mrb[0].mxu0
    %v2943 = vadd.f32 0.0, %v2942
    %v2944 = vpop.f32.mrb[0].mxu0
    %2945 = vmatprep.mubr.bf16.mxu0 0
    %2946 = vmatmul.mubr.bf16.gmra.mrb[0].mxu0 %v2547
    %v2947 = vpop.f32.mrb[0].mxu0
    %v2948 = vadd.f32 0.0, %v2947
    %v2949 = vpop.f32.mrb[0].mxu0
    %v2950 = vpop.f32.mrb[0].mxu0
    %v2951 = vadd.f32 0.0, %v2950
    %v2952 = vpop.f32.mrb[0].mxu0
    %2953 = vmatprep.mubr.bf16.mxu0 0
    %2954 = vmatmul.mubr.bf16.gmra.mrb[0].mxu0 %v2550
    %v2955 = vpop.f32.mrb[0].mxu0
    %v2956 = vadd.f32 0.0, %v2955
    %v2957 = vpop.f32.mrb[0].mxu0
    %v2958 = vpop.f32.mrb[0].mxu0
    %v2959 = vadd.f32 0.0, %v2958
    %v2960 = vpop.f32.mrb[0].mxu0
    %2961 = vmatprep.mubr.bf16.mxu0 0
    %2962 = vmatmul.mubr.bf16.gmra.mrb[0].mxu0 %v2553
    %v2963 = vpop.f32.mrb[0].mxu0
    %v2964 = vadd.f32 0.0, %v2963
    %v2965 = vpop.f32.mrb[0].mxu0
    %v2966 = vpop.f32.mrb[0].mxu0
    %v2967 = vadd.f32 0.0, %v2966
    %v2968 = vpop.f32.mrb[0].mxu0
    %2969 = vmatprep.mubr.bf16.mxu0 0
    %2970 = vmatmul.mubr.bf16.gmra.mrb[0].mxu0 %v2556
    %v2971 = vpop.f32.mrb[0].mxu0
    %v2972 = vadd.f32 0.0, %v2971
    %v2973 = vpop.f32.mrb[0].mxu0
    %v2974 = vpop.f32.mrb[0].mxu0
    %v2975 = vadd.f32 0.0, %v2974
    %v2976 = vpop.f32.mrb[0].mxu0
    %2977 = vmatprep.mubr.bf16.mxu0 0
    %2978 = vmatmul.mubr.bf16.gmra.mrb[0].mxu0 %v2559
    %v2979 = vpop.f32.mrb[0].mxu0
    %v2980 = vadd.f32 0.0, %v2979
    %v2981 = vpop.f32.mrb[0].mxu0
    %v2982 = vpop.f32.mrb[0].mxu0
    %v2983 = vadd.f32 0.0, %v2982
    %v2984 = vpop.f32.mrb[0].mxu0
    %2985 = vmatprep.mubr.bf16.mxu0 0
    %2986 = vmatmul.mubr.bf16.gmra.mrb[0].mxu0 %v2562
    %v2987 = vpop.f32.mrb[0].mxu0
    %v2988 = vadd.f32 0.0, %v2987
    %v2989 = vpop.f32.mrb[0].mxu0
    %v2990 = vpop.f32.mrb[0].mxu0
    %v2991 = vadd.f32 0.0, %v2990
    %v2992 = vpop.f32.mrb[0].mxu0
    %2993 = vmatprep.mubr.bf16.mxu0 0
    %2994 = vmatmul.mubr.bf16.gmra.mrb[0].mxu0 %v2565
    %v2995 = vpop.f32.mrb[0].mxu0
    %v2996 = vadd.f32 0.0, %v2995
    %v2997 = vpop.f32.mrb[0].mxu0
    %v2998 = vpop.f32.mrb[0].mxu0
    %v2999 = vadd.f32 0.0, %v2998
    %v3000 = vpop.f32.mrb[0].mxu0
    %3001 = vmatprep.mubr.bf16.mxu0 0
    %3002 = vmatmul.mubr.bf16.gmra.mrb[0].mxu0 %v2568
    %v3003 = vpop.f32.mrb[0].mxu0
    %v3004 = vadd.f32 0.0, %v3003
    %v3005 = vpop.f32.mrb[0].mxu0
    %v3006 = vpop.f32.mrb[0].mxu0
    %v3007 = vadd.f32 0.0, %v3006
    %v3008 = vpop.f32.mrb[0].mxu0
    %3009 = vmatprep.mubr.bf16.mxu0 0
    %3010 = vmatmul.mubr.bf16.gmra.mrb[0].mxu0 %v2571
    %v3011 = vpop.f32.mrb[0].mxu0
    %v3012 = vadd.f32 0.0, %v3011
    %v3013 = vpop.f32.mrb[0].mxu0
    %v3014 = vpop.f32.mrb[0].mxu0
    %v3015 = vadd.f32 0.0, %v3014
    %v3016 = vpop.f32.mrb[0].mxu0
    %3017 = vmatprep.mubr.bf16.mxu0 0
    %3018 = vmatmul.mubr.bf16.gmra.mrb[0].mxu0 %v2574
    %v3019 = vpop.f32.mrb[0].mxu0
    %v3020 = vadd.f32 0.0, %v3019
    %v3021 = vpop.f32.mrb[0].mxu0
    %v3022 = vpop.f32.mrb[0].mxu0
    %v3023 = vadd.f32 0.0, %v3022
    %v3024 = vpop.f32.mrb[0].mxu0
    %3025 = vmatprep.mubr.bf16.mxu0 0
    %3026 = vmatmul.mubr.bf16.gmra.mrb[0].mxu0 %v2577
    %v3027 = vpop.f32.mrb[0].mxu0
    %v3028 = vadd.f32 0.0, %v3027
    %v3029 = vpop.f32.mrb[0].mxu0
    %v3030 = vpop.f32.mrb[0].mxu0
    %v3031 = vadd.f32 0.0, %v3030
    %v3032 = vpop.f32.mrb[0].mxu0
    %3033 = vmatprep.mubr.bf16.mxu0 0
    %3034 = vmatmul.mubr.bf16.gmra.mrb[0].mxu0 %v2580
    %v3035 = vpop.f32.mrb[0].mxu0
    %v3036 = vadd.f32 0.0, %v3035
    %v3037 = vpop.f32.mrb[0].mxu0
    %v3038 = vpop.f32.mrb[0].mxu0
    %v3039 = vadd.f32 0.0, %v3038
    %v3040 = vpop.f32.mrb[0].mxu0
    %3041 = vmatprep.mubr.bf16.mxu0 0
    %3042 = vmatmul.mubr.bf16.gmra.mrb[0].mxu0 %v2583
    %v3043 = vpop.f32.mrb[0].mxu0
    %v3044 = vadd.f32 0.0, %v3043
    %v3045 = vpop.f32.mrb[0].mxu0
    %v3046 = vpop.f32.mrb[0].mxu0
    %v3047 = vadd.f32 0.0, %v3046
    %v3048 = vpop.f32.mrb[0].mxu0
    %3049 = vmatprep.mubr.bf16.mxu0 0
    %3050 = vmatmul.mubr.bf16.gmra.mrb[0].mxu0 %v2586
    %v3051 = vpop.f32.mrb[0].mxu0
    %v3052 = vadd.f32 0.0, %v3051
    %v3053 = vpop.f32.mrb[0].mxu0
    %v3054 = vpop.f32.mrb[0].mxu0
    %v3055 = vadd.f32 0.0, %v3054
    %v3056 = vpop.f32.mrb[0].mxu0
    %3057 = vmatprep.mubr.bf16.mxu0 0
    %3058 = vmatmul.mubr.bf16.gmra.mrb[0].mxu0 %v2589
    %v3059 = vpop.f32.mrb[0].mxu0
    %v3060 = vadd.f32 0.0, %v3059
    %v3061 = vpop.f32.mrb[0].mxu0
    %v3062 = vpop.f32.mrb[0].mxu0
    %v3063 = vadd.f32 0.0, %v3062
    %v3064 = vpop.f32.mrb[0].mxu0
    %3065 = vmatprep.mubr.bf16.mxu0 0
    %3066 = vmatmul.mubr.bf16.gmra.mrb[0].mxu0 %v2592
    %v3067 = vpop.f32.mrb[0].mxu0
    %v3068 = vadd.f32 0.0, %v3067
    %v3069 = vpop.f32.mrb[0].mxu0
    %v3070 = vpop.f32.mrb[0].mxu0
    %v3071 = vadd.f32 0.0, %v3070
    %v3072 = vpop.f32.mrb[0].mxu0
    %3073 = vmatprep.mubr.bf16.mxu0 0
    %3074 = vmatmul.mubr.bf16.gmra.mrb[0].mxu0 %v2595
    %v3075 = vpop.f32.mrb[0].mxu0
    %v3076 = vadd.f32 0.0, %v3075
    %v3077 = vpop.f32.mrb[0].mxu0
    %v3078 = vpop.f32.mrb[0].mxu0
    %v3079 = vadd.f32 0.0, %v3078
    %v3080 = vpop.f32.mrb[0].mxu0
    %3081 = vmatprep.mubr.bf16.mxu0 0
    %3082 = vmatmul.mubr.bf16.gmra.mrb[0].mxu0 %v2598
    %v3083 = vpop.f32.mrb[0].mxu0
    %v3084 = vadd.f32 0.0, %v3083
    %v3085 = vpop.f32.mrb[0].mxu0
    %v3086 = vpop.f32.mrb[0].mxu0
    %v3087 = vadd.f32 0.0, %v3086
    %v3088 = vpop.f32.mrb[0].mxu0
    %3089 = vmatprep.mubr.bf16.mxu0 0
    %3090 = vmatmul.mubr.bf16.gmra.mrb[0].mxu0 %v2601
    %v3091 = vpop.f32.mrb[0].mxu0
    %v3092 = vadd.f32 0.0, %v3091
    %v3093 = vpop.f32.mrb[0].mxu0
    %v3094 = vpop.f32.mrb[0].mxu0
    %v3095 = vadd.f32 0.0, %v3094
    %v3096 = vpop.f32.mrb[0].mxu0
    %3097 = vmatprep.mubr.bf16.mxu0 0
    %3098 = vmatmul.mubr.bf16.gmra.mrb[0].mxu0 %v2604
    %v3099 = vpop.f32.mrb[0].mxu0
    %v3100 = vadd.f32 0.0, %v3099
    %v3101 = vpop.f32.mrb[0].mxu0
    %v3102 = vpop.f32.mrb[0].mxu0
    %v3103 = vadd.f32 0.0, %v3102
    %v3104 = vpop.f32.mrb[0].mxu0
    %3105 = vmatprep.mubr.bf16.mxu0 0
    %3106 = vmatmul.mubr.bf16.gmra.mrb[0].mxu0 %v2607
    %v3107 = vpop.f32.mrb[0].mxu0
    %v3108 = vadd.f32 0.0, %v3107
    %v3109 = vpop.f32.mrb[0].mxu0
    %v3110 = vpop.f32.mrb[0].mxu0
    %v3111 = vadd.f32 0.0, %v3110
    %v3112 = vpop.f32.mrb[0].mxu0
    %3113 = vmatprep.mubr.bf16.mxu0 0
    %3114 = vmatmul.mubr.bf16.gmra.mrb[0].mxu0 %v2610
    %v3115 = vpop.f32.mrb[0].mxu0
    %v3116 = vadd.f32 0.0, %v3115
    %v3117 = vpop.f32.mrb[0].mxu0
    %v3118 = vpop.f32.mrb[0].mxu0
    %v3119 = vadd.f32 0.0, %v3118
    %v3120 = vpop.f32.mrb[0].mxu0
    %3121 = vmatprep.mubr.bf16.mxu0 0
    %3122 = vmatmul.mubr.bf16.gmra.mrb[0].mxu0 %v2613
    %v3123 = vpop.f32.mrb[0].mxu0
    %v3124 = vadd.f32 0.0, %v3123
    %v3125 = vpop.f32.mrb[0].mxu0
    %v3126 = vpop.f32.mrb[0].mxu0
    %v3127 = vadd.f32 0.0, %v3126
    %v3128 = vpop.f32.mrb[0].mxu0
    %3129 = vmatprep.mubr.bf16.mxu0 0
    %3130 = vmatmul.mubr.bf16.gmra.mrb[0].mxu0 %v2616
    %v3131 = vpop.f32.mrb[0].mxu0
    %v3132 = vadd.f32 0.0, %v3131
    %v3133 = vpop.f32.mrb[0].mxu0
    %v3134 = vpop.f32.mrb[0].mxu0
    %v3135 = vadd.f32 0.0, %v3134
    %v3136 = vpop.f32.mrb[0].mxu0
    %3137 = vmatprep.mubr.bf16.mxu0 0
    %3138 = vmatmul.mubr.bf16.gmra.mrb[0].mxu0 %v2619
    %v3139 = vpop.f32.mrb[0].mxu0
    %v3140 = vadd.f32 0.0, %v3139
    %v3141 = vpop.f32.mrb[0].mxu0
    %v3142 = vpop.f32.mrb[0].mxu0
    %v3143 = vadd.f32 0.0, %v3142
    %v3144 = vpop.f32.mrb[0].mxu0
    %3145 = vmatprep.mubr.bf16.mxu0 0
    %3146 = vmatmul.mubr.bf16.gmra.mrb[0].mxu0 %v2622
    %v3147 = vpop.f32.mrb[0].mxu0
    %v3148 = vadd.f32 0.0, %v3147
    %v3149 = vpop.f32.mrb[0].mxu0
    %v3150 = vpop.f32.mrb[0].mxu0
    %v3151 = vadd.f32 0.0, %v3150
    %v3152 = vpop.f32.mrb[0].mxu0
    %3153 = vmatprep.mubr.bf16.mxu0 0
    %3154 = vmatmul.mubr.bf16.gmra.mrb[0].mxu0 %v2625
    %v3155 = vpop.f32.mrb[0].mxu0
    %v3156 = vadd.f32 0.0, %v3155
    %v3157 = vpop.f32.mrb[0].mxu0
    %v3158 = vpop.f32.mrb[0].mxu0
    %v3159 = vadd.f32 0.0, %v3158
    %v3160 = vpop.f32.mrb[0].mxu0
    %3161 = vmatprep.mubr.bf16.mxu0 0
    %3162 = vmatmul.mubr.bf16.gmra.mrb[0].mxu0 %v2628
    %v3163 = vpop.f32.mrb[0].mxu0
    %v3164 = vadd.f32 0.0, %v3163
    %v3165 = vpop.f32.mrb[0].mxu0
    %v3166 = vpop.f32.mrb[0].mxu0
    %v3167 = vadd.f32 0.0, %v3166
    %v3168 = vpop.f32.mrb[0].mxu0
    %3169 = vmatprep.mubr.bf16.mxu0 0
    %3170 = vmatmul.mubr.bf16.gmra.mrb[0].mxu0 %v2631
    %v3171 = vpop.f32.mrb[0].mxu0
    %v3172 = vadd.f32 0.0, %v3171
    %v3173 = vpop.f32.mrb[0].mxu0
    %v3174 = vpop.f32.mrb[0].mxu0
    %v3175 = vadd.f32 0.0, %v3174
    %v3176 = vpop.f32.mrb[0].mxu0
    %3177 = vdwg.mxu0
    %v3178 = vld [vmem:[#allocation3] sm:$0x1]
    %v3180 = vlaneseq
    %v3181 = vshrl.u32 %v3180, 7
    %v3182 = vsub.s32 0, %v3181
    %v3183 = vrot.slane %v3178, %v3182
    %v3185 = vmul.f32 %v2668, %v3183
    %v3186 = vmul.f32 %v2671, %v3183
    %v3187 = vmul.f32 %v2676, %v3183
    %v3188 = vmul.f32 %v2679, %v3183
    %v3189 = vmul.f32 %v2684, %v3183
    %v3190 = vmul.f32 %v2687, %v3183
    %v3191 = vmul.f32 %v2692, %v3183
    %v3192 = vmul.f32 %v2695, %v3183
    %v3193 = vmul.f32 %v2700, %v3183
    %v3194 = vmul.f32 %v2703, %v3183
    %v3195 = vmul.f32 %v2708, %v3183
    %v3196 = vmul.f32 %v2711, %v3183
    %v3197 = vmul.f32 %v2716, %v3183
    %v3198 = vmul.f32 %v2719, %v3183
    %v3199 = vmul.f32 %v2724, %v3183
    %v3200 = vmul.f32 %v2727, %v3183
    %v3201 = vmul.f32 %v2732, %v3183
    %v3202 = vmul.f32 %v2735, %v3183
    %v3203 = vmul.f32 %v2740, %v3183
    %v3204 = vmul.f32 %v2743, %v3183
    %v3205 = vmul.f32 %v2748, %v3183
    %v3206 = vmul.f32 %v2751, %v3183
    %v3207 = vmul.f32 %v2756, %v3183
    %v3208 = vmul.f32 %v2759, %v3183
    %v3209 = vmul.f32 %v2764, %v3183
    %v3210 = vmul.f32 %v2767, %v3183
    %v3211 = vmul.f32 %v2772, %v3183
    %v3212 = vmul.f32 %v2775, %v3183
    %v3213 = vmul.f32 %v2780, %v3183
    %v3214 = vmul.f32 %v2783, %v3183
    %v3215 = vmul.f32 %v2788, %v3183
    %v3216 = vmul.f32 %v2791, %v3183
    %v3217 = vmul.f32 %v2796, %v3183
    %v3218 = vmul.f32 %v2799, %v3183
    %v3219 = vmul.f32 %v2804, %v3183
    %v3220 = vmul.f32 %v2807, %v3183
    %v3221 = vmul.f32 %v2812, %v3183
    %v3222 = vmul.f32 %v2815, %v3183
    %v3223 = vmul.f32 %v2820, %v3183
    %v3224 = vmul.f32 %v2823, %v3183
    %v3225 = vmul.f32 %v2828, %v3183
    %v3226 = vmul.f32 %v2831, %v3183
    %v3227 = vmul.f32 %v2836, %v3183
    %v3228 = vmul.f32 %v2839, %v3183
    %v3229 = vmul.f32 %v2844, %v3183
    %v3230 = vmul.f32 %v2847, %v3183
    %v3231 = vmul.f32 %v2852, %v3183
    %v3232 = vmul.f32 %v2855, %v3183
    %v3233 = vmul.f32 %v2860, %v3183
    %v3234 = vmul.f32 %v2863, %v3183
    %v3235 = vmul.f32 %v2868, %v3183
    %v3236 = vmul.f32 %v2871, %v3183
    %v3237 = vmul.f32 %v2876, %v3183
    %v3238 = vmul.f32 %v2879, %v3183
    %v3239 = vmul.f32 %v2884, %v3183
    %v3240 = vmul.f32 %v2887, %v3183
    %v3241 = vmul.f32 %v2892, %v3183
    %v3242 = vmul.f32 %v2895, %v3183
    %v3243 = vmul.f32 %v2900, %v3183
    %v3244 = vmul.f32 %v2903, %v3183
    %v3245 = vmul.f32 %v2908, %v3183
    %v3246 = vmul.f32 %v2911, %v3183
    %v3247 = vmul.f32 %v2916, %v3183
    %v3248 = vmul.f32 %v2919, %v3183
    %v3249 = vmul.f32 %v2924, %v3183
    %v3250 = vmul.f32 %v2927, %v3183
    %v3251 = vmul.f32 %v2932, %v3183
    %v3252 = vmul.f32 %v2935, %v3183
    %v3253 = vmul.f32 %v2940, %v3183
    %v3254 = vmul.f32 %v2943, %v3183
    %v3255 = vmul.f32 %v2948, %v3183
    %v3256 = vmul.f32 %v2951, %v3183
    %v3257 = vmul.f32 %v2956, %v3183
    %v3258 = vmul.f32 %v2959, %v3183
    %v3259 = vmul.f32 %v2964, %v3183
    %v3260 = vmul.f32 %v2967, %v3183
    %v3261 = vmul.f32 %v2972, %v3183
    %v3262 = vmul.f32 %v2975, %v3183
    %v3263 = vmul.f32 %v2980, %v3183
    %v3264 = vmul.f32 %v2983, %v3183
    %v3265 = vmul.f32 %v2988, %v3183
    %v3266 = vmul.f32 %v2991, %v3183
    %v3267 = vmul.f32 %v2996, %v3183
    %v3268 = vmul.f32 %v2999, %v3183
    %v3269 = vmul.f32 %v3004, %v3183
    %v3270 = vmul.f32 %v3007, %v3183
    %v3271 = vmul.f32 %v3012, %v3183
    %v3272 = vmul.f32 %v3015, %v3183
    %v3273 = vmul.f32 %v3020, %v3183
    %v3274 = vmul.f32 %v3023, %v3183
    %v3275 = vmul.f32 %v3028, %v3183
    %v3276 = vmul.f32 %v3031, %v3183
    %v3277 = vmul.f32 %v3036, %v3183
    %v3278 = vmul.f32 %v3039, %v3183
    %v3279 = vmul.f32 %v3044, %v3183
    %v3280 = vmul.f32 %v3047, %v3183
    %v3281 = vmul.f32 %v3052, %v3183
    %v3282 = vmul.f32 %v3055, %v3183
    %v3283 = vmul.f32 %v3060, %v3183
    %v3284 = vmul.f32 %v3063, %v3183
    %v3285 = vmul.f32 %v3068, %v3183
    %v3286 = vmul.f32 %v3071, %v3183
    %v3287 = vmul.f32 %v3076, %v3183
    %v3288 = vmul.f32 %v3079, %v3183
    %v3289 = vmul.f32 %v3084, %v3183
    %v3290 = vmul.f32 %v3087, %v3183
    %v3291 = vmul.f32 %v3092, %v3183
    %v3292 = vmul.f32 %v3095, %v3183
    %v3293 = vmul.f32 %v3100, %v3183
    %v3294 = vmul.f32 %v3103, %v3183
    %v3295 = vmul.f32 %v3108, %v3183
    %v3296 = vmul.f32 %v3111, %v3183
    %v3297 = vmul.f32 %v3116, %v3183
    %v3298 = vmul.f32 %v3119, %v3183
    %v3299 = vmul.f32 %v3124, %v3183
    %v3300 = vmul.f32 %v3127, %v3183
    %v3301 = vmul.f32 %v3132, %v3183
    %v3302 = vmul.f32 %v3135, %v3183
    %v3303 = vmul.f32 %v3140, %v3183
    %v3304 = vmul.f32 %v3143, %v3183
    %v3305 = vmul.f32 %v3148, %v3183
    %v3306 = vmul.f32 %v3151, %v3183
    %v3307 = vmul.f32 %v3156, %v3183
    %v3308 = vmul.f32 %v3159, %v3183
    %v3309 = vmul.f32 %v3164, %v3183
    %v3310 = vmul.f32 %v3167, %v3183
    %v3311 = vmul.f32 %v3172, %v3183
    %v3312 = vmul.f32 %v3175, %v3183
    %3313 = vst [vmem:[#allocation4] sm:$0xff] %v3185
    %3314 = vst [vmem:[#allocation4 + $0x8] sm:$0xff] %v3186
    %3315 = vst [vmem:[#allocation4 + $0x10] sm:$0xff] %v3187
    %3316 = vst [vmem:[#allocation4 + $0x18] sm:$0xff] %v3188
    %3317 = vst [vmem:[#allocation4 + $0x20] sm:$0xff] %v3189
    %3318 = vst [vmem:[#allocation4 + $0x28] sm:$0xff] %v3190
    %3319 = vst [vmem:[#allocation4 + $0x30] sm:$0xff] %v3191
    %3320 = vst [vmem:[#allocation4 + $0x38] sm:$0xff] %v3192
    %3321 = vst [vmem:[#allocation4 + $0x40] sm:$0xff] %v3193
    %3322 = vst [vmem:[#allocation4 + $0x48] sm:$0xff] %v3194
    %3323 = vst [vmem:[#allocation4 + $0x50] sm:$0xff] %v3195
    %3324 = vst [vmem:[#allocation4 + $0x58] sm:$0xff] %v3196
    %3325 = vst [vmem:[#allocation4 + $0x60] sm:$0xff] %v3197
    %3326 = vst [vmem:[#allocation4 + $0x68] sm:$0xff] %v3198
    %3327 = vst [vmem:[#allocation4 + $0x70] sm:$0xff] %v3199
    %3328 = vst [vmem:[#allocation4 + $0x78] sm:$0xff] %v3200
    %3329 = vst [vmem:[#allocation4 + $0x80] sm:$0xff] %v3201
    %3330 = vst [vmem:[#allocation4 + $0x88] sm:$0xff] %v3202
    %3331 = vst [vmem:[#allocation4 + $0x90] sm:$0xff] %v3203
    %3332 = vst [vmem:[#allocation4 + $0x98] sm:$0xff] %v3204
    %3333 = vst [vmem:[#allocation4 + $0xa0] sm:$0xff] %v3205
    %3334 = vst [vmem:[#allocation4 + $0xa8] sm:$0xff] %v3206
    %3335 = vst [vmem:[#allocation4 + $0xb0] sm:$0xff] %v3207
    %3336 = vst [vmem:[#allocation4 + $0xb8] sm:$0xff] %v3208
    %3337 = vst [vmem:[#allocation4 + $0xc0] sm:$0xff] %v3209
    %3338 = vst [vmem:[#allocation4 + $0xc8] sm:$0xff] %v3210
    %3339 = vst [vmem:[#allocation4 + $0xd0] sm:$0xff] %v3211
    %3340 = vst [vmem:[#allocation4 + $0xd8] sm:$0xff] %v3212
    %3341 = vst [vmem:[#allocation4 + $0xe0] sm:$0xff] %v3213
    %3342 = vst [vmem:[#allocation4 + $0xe8] sm:$0xff] %v3214
    %3343 = vst [vmem:[#allocation4 + $0xf0] sm:$0xff] %v3215
    %3344 = vst [vmem:[#allocation4 + $0xf8] sm:$0xff] %v3216
    %3345 = vst [vmem:[#allocation4 + $0x100] sm:$0xff] %v3217
    %3346 = vst [vmem:[#allocation4 + $0x108] sm:$0xff] %v3218
    %3347 = vst [vmem:[#allocation4 + $0x110] sm:$0xff] %v3219
    %3348 = vst [vmem:[#allocation4 + $0x118] sm:$0xff] %v3220
    %3349 = vst [vmem:[#allocation4 + $0x120] sm:$0xff] %v3221
    %3350 = vst [vmem:[#allocation4 + $0x128] sm:$0xff] %v3222
    %3351 = vst [vmem:[#allocation4 + $0x130] sm:$0xff] %v3223
    %3352 = vst [vmem:[#allocation4 + $0x138] sm:$0xff] %v3224
    %3353 = vst [vmem:[#allocation4 + $0x140] sm:$0xff] %v3225
    %3354 = vst [vmem:[#allocation4 + $0x148] sm:$0xff] %v3226
    %3355 = vst [vmem:[#allocation4 + $0x150] sm:$0xff] %v3227
    %3356 = vst [vmem:[#allocation4 + $0x158] sm:$0xff] %v3228
    %3357 = vst [vmem:[#allocation4 + $0x160] sm:$0xff] %v3229
    %3358 = vst [vmem:[#allocation4 + $0x168] sm:$0xff] %v3230
    %3359 = vst [vmem:[#allocation4 + $0x170] sm:$0xff] %v3231
    %3360 = vst [vmem:[#allocation4 + $0x178] sm:$0xff] %v3232
    %3361 = vst [vmem:[#allocation4 + $0x180] sm:$0xff] %v3233
    %3362 = vst [vmem:[#allocation4 + $0x188] sm:$0xff] %v3234
    %3363 = vst [vmem:[#allocation4 + $0x190] sm:$0xff] %v3235
    %3364 = vst [vmem:[#allocation4 + $0x198] sm:$0xff] %v3236
    %3365 = vst [vmem:[#allocation4 + $0x1a0] sm:$0xff] %v3237
    %3366 = vst [vmem:[#allocation4 + $0x1a8] sm:$0xff] %v3238
    %3367 = vst [vmem:[#allocation4 + $0x1b0] sm:$0xff] %v3239
    %3368 = vst [vmem:[#allocation4 + $0x1b8] sm:$0xff] %v3240
    %3369 = vst [vmem:[#allocation4 + $0x1c0] sm:$0xff] %v3241
    %3370 = vst [vmem:[#allocation4 + $0x1c8] sm:$0xff] %v3242
    %3371 = vst [vmem:[#allocation4 + $0x1d0] sm:$0xff] %v3243
    %3372 = vst [vmem:[#allocation4 + $0x1d8] sm:$0xff] %v3244
    %3373 = vst [vmem:[#allocation4 + $0x1e0] sm:$0xff] %v3245
    %3374 = vst [vmem:[#allocation4 + $0x1e8] sm:$0xff] %v3246
    %3375 = vst [vmem:[#allocation4 + $0x1f0] sm:$0xff] %v3247
    %3376 = vst [vmem:[#allocation4 + $0x1f8] sm:$0xff] %v3248
    %3377 = vst [vmem:[#allocation4 + $0x200] sm:$0xff] %v3249
    %3378 = vst [vmem:[#allocation4 + $0x208] sm:$0xff] %v3250
    %3379 = vst [vmem:[#allocation4 + $0x210] sm:$0xff] %v3251
    %3380 = vst [vmem:[#allocation4 + $0x218] sm:$0xff] %v3252
    %3381 = vst [vmem:[#allocation4 + $0x220] sm:$0xff] %v3253
    %3382 = vst [vmem:[#allocation4 + $0x228] sm:$0xff] %v3254
    %3383 = vst [vmem:[#allocation4 + $0x230] sm:$0xff] %v3255
    %3384 = vst [vmem:[#allocation4 + $0x238] sm:$0xff] %v3256
    %3385 = vst [vmem:[#allocation4 + $0x240] sm:$0xff] %v3257
    %3386 = vst [vmem:[#allocation4 + $0x248] sm:$0xff] %v3258
    %3387 = vst [vmem:[#allocation4 + $0x250] sm:$0xff] %v3259
    %3388 = vst [vmem:[#allocation4 + $0x258] sm:$0xff] %v3260
    %3389 = vst [vmem:[#allocation4 + $0x260] sm:$0xff] %v3261
    %3390 = vst [vmem:[#allocation4 + $0x268] sm:$0xff] %v3262
    %3391 = vst [vmem:[#allocation4 + $0x270] sm:$0xff] %v3263
    %3392 = vst [vmem:[#allocation4 + $0x278] sm:$0xff] %v3264
    %3393 = vst [vmem:[#allocation4 + $0x280] sm:$0xff] %v3265
    %3394 = vst [vmem:[#allocation4 + $0x288] sm:$0xff] %v3266
    %3395 = vst [vmem:[#allocation4 + $0x290] sm:$0xff] %v3267
    %3396 = vst [vmem:[#allocation4 + $0x298] sm:$0xff] %v3268
    %3397 = vst [vmem:[#allocation4 + $0x2a0] sm:$0xff] %v3269
    %3398 = vst [vmem:[#allocation4 + $0x2a8] sm:$0xff] %v3270
    %3399 = vst [vmem:[#allocation4 + $0x2b0] sm:$0xff] %v3271
    %3400 = vst [vmem:[#allocation4 + $0x2b8] sm:$0xff] %v3272
    %3401 = vst [vmem:[#allocation4 + $0x2c0] sm:$0xff] %v3273
    %3402 = vst [vmem:[#allocation4 + $0x2c8] sm:$0xff] %v3274
    %3403 = vst [vmem:[#allocation4 + $0x2d0] sm:$0xff] %v3275
    %3404 = vst [vmem:[#allocation4 + $0x2d8] sm:$0xff] %v3276
    %3405 = vst [vmem:[#allocation4 + $0x2e0] sm:$0xff] %v3277
    %3406 = vst [vmem:[#allocation4 + $0x2e8] sm:$0xff] %v3278
    %3407 = vst [vmem:[#allocation4 + $0x2f0] sm:$0xff] %v3279
    %3408 = vst [vmem:[#allocation4 + $0x2f8] sm:$0xff] %v3280
    %3409 = vst [vmem:[#allocation4 + $0x300] sm:$0xff] %v3281
    %3410 = vst [vmem:[#allocation4 + $0x308] sm:$0xff] %v3282
    %3411 = vst [vmem:[#allocation4 + $0x310] sm:$0xff] %v3283
    %3412 = vst [vmem:[#allocation4 + $0x318] sm:$0xff] %v3284
    %3413 = vst [vmem:[#allocation4 + $0x320] sm:$0xff] %v3285
    %3414 = vst [vmem:[#allocation4 + $0x328] sm:$0xff] %v3286
    %3415 = vst [vmem:[#allocation4 + $0x330] sm:$0xff] %v3287
    %3416 = vst [vmem:[#allocation4 + $0x338] sm:$0xff] %v3288
    %3417 = vst [vmem:[#allocation4 + $0x340] sm:$0xff] %v3289
    %3418 = vst [vmem:[#allocation4 + $0x348] sm:$0xff] %v3290
    %3419 = vst [vmem:[#allocation4 + $0x350] sm:$0xff] %v3291
    %3420 = vst [vmem:[#allocation4 + $0x358] sm:$0xff] %v3292
    %3421 = vst [vmem:[#allocation4 + $0x360] sm:$0xff] %v3293
    %3422 = vst [vmem:[#allocation4 + $0x368] sm:$0xff] %v3294
    %3423 = vst [vmem:[#allocation4 + $0x370] sm:$0xff] %v3295
    %3424 = vst [vmem:[#allocation4 + $0x378] sm:$0xff] %v3296
    %3425 = vst [vmem:[#allocation4 + $0x380] sm:$0xff] %v3297
    %3426 = vst [vmem:[#allocation4 + $0x388] sm:$0xff] %v3298
    %3427 = vst [vmem:[#allocation4 + $0x390] sm:$0xff] %v3299
    %3428 = vst [vmem:[#allocation4 + $0x398] sm:$0xff] %v3300
    %3429 = vst [vmem:[#allocation4 + $0x3a0] sm:$0xff] %v3301
    %3430 = vst [vmem:[#allocation4 + $0x3a8] sm:$0xff] %v3302
    %3431 = vst [vmem:[#allocation4 + $0x3b0] sm:$0xff] %v3303
    %3432 = vst [vmem:[#allocation4 + $0x3b8] sm:$0xff] %v3304
    %3433 = vst [vmem:[#allocation4 + $0x3c0] sm:$0xff] %v3305
    %3434 = vst [vmem:[#allocation4 + $0x3c8] sm:$0xff] %v3306
    %3435 = vst [vmem:[#allocation4 + $0x3d0] sm:$0xff] %v3307
    %3436 = vst [vmem:[#allocation4 + $0x3d8] sm:$0xff] %v3308
    %3437 = vst [vmem:[#allocation4 + $0x3e0] sm:$0xff] %v3309
    %3438 = vst [vmem:[#allocation4 + $0x3e8] sm:$0xff] %v3310
    %3439 = vst [vmem:[#allocation4 + $0x3f0] sm:$0xff] %v3311
    %3440 = vst [vmem:[#allocation4 + $0x3f8] sm:$0xff] %v3312
    // Predicated region
    $region26: #{tpu_custom_call.1} parent=1 // pred_check
      _
    $region27: #{tpu_custom_call.1} parent=1 // pred_check_branch
      %3442 = sbr.rel (0) target = $region29
    $region28: #{tpu_custom_call.1} parent=1 // pred_region
      %s3444 = ssub.s32 16384, 16384
      %3445 = vsyncadd [#allocation5], %s3444
      %s3446 = sshll.u32 [#allocation4], 4
      %s3447 = int_to_ptr.vmem [resolvable:$true] %s3446
      %3452 = dma.vmem_to_hbm [thread:$0]  %s3447, 16384, %s5, [#allocation5], 128, 128, 8
    $region29: #{tpu_custom_call.1} parent=1 // pred_fallthru
      _
    // Predicated region
    $region30: #{tpu_custom_call.1} parent=1 // pred_check
      _
    $region31: #{tpu_custom_call.1} parent=1 // pred_check_branch
      %3454 = sbr.rel (0) target = $region33
    $region32: #{tpu_custom_call.1} parent=1 // pred_region
      %3455 = dma.done [#allocation5], 16384
    $region33: #{tpu_custom_call.1} parent=1 // pred_fallthru
      _
    %3456 = vsyncpa [#allocation5], 1

</llo_original>
